<compile_context>
chip_gen: v5e
topology: v5e:2x2
jax: 0.10.0
libtpu: 0.0.40
codegen_flags: <defaults>
</compile_context>

<pallas_src>
import functools

import jax
import jax.numpy as jnp
from jax.experimental import pallas as pl
from jax.experimental.pallas import tpu as pltpu


_VMEM_LIMIT = 32 * 1024 * 1024     # explicit scoped-VMEM budget (fits v5e/v6e/v7x)
_TILE_BUDGET = 8 * 1024 * 1024     # target double-buffered working set per GEMM step


# ----------------------------------------------------------------------------
# tiling helpers
# ----------------------------------------------------------------------------
def _pick_tile(dim, candidates):
    for c in candidates:
        if c <= dim and dim % c == 0:
            return c
    return dim


def _gemm_tiles(M, K, Ncols, out_bytes):
    """Pick (tm, tk) that divide (M, K), keep lane alignment, fit the VMEM budget."""
    tk = K if K <= 1024 else _pick_tile(K, (1024, 512, 256, 128))
    tm = _pick_tile(M, (512, 256, 128, 64, 32, 16, 8))

    def footprint(tm_):
        # double-buffered bf16 inputs + output block + f32 accumulator scratch
        return (2 * (tm_ * tk * 2 + tk * Ncols * 2 + tm_ * Ncols * out_bytes)
                + tm_ * Ncols * 4)

    while tm > 8 and M % (tm // 2) == 0 and footprint(tm) > _TILE_BUDGET:
        tm //= 2
    return tm, tk


def _pick_rows(M, C):
    tm = _pick_tile(M, (1024, 512, 256, 128, 64, 32, 16, 8))
    while tm > 8 and M % (tm // 2) == 0 and tm * C * 16 > _TILE_BUDGET:
        tm //= 2
    return tm


# ----------------------------------------------------------------------------
# Pallas kernels
# ----------------------------------------------------------------------------
def _make_gemm_kernel(has_bias, with_stats):
    """K-tiled batched GEMM with f32 VMEM accumulator.

    Optional epilogue: bias add, and per-row-tile channel sum / sum-of-squares
    (fused BatchNorm statistics) written as an extra (8, N) output block.
    """
    def kernel(*refs):
        x_ref, w_ref = refs[0], refs[1]
        pos = 2
        b_ref = None
        if has_bias:
            b_ref = refs[pos]
            pos += 1
        y_ref = refs[pos]
        pos += 1
        s_ref = None
        if with_stats:
            s_ref = refs[pos]
            pos += 1
        acc_ref = refs[pos]

        k = pl.program_id(2)

        @pl.when(k == 0)
        def _():
            acc_ref[...] = jnp.zeros_like(acc_ref)

        # bf16 x bf16 -> f32 accumulate on the MXU
        acc_ref[...] += jnp.dot(x_ref[0], w_ref[0],
                                preferred_element_type=jnp.float32)

        @pl.when(k == pl.num_programs(2) - 1)
        def _():
            acc = acc_ref[...]
            if has_bias:
                acc = acc + b_ref[...]
            y_ref[0] = acc.astype(y_ref.dtype)
            if with_stats:
                ssum = jnp.sum(acc, axis=0, keepdims=True)          # (1, N)
                ssq = jnp.sum(acc * acc, axis=0, keepdims=True)     # (1, N)
                pad = jnp.zeros((6, acc.shape[-1]), jnp.float32)
                s_ref[0] = jnp.concatenate([ssum, ssq, pad], axis=0)  # (8, N)

    return kernel


def _bn_stats_kernel(x_ref, s_ref):
    x = x_ref[...].astype(jnp.float32)
    ssum = jnp.sum(x, axis=0, keepdims=True)
    ssq = jnp.sum(x * x, axis=0, keepdims=True)
    pad = jnp.zeros((6, x.shape[-1]), jnp.float32)
    s_ref[...] = jnp.concatenate([ssum, ssq, pad], axis=0)


def _bn_relu_apply_kernel(x_ref, sc_ref, sh_ref, o_ref):
    x = x_ref[...].astype(jnp.float32)
    o_ref[...] = jnp.maximum(x * sc_ref[...] + sh_ref[...], 0.0).astype(o_ref.dtype)


# ----------------------------------------------------------------------------
# Pallas wrappers
# ----------------------------------------------------------------------------
def gemm(x, w, *, bias=None, with_stats=False, out_dtype=jnp.bfloat16):
    """Batched GEMM  (G, M, K) @ (G, K, N)  [+ bias]  on the MXU.

    Returns (y, stats) where stats is (G, m_tiles*8, N) with row 0 = channel
    sum and row 1 = channel sum-of-squares per M tile (None if not requested).
    """
    G, M, K = x.shape
    Ncols = w.shape[-1]
    out_bytes = jax.dtypes.canonicalize_dtype(out_dtype).itemsize
    tm, tk = _gemm_tiles(M, K, Ncols, out_bytes)
    m_tiles, k_tiles = M // tm, K // tk

    in_specs = [
        pl.BlockSpec((1, tm, tk), lambda g, i, k: (g, i, k)),
        pl.BlockSpec((1, tk, Ncols), lambda g, i, k: (g, k, 0)),
    ]
    inputs = [x, w]
    if bias is not None:
        in_specs.append(pl.BlockSpec((1, Ncols), lambda g, i, k: (0, 0)))
        inputs.append(bias.reshape(1, Ncols).astype(jnp.float32))

    out_shapes = [jax.ShapeDtypeStruct((G, M, Ncols), out_dtype)]
    out_specs = [pl.BlockSpec((1, tm, Ncols), lambda g, i, k: (g, i, 0))]
    if with_stats:
        out_shapes.append(jax.ShapeDtypeStruct((G, m_tiles * 8, Ncols), jnp.float32))
        out_specs.append(pl.BlockSpec((1, 8, Ncols), lambda g, i, k: (g, i, 0)))

    res = pl.pallas_call(
        _make_gemm_kernel(bias is not None, with_stats),
        grid=(G, m_tiles, k_tiles),
        in_specs=in_specs,
        out_specs=tuple(out_specs) if with_stats else out_specs[0],
        out_shape=tuple(out_shapes) if with_stats else out_shapes[0],
        scratch_shapes=[pltpu.VMEM((tm, Ncols), jnp.float32)],
        compiler_params=pltpu.CompilerParams(
            dimension_semantics=("parallel", "parallel", "arbitrary"),
            vmem_limit_bytes=_VMEM_LIMIT),
    )(*inputs)

    if with_stats:
        y, stats = res
        return y, stats
    return res, None


def bn_batch_stats(x2):
    """Per-channel sum / sum-of-squares of an (M, C) activation, tiled over rows."""
    M, C = x2.shape
    tm = _pick_rows(M, C)
    m_tiles = M // tm
    stats = pl.pallas_call(
        _bn_stats_kernel,
        grid=(m_tiles,),
        in_specs=[pl.BlockSpec((tm, C), lambda i: (i, 0))],
        out_specs=pl.BlockSpec((8, C), lambda i: (i, 0)),
        out_shape=jax.ShapeDtypeStruct((m_tiles * 8, C), jnp.float32),
        compiler_params=pltpu.CompilerParams(
            dimension_semantics=("parallel",), vmem_limit_bytes=_VMEM_LIMIT),
    )(x2)
    stats = stats.reshape(m_tiles, 8, C)
    return stats[:, 0, :].sum(axis=0), stats[:, 1, :].sum(axis=0)


def bn_relu_apply(x2, scale, shift, out_dtype=jnp.bfloat16):
    """y = max(x * scale + shift, 0) on an (M, C) matrix, tiled + parallel grid."""
    M, C = x2.shape
    tm = _pick_rows(M, C)
    return pl.pallas_call(
        _bn_relu_apply_kernel,
        grid=(M // tm,),
        in_specs=[pl.BlockSpec((tm, C), lambda i: (i, 0)),
                  pl.BlockSpec((1, C), lambda i: (0, 0)),
                  pl.BlockSpec((1, C), lambda i: (0, 0))],
        out_specs=pl.BlockSpec((tm, C), lambda i: (i, 0)),
        out_shape=jax.ShapeDtypeStruct((M, C), out_dtype),
        compiler_params=pltpu.CompilerParams(
            dimension_semantics=("parallel",), vmem_limit_bytes=_VMEM_LIMIT),
    )(x2,
      scale.reshape(1, C).astype(jnp.float32),
      shift.reshape(1, C).astype(jnp.float32))


def _bn_scale_shift(total, total_sq, count, gamma, beta, eps=1e-5):
    mean = total / count
    var = jnp.maximum(total_sq / count - mean * mean, 0.0)     # biased var (BN train)
    scale = gamma * jax.lax.rsqrt(var + eps)
    shift = beta - mean * scale
    return scale, shift


# ----------------------------------------------------------------------------
# ConvTranspose2d(k=4, s=2, p=1) via 4 output-parity sub-GEMMs (no zero taps)
# ----------------------------------------------------------------------------
def _parity_weights(wt):
    """(Cin, Cout, 4, 4) ConvTranspose2d weight -> (4, 4*Cin, Cout) parity GEMM weights.

    Parity p = 2*(oy%2) + (ox%2); row order within a parity = (dy, dx, ci) with
    tap (ky, kx) = (3 - py - 2*dy, 3 - px - 2*dx), matching the patch layout.
    """
    Cin, Cout = wt.shape[0], wt.shape[1]
    blocks = []
    for py in (0, 1):
        for px in (0, 1):
            taps = [wt[:, :, 3 - py - 2 * dy, 3 - px - 2 * dx]
                    for dy in (0, 1) for dx in (0, 1)]
            blocks.append(jnp.stack(taps, axis=0).reshape(4 * Cin, Cout))
    return jnp.stack(blocks, axis=0)


def conv_transpose_4s2p1(x_nhwc, w_par, *, bias=None, with_stats=False,
                         out_dtype=jnp.bfloat16):
    """ConvTranspose2d(k=4, s=2, p=1): 4 parity sub-GEMMs, K = 4*Cin, no zeros.

    Returns (y, stats): y is (4, N*H*W, Cout) parity-major; stats (or None) are
    per-row-tile BatchNorm partial sums produced in the GEMM epilogue.
    """
    N, H, W, Cin = x_nhwc.shape
    xp = jnp.pad(x_nhwc, ((0, 0), (1, 1), (1, 1), (0, 0)))      # halo of 1 pixel
    pats = []
    for py in (0, 1):
        for px in (0, 1):
            taps = [xp[:, py + dy:py + dy + H, px + dx:px + dx + W, :]
                    for dy in (0, 1) for dx in (0, 1)]
            pats.append(jnp.concatenate(taps, axis=-1).reshape(N * H * W, 4 * Cin))
    patches = jnp.stack(pats, axis=0)                           # (4, N*H*W, 4*Cin)
    return gemm(patches, w_par, bias=bias, with_stats=with_stats,
                out_dtype=out_dtype)


def _interleave_parity(y, N, H, W, C):
    """(4 = 2*py+px, N*H*W, C) parity outputs -> (N, 2H, 2W, C) NHWC image."""
    y = y.reshape(2, 2, N, H, W, C)
    y = jnp.transpose(y, (2, 3, 0, 4, 1, 5))                    # (N, H, py, W, px, C)
    return y.reshape(N, 2 * H, 2 * W, C)


# ----------------------------------------------------------------------------
# DecoderBN: parameters + forward
# ----------------------------------------------------------------------------
def init_decoder_params(key, stoch_dim, last_channels, original_in_channels,
                        stem_channels, final_feature_width):
    params = {}
    keys = iter(jax.random.split(key, 64))
    ffw = final_feature_width

    # Linear weight columns pre-permuted to (h, w, c) so the GEMM output, viewed
    # as (N*H*W, C), is already the channel-last pixel matrix (no transpose).
    lin = 0.05 * jax.random.normal(next(keys), (stoch_dim, ffw, ffw, last_channels),
                                   jnp.float32)
    params["lin_w"] = lin.reshape(stoch_dim, ffw * ffw * last_channels).astype(jnp.bfloat16)
    params["bn0_g"] = 1.0 + 0.1 * jax.random.normal(next(keys), (last_channels,), jnp.float32)
    params["bn0_b"] = 0.1 * jax.random.normal(next(keys), (last_channels,), jnp.float32)

    convs = []
    channels = last_channels
    while channels != stem_channels:
        cout = channels // 2
        wt = (0.05 * jax.random.normal(next(keys), (channels, cout, 4, 4), jnp.float32)
              ).astype(jnp.bfloat16)
        convs.append({
            "wt": wt,                              # PyTorch layout (reference path)
            "w_par": _parity_weights(wt),          # (4, 4*Cin, Cout) kernel layout
            "bn_g": 1.0 + 0.1 * jax.random.normal(next(keys), (cout,), jnp.float32),
            "bn_b": 0.1 * jax.random.normal(next(keys), (cout,), jnp.float32),
        })
        channels = cout
    params["convs"] = convs

    wt = (0.05 * jax.random.normal(next(keys), (channels, original_in_channels, 4, 4),
                                   jnp.float32)).astype(jnp.bfloat16)
    params["final_wt"] = wt
    params["final_w_par"] = _parity_weights(wt)
    params["final_b"] = 0.1 * jax.random.normal(next(keys), (original_in_channels,),
                                                jnp.float32)
    params["cfg"] = (last_channels, final_feature_width)
    return params


def decoder_bn_forward(params, sample):
    """sample: (B, L, stoch_dim) -> obs_hat: (B, L, C_in, H_img, W_img) (NCHW)."""
    B, L, stoch = sample.shape
    C0, ffw = params["cfg"]
    Nimg = B * L

    # ---- Linear (bias-free) on the MXU; output is already pixel-major NHWC
    x = sample.reshape(Nimg, stoch).astype(jnp.bfloat16)
    y, _ = gemm(x[None], params["lin_w"][None], out_dtype=jnp.bfloat16)
    y = y[0].reshape(Nimg * ffw * ffw, C0)

    # ---- BatchNorm(train stats) + ReLU: tiled stats pass + tiled apply pass
    tot, totsq = bn_batch_stats(y)
    scale, shift = _bn_scale_shift(tot, totsq, y.shape[0],
                                   params["bn0_g"], params["bn0_b"])
    x = bn_relu_apply(y, scale, shift).reshape(Nimg, ffw, ffw, C0)

    # ---- Upsampling stack: parity deconv GEMMs (BN stats fused in the GEMM
    #      epilogue) -> BN+ReLU apply -> parity interleave (NHWC throughout)
    for layer in params["convs"]:
        N_, H, W, _ = x.shape
        Cout = layer["w_par"].shape[-1]
        y, stats = conv_transpose_4s2p1(x, layer["w_par"], with_stats=True,
                                        out_dtype=jnp.bfloat16)
        s = stats.reshape(4, -1, 8, Cout)
        tot = s[:, :, 0, :].sum(axis=(0, 1))
        totsq = s[:, :, 1, :].sum(axis=(0, 1))
        scale, shift = _bn_scale_shift(tot, totsq, 4 * N_ * H * W,
                                       layer["bn_g"], layer["bn_b"])
        y = bn_relu_apply(y.reshape(4 * N_ * H * W, Cout), scale, shift)
        # TODO(synk): the parity interleave is still XLA data movement; it could
        # be folded into the apply kernel's out BlockSpec with a (N*H, 2, ...) view.
        x = _interleave_parity(y.reshape(4, N_ * H * W, Cout), N_, H, W, Cout)

    # ---- Final ConvTranspose2d (with bias, no BN/ReLU), f32 output
    N_, H, W, _ = x.shape
    Cfin = params["final_w_par"].shape[-1]
    y, _ = conv_transpose_4s2p1(x, params["final_w_par"], bias=params["final_b"],
                                out_dtype=jnp.float32)
    x = _interleave_parity(y, N_, H, W, Cfin)                   # (Nimg, 2H, 2W, Cfin)

    # ---- NHWC -> NCHW only at the very end (required by the module's output)
    x = jnp.transpose(x, (0, 3, 1, 2))
    return x.reshape(B, L, Cfin, 2 * H, 2 * W)


# ----------------------------------------------------------------------------
# pure-JAX reference (validated lowering from the previous version)
# ----------------------------------------------------------------------------
def _conv_transpose_ref(x_nhwc, wt, bias):
    N, H, W, Cin = x_nhwc.shape
    Cout = wt.shape[1]
    Ho, Wo = 2 * H, 2 * W
    up = jnp.zeros((N, 2 * H - 1, 2 * W - 1, Cin), x_nhwc.dtype)
    up = up.at[:, ::2, ::2, :].set(x_nhwc)
    xp = jnp.pad(up, ((0, 0), (2, 2), (2, 2), (0, 0)))
    patches = jnp.stack([xp[:, kh:kh + Ho, kw:kw + Wo, :]
                         for kh in range(4) for kw in range(4)], axis=3)
    patches = patches.reshape(N * Ho * Wo, 16 * Cin)
    wc = jnp.transpose(wt[:, :, ::-1, ::-1], (2, 3, 0, 1)).reshape(16 * Cin, Cout)
    out = patches @ wc
    if bias is not None:
        out = out + bias
    return out.reshape(N, Ho, Wo, Cout)


def _bn_relu_ref(x_nhwc, gamma, beta, eps=1e-5):
    m = jnp.mean(x_nhwc, axis=(0, 1, 2))
    v = jnp.mean(jnp.square(x_nhwc - m), axis=(0, 1, 2))
    return jnp.maximum((x_nhwc - m) * jax.lax.rsqrt(v + eps) * gamma + beta, 0.0)


def _decoder_reference(params, sample):
    B, L, stoch = sample.shape
    C0, ffw = params["cfg"]
    Nimg = B * L
    x = sample.reshape(Nimg, stoch).astype(jnp.bfloat16).astype(jnp.float32)
    y = x @ params["lin_w"].astype(jnp.float32)
    y = _bn_relu_ref(y.reshape(Nimg, ffw, ffw, C0), params["bn0_g"], params["bn0_b"])
    for layer in params["convs"]:
        y = _conv_transpose_ref(y, layer["wt"].astype(jnp.float32), None)
        y = _bn_relu_ref(y, layer["bn_g"], layer["bn_b"])
    y = _conv_transpose_ref(y, params["final_wt"].astype(jnp.float32), params["final_b"])
    y = jnp.transpose(y, (0, 3, 1, 2))
    return y.reshape(B, L, *y.shape[1:])


# ----------------------------------------------------------------------------
if __name__ == "__main__":
    # small, shape-consistent config
    stoch_dim = 32
    last_channels = 16
    stem_channels = 8
    original_in_channels = 3
    final_feature_width = 4
    B, L = 2, 8

    key = jax.random.PRNGKey(0)
    pkey, skey = jax.random.split(key)
    params = init_decoder_params(pkey, stoch_dim, last_channels,
                                 original_in_channels, stem_channels,
                                 final_feature_width)
    sample = jax.random.normal(skey, (B, L, stoch_dim), jnp.float32)

    fwd = jax.jit(functools.partial(decoder_bn_forward, params))
    obs_hat = jax.block_until_ready(fwd(sample))

    expected = (B, L, original_in_channels,
                final_feature_width * 4, final_feature_width * 4)
    assert obs_hat.shape == expected, (obs_hat.shape, expected)
    assert bool(jnp.all(jnp.isfinite(obs_hat)))

    # correctness vs. a pure-JAX f32 reference using the same (bf16) weights;
    # loose tolerance accounts for the bf16 activation path.
    ref = jax.block_until_ready(jax.jit(functools.partial(_decoder_reference, params))(sample))
    err = float(jnp.max(jnp.abs(obs_hat.astype(jnp.float32) - ref)))
    assert err < 0.1, f"max |pallas - reference| = {err}"

    print("KERNEL_OK")
</pallas_src>

<mosaic_0001>
module attributes {stable_mosaic.version = 11 : i64} {
  func.func @kernel(%arg0: i32, %arg1: i32, %arg2: i32, %arg3: memref<1x16x32xbf16, #tpu.memory_space<vmem>>, %arg4: memref<1x32x256xbf16, #tpu.memory_space<vmem>>, %arg5: memref<1x16x256xbf16, #tpu.memory_space<vmem>>, %arg6: memref<16x256xf32, #tpu.memory_space<vmem>>) attributes {dimension_semantics = [#tpu.dimension_semantics<parallel>, #tpu.dimension_semantics<parallel>, #tpu.dimension_semantics<arbitrary>], iteration_bounds = array<i64: 1, 1, 1>, scalar_prefetch = 0 : i64, scratch_operands = 1 : i64, tpu.core_type = #tpu.core_type<tc>, window_params = [{transform_indices = @transform_0, window_bounds = array<i64: 1, 16, 32>}, {transform_indices = @transform_1, window_bounds = array<i64: 1, 32, 256>}, {transform_indices = @transform_2, window_bounds = array<i64: 1, 16, 256>}]} {
    %c0_i32 = arith.constant 0 : i32
    %0 = arith.cmpi eq, %arg2, %c0_i32 : i32
    %1 = arith.extui %0 : i1 to i32
    %c0_i32_0 = arith.constant 0 : i32
    %2 = arith.cmpi ne, %1, %c0_i32_0 : i32
    scf.if %2 {
      %cst_12 = arith.constant 0.000000e+00 : f32
      %14 = vector.broadcast %cst_12 : f32 to vector<16x256xf32>
      %c0_13 = arith.constant 0 : index
      %c0_14 = arith.constant 0 : index
      %15 = vector.load %arg6[%c0_13, %c0_14] : memref<16x256xf32, #tpu.memory_space<vmem>>, vector<16x256xf32>
      tpu.vector_store %arg6[%c0_13, %c0_14], %14 {strides = array<i32>} : memref<16x256xf32, #tpu.memory_space<vmem>>, vector<16x256xf32>,
    } else {
    }
    %c0 = arith.constant 0 : index
    %c0_1 = arith.constant 0 : index
    %3 = vector.load %arg6[%c0, %c0_1] : memref<16x256xf32, #tpu.memory_space<vmem>>, vector<16x256xf32>
    %c0_2 = arith.constant 0 : index
    %c0_3 = arith.constant 0 : index
    %c0_4 = arith.constant 0 : index
    %4 = vector.load %arg3[%c0_2, %c0_3, %c0_4] : memref<1x16x32xbf16, #tpu.memory_space<vmem>>, vector<1x16x32xbf16>
    %5 = vector.shape_cast %4 : vector<1x16x32xbf16> to vector<16x32xbf16>
    %c0_5 = arith.constant 0 : index
    %c0_6 = arith.constant 0 : index
    %c0_7 = arith.constant 0 : index
    %6 = vector.load %arg4[%c0_5, %c0_6, %c0_7] : memref<1x32x256xbf16, #tpu.memory_space<vmem>>, vector<1x32x256xbf16>
    %7 = vector.shape_cast %6 : vector<1x32x256xbf16> to vector<32x256xbf16>
    %cst = arith.constant dense<0.000000e+00> : vector<16x256xf32>
    %8 = tpu.matmul %5, %7, %cst {dimension_numbers = #tpu.dot_dimension_numbers<[1], [0], [0], [1], [0, 0, 1, 1], [], []>} : vector<16x32xbf16>, vector<32x256xbf16>, vector<16x256xf32> -> vector<16x256xf32>
    %9 = arith.addf %3, %8 : vector<16x256xf32>
    %c0_8 = arith.constant 0 : index
    %c0_9 = arith.constant 0 : index
    %10 = vector.load %arg6[%c0_8, %c0_9] : memref<16x256xf32, #tpu.memory_space<vmem>>, vector<16x256xf32>
    tpu.vector_store %arg6[%c0_8, %c0_9], %9 {strides = array<i32>} : memref<16x256xf32, #tpu.memory_space<vmem>>, vector<16x256xf32>,
    %c0_i32_10 = arith.constant 0 : i32
    %11 = arith.cmpi eq, %arg2, %c0_i32_10 : i32
    %12 = arith.extui %11 : i1 to i32
    %c0_i32_11 = arith.constant 0 : i32
    %13 = arith.cmpi ne, %12, %c0_i32_11 : i32
    scf.if %13 {
      %c0_12 = arith.constant 0 : index
      %c0_13 = arith.constant 0 : index
      %14 = vector.load %arg6[%c0_12, %c0_13] : memref<16x256xf32, #tpu.memory_space<vmem>>, vector<16x256xf32>
      %15 = arith.truncf %14 : vector<16x256xf32> to vector<16x256xbf16>
      %c0_14 = arith.constant 0 : index
      %c0_15 = arith.constant 0 : index
      %c0_16 = arith.constant 0 : index
      %16 = vector.load %arg5[%c0_14, %c0_15, %c0_16] : memref<1x16x256xbf16, #tpu.memory_space<vmem>>, vector<1x16x256xbf16>
      %17 = vector.shape_cast %16 : vector<1x16x256xbf16> to vector<16x256xbf16>
      %18 = vector.shape_cast %15 : vector<16x256xbf16> to vector<1x16x256xbf16>
      tpu.vector_store %arg5[%c0_14, %c0_15, %c0_16], %18 {strides = array<i32>} : memref<1x16x256xbf16, #tpu.memory_space<vmem>>, vector<1x16x256xbf16>,
    } else {
    }
    return
  }
  func.func @transform_0(%arg0: i32, %arg1: i32, %arg2: i32) -> (i32, i32, i32) {
    %c0_i32 = arith.constant 0 : i32
    return %arg0, %arg1, %arg2 : i32, i32, i32
  }
  func.func @transform_1(%arg0: i32, %arg1: i32, %arg2: i32) -> (i32, i32, i32) {
    %c0_i32 = arith.constant 0 : i32
    %c0_i32_0 = arith.constant 0 : i32
    return %arg0, %arg2, %c0_i32 : i32, i32, i32
  }
  func.func @transform_2(%arg0: i32, %arg1: i32, %arg2: i32) -> (i32, i32, i32) {
    %c0_i32 = arith.constant 0 : i32
    %c0_i32_0 = arith.constant 0 : i32
    return %arg0, %arg1, %c0_i32 : i32, i32, i32
  }
}

module attributes {stable_mosaic.version = 11 : i64} {
  func.func @_bn_stats_kernel(%arg0: i32, %arg1: memref<256x16xbf16, #tpu.memory_space<vmem>>, %arg2: memref<8x16xf32, #tpu.memory_space<vmem>>) attributes {dimension_semantics = [#tpu.dimension_semantics<parallel>], iteration_bounds = array<i64: 1>, scalar_prefetch = 0 : i64, scratch_operands = 0 : i64, tpu.core_type = #tpu.core_type<tc>, window_params = [{transform_indices = @transform_0, window_bounds = array<i64: 256, 16>}, {transform_indices = @transform_1, window_bounds = array<i64: 8, 16>}]} {
    %c0 = arith.constant 0 : index
    %c0_0 = arith.constant 0 : index
    %0 = vector.load %arg1[%c0, %c0_0] : memref<256x16xbf16, #tpu.memory_space<vmem>>, vector<256x16xbf16>
    %1 = arith.extf %0 : vector<256x16xbf16> to vector<256x16xf32>
    %cst = arith.constant dense<0.000000e+00> : vector<16xf32>
    %2 = vector.multi_reduction <add>, %1, %cst [0] : vector<256x16xf32> to vector<16xf32>
    %3 = vector.shape_cast %2 : vector<16xf32> to vector<1x16xf32>
    %4 = arith.mulf %1, %1 : vector<256x16xf32>
    %cst_1 = arith.constant dense<0.000000e+00> : vector<16xf32>
    %5 = vector.multi_reduction <add>, %4, %cst_1 [0] : vector<256x16xf32> to vector<16xf32>
    %6 = vector.shape_cast %5 : vector<16xf32> to vector<1x16xf32>
    %cst_2 = arith.constant 0.000000e+00 : f32
    %7 = vector.broadcast %cst_2 : f32 to vector<6x16xf32>
    %8 = tpu.concatenate %3, %6, %7 in 0 : vector<1x16xf32>, vector<1x16xf32>, vector<6x16xf32> -> vector<8x16xf32>
    %c0_3 = arith.constant 0 : index
    %c0_4 = arith.constant 0 : index
    %9 = vector.load %arg2[%c0_3, %c0_4] : memref<8x16xf32, #tpu.memory_space<vmem>>, vector<8x16xf32>
    tpu.vector_store %arg2[%c0_3, %c0_4], %8 {strides = array<i32>} : memref<8x16xf32, #tpu.memory_space<vmem>>, vector<8x16xf32>,
    return
  }
  func.func @transform_0(%arg0: i32) -> (i32, i32) {
    %c0_i32 = arith.constant 0 : i32
    %c0_i32_0 = arith.constant 0 : i32
    return %arg0, %c0_i32 : i32, i32
  }
  func.func @transform_1(%arg0: i32) -> (i32, i32) {
    %c0_i32 = arith.constant 0 : i32
    %c0_i32_0 = arith.constant 0 : i32
    return %arg0, %c0_i32 : i32, i32
  }
}

module attributes {stable_mosaic.version = 11 : i64} {
  func.func @_bn_relu_apply_kernel(%arg0: i32, %arg1: memref<256x16xbf16, #tpu.memory_space<vmem>>, %arg2: memref<1x16xf32, #tpu.memory_space<vmem>>, %arg3: memref<1x16xf32, #tpu.memory_space<vmem>>, %arg4: memref<256x16xbf16, #tpu.memory_space<vmem>>) attributes {dimension_semantics = [#tpu.dimension_semantics<parallel>], iteration_bounds = array<i64: 1>, scalar_prefetch = 0 : i64, scratch_operands = 0 : i64, tpu.core_type = #tpu.core_type<tc>, window_params = [{transform_indices = @transform_0, window_bounds = array<i64: 256, 16>}, {pipeline_mode = #tpu.pipeline_mode<synchronous>, transform_indices = @transform_1, window_bounds = array<i64: 1, 16>}, {pipeline_mode = #tpu.pipeline_mode<synchronous>, transform_indices = @transform_2, window_bounds = array<i64: 1, 16>}, {transform_indices = @transform_3, window_bounds = array<i64: 256, 16>}]} {
    %c0 = arith.constant 0 : index
    %c0_0 = arith.constant 0 : index
    %0 = vector.load %arg1[%c0, %c0_0] : memref<256x16xbf16, #tpu.memory_space<vmem>>, vector<256x16xbf16>
    %1 = arith.extf %0 : vector<256x16xbf16> to vector<256x16xf32>
    %c0_1 = arith.constant 0 : index
    %c0_2 = arith.constant 0 : index
    %2 = vector.load %arg2[%c0_1, %c0_2] : memref<1x16xf32, #tpu.memory_space<vmem>>, vector<1x16xf32>
    %3 = vector.broadcast %2 : vector<1x16xf32> to vector<256x16xf32>
    %4 = arith.mulf %1, %3 : vector<256x16xf32>
    %c0_3 = arith.constant 0 : index
    %c0_4 = arith.constant 0 : index
    %5 = vector.load %arg3[%c0_3, %c0_4] : memref<1x16xf32, #tpu.memory_space<vmem>>, vector<1x16xf32>
    %6 = vector.broadcast %5 : vector<1x16xf32> to vector<256x16xf32>
    %7 = arith.addf %4, %6 : vector<256x16xf32>
    %cst = arith.constant 0.000000e+00 : f32
    %8 = vector.broadcast %cst : f32 to vector<256x16xf32>
    %9 = arith.maximumf %7, %8 : vector<256x16xf32>
    %10 = arith.truncf %9 : vector<256x16xf32> to vector<256x16xbf16>
    %c0_5 = arith.constant 0 : index
    %c0_6 = arith.constant 0 : index
    %11 = vector.load %arg4[%c0_5, %c0_6] : memref<256x16xbf16, #tpu.memory_space<vmem>>, vector<256x16xbf16>
    tpu.vector_store %arg4[%c0_5, %c0_6], %10 {strides = array<i32>} : memref<256x16xbf16, #tpu.memory_space<vmem>>, vector<256x16xbf16>,
    return
  }
  func.func @transform_0(%arg0: i32) -> (i32, i32) {
    %c0_i32 = arith.constant 0 : i32
    %c0_i32_0 = arith.constant 0 : i32
    return %arg0, %c0_i32 : i32, i32
  }
  func.func @transform_1(%arg0: i32) -> (i32, i32) {
    %c0_i32 = arith.constant 0 : i32
    %c0_i32_0 = arith.constant 0 : i32
    %c0_i32_1 = arith.constant 0 : i32
    return %c0_i32, %c0_i32_0 : i32, i32
  }
  func.func @transform_2(%arg0: i32) -> (i32, i32) {
    %c0_i32 = arith.constant 0 : i32
    %c0_i32_0 = arith.constant 0 : i32
    %c0_i32_1 = arith.constant 0 : i32
    return %c0_i32, %c0_i32_0 : i32, i32
  }
  func.func @transform_3(%arg0: i32) -> (i32, i32) {
    %c0_i32 = arith.constant 0 : i32
    %c0_i32_0 = arith.constant 0 : i32
    return %arg0, %c0_i32 : i32, i32
  }
}

module attributes {stable_mosaic.version = 11 : i64} {
  func.func @kernel(%arg0: i32, %arg1: i32, %arg2: i32, %arg3: memref<1x256x64xbf16, #tpu.memory_space<vmem>>, %arg4: memref<1x64x8xbf16, #tpu.memory_space<vmem>>, %arg5: memref<1x256x8xbf16, #tpu.memory_space<vmem>>, %arg6: memref<1x8x8xf32, #tpu.memory_space<vmem>>, %arg7: memref<256x8xf32, #tpu.memory_space<vmem>>) attributes {dimension_semantics = [#tpu.dimension_semantics<parallel>, #tpu.dimension_semantics<parallel>, #tpu.dimension_semantics<arbitrary>], iteration_bounds = array<i64: 4, 1, 1>, scalar_prefetch = 0 : i64, scratch_operands = 1 : i64, tpu.core_type = #tpu.core_type<tc>, window_params = [{transform_indices = @transform_0, window_bounds = array<i64: 1, 256, 64>}, {transform_indices = @transform_1, window_bounds = array<i64: 1, 64, 8>}, {transform_indices = @transform_2, window_bounds = array<i64: 1, 256, 8>}, {transform_indices = @transform_3, window_bounds = array<i64: 1, 8, 8>}]} {
    %c0_i32 = arith.constant 0 : i32
    %0 = arith.cmpi eq, %arg2, %c0_i32 : i32
    %1 = arith.extui %0 : i1 to i32
    %c0_i32_0 = arith.constant 0 : i32
    %2 = arith.cmpi ne, %1, %c0_i32_0 : i32
    scf.if %2 {
      %cst_12 = arith.constant 0.000000e+00 : f32
      %14 = vector.broadcast %cst_12 : f32 to vector<256x8xf32>
      %c0_13 = arith.constant 0 : index
      %c0_14 = arith.constant 0 : index
      %15 = vector.load %arg7[%c0_13, %c0_14] : memref<256x8xf32, #tpu.memory_space<vmem>>, vector<256x8xf32>
      tpu.vector_store %arg7[%c0_13, %c0_14], %14 {strides = array<i32>} : memref<256x8xf32, #tpu.memory_space<vmem>>, vector<256x8xf32>,
    } else {
    }
    %c0 = arith.constant 0 : index
    %c0_1 = arith.constant 0 : index
    %3 = vector.load %arg7[%c0, %c0_1] : memref<256x8xf32, #tpu.memory_space<vmem>>, vector<256x8xf32>
    %c0_2 = arith.constant 0 : index
    %c0_3 = arith.constant 0 : index
    %c0_4 = arith.constant 0 : index
    %4 = vector.load %arg3[%c0_2, %c0_3, %c0_4] : memref<1x256x64xbf16, #tpu.memory_space<vmem>>, vector<1x256x64xbf16>
    %5 = vector.shape_cast %4 : vector<1x256x64xbf16> to vector<256x64xbf16>
    %c0_5 = arith.constant 0 : index
    %c0_6 = arith.constant 0 : index
    %c0_7 = arith.constant 0 : index
    %6 = vector.load %arg4[%c0_5, %c0_6, %c0_7] : memref<1x64x8xbf16, #tpu.memory_space<vmem>>, vector<1x64x8xbf16>
    %7 = vector.shape_cast %6 : vector<1x64x8xbf16> to vector<64x8xbf16>
    %cst = arith.constant dense<0.000000e+00> : vector<256x8xf32>
    %8 = tpu.matmul %5, %7, %cst {dimension_numbers = #tpu.dot_dimension_numbers<[1], [0], [0], [1], [0, 0, 1, 1], [], []>} : vector<256x64xbf16>, vector<64x8xbf16>, vector<256x8xf32> -> vector<256x8xf32>
    %9 = arith.addf %3, %8 : vector<256x8xf32>
    %c0_8 = arith.constant 0 : index
    %c0_9 = arith.constant 0 : index
    %10 = vector.load %arg7[%c0_8, %c0_9] : memref<256x8xf32, #tpu.memory_space<vmem>>, vector<256x8xf32>
    tpu.vector_store %arg7[%c0_8, %c0_9], %9 {strides = array<i32>} : memref<256x8xf32, #tpu.memory_space<vmem>>, vector<256x8xf32>,
    %c0_i32_10 = arith.constant 0 : i32
    %11 = arith.cmpi eq, %arg2, %c0_i32_10 : i32
    %12 = arith.extui %11 : i1 to i32
    %c0_i32_11 = arith.constant 0 : i32
    %13 = arith.cmpi ne, %12, %c0_i32_11 : i32
    scf.if %13 {
      %c0_12 = arith.constant 0 : index
      %c0_13 = arith.constant 0 : index
      %14 = vector.load %arg7[%c0_12, %c0_13] : memref<256x8xf32, #tpu.memory_space<vmem>>, vector<256x8xf32>
      %15 = arith.truncf %14 : vector<256x8xf32> to vector<256x8xbf16>
      %c0_14 = arith.constant 0 : index
      %c0_15 = arith.constant 0 : index
      %c0_16 = arith.constant 0 : index
      %16 = vector.load %arg5[%c0_14, %c0_15, %c0_16] : memref<1x256x8xbf16, #tpu.memory_space<vmem>>, vector<1x256x8xbf16>
      %17 = vector.shape_cast %16 : vector<1x256x8xbf16> to vector<256x8xbf16>
      %18 = vector.shape_cast %15 : vector<256x8xbf16> to vector<1x256x8xbf16>
      tpu.vector_store %arg5[%c0_14, %c0_15, %c0_16], %18 {strides = array<i32>} : memref<1x256x8xbf16, #tpu.memory_space<vmem>>, vector<1x256x8xbf16>,
      %cst_17 = arith.constant dense<0.000000e+00> : vector<8xf32>
      %19 = vector.multi_reduction <add>, %14, %cst_17 [0] : vector<256x8xf32> to vector<8xf32>
      %20 = vector.shape_cast %19 : vector<8xf32> to vector<1x8xf32>
      %21 = arith.mulf %14, %14 : vector<256x8xf32>
      %cst_18 = arith.constant dense<0.000000e+00> : vector<8xf32>
      %22 = vector.multi_reduction <add>, %21, %cst_18 [0] : vector<256x8xf32> to vector<8xf32>
      %23 = vector.shape_cast %22 : vector<8xf32> to vector<1x8xf32>
      %cst_19 = arith.constant 0.000000e+00 : f32
      %24 = vector.broadcast %cst_19 : f32 to vector<6x8xf32>
      %25 = tpu.concatenate %20, %23, %24 in 0 : vector<1x8xf32>, vector<1x8xf32>, vector<6x8xf32> -> vector<8x8xf32>
      %c0_20 = arith.constant 0 : index
      %c0_21 = arith.constant 0 : index
      %c0_22 = arith.constant 0 : index
      %26 = vector.load %arg6[%c0_20, %c0_21, %c0_22] : memref<1x8x8xf32, #tpu.memory_space<vmem>>, vector<1x8x8xf32>
      %27 = vector.shape_cast %26 : vector<1x8x8xf32> to vector<8x8xf32>
      %28 = vector.shape_cast %25 : vector<8x8xf32> to vector<1x8x8xf32>
      tpu.vector_store %arg6[%c0_20, %c0_21, %c0_22], %28 {strides = array<i32>} : memref<1x8x8xf32, #tpu.memory_space<vmem>>, vector<1x8x8xf32>,
    } else {
    }
    return
  }
  func.func @transform_0(%arg0: i32, %arg1: i32, %arg2: i32) -> (i32, i32, i32) {
    %c0_i32 = arith.constant 0 : i32
    return %arg0, %arg1, %arg2 : i32, i32, i32
  }
  func.func @transform_1(%arg0: i32, %arg1: i32, %arg2: i32) -> (i32, i32, i32) {
    %c0_i32 = arith.constant 0 : i32
    %c0_i32_0 = arith.constant 0 : i32
    return %arg0, %arg2, %c0_i32 : i32, i32, i32
  }
  func.func @transform_2(%arg0: i32, %arg1: i32, %arg2: i32) -> (i32, i32, i32) {
    %c0_i32 = arith.constant 0 : i32
    %c0_i32_0 = arith.constant 0 : i32
    return %arg0, %arg1, %c0_i32 : i32, i32, i32
  }
  func.func @transform_3(%arg0: i32, %arg1: i32, %arg2: i32) -> (i32, i32, i32) {
    %c0_i32 = arith.constant 0 : i32
    %c0_i32_0 = arith.constant 0 : i32
    return %arg0, %arg1, %c0_i32 : i32, i32, i32
  }
}

module attributes {stable_mosaic.version = 11 : i64} {
  func.func @_bn_relu_apply_kernel(%arg0: i32, %arg1: memref<1024x8xbf16, #tpu.memory_space<vmem>>, %arg2: memref<1x8xf32, #tpu.memory_space<vmem>>, %arg3: memref<1x8xf32, #tpu.memory_space<vmem>>, %arg4: memref<1024x8xbf16, #tpu.memory_space<vmem>>) attributes {dimension_semantics = [#tpu.dimension_semantics<parallel>], iteration_bounds = array<i64: 1>, scalar_prefetch = 0 : i64, scratch_operands = 0 : i64, tpu.core_type = #tpu.core_type<tc>, window_params = [{transform_indices = @transform_0, window_bounds = array<i64: 1024, 8>}, {pipeline_mode = #tpu.pipeline_mode<synchronous>, transform_indices = @transform_1, window_bounds = array<i64: 1, 8>}, {pipeline_mode = #tpu.pipeline_mode<synchronous>, transform_indices = @transform_2, window_bounds = array<i64: 1, 8>}, {transform_indices = @transform_3, window_bounds = array<i64: 1024, 8>}]} {
    %c0 = arith.constant 0 : index
    %c0_0 = arith.constant 0 : index
    %0 = vector.load %arg1[%c0, %c0_0] : memref<1024x8xbf16, #tpu.memory_space<vmem>>, vector<1024x8xbf16>
    %1 = arith.extf %0 : vector<1024x8xbf16> to vector<1024x8xf32>
    %c0_1 = arith.constant 0 : index
    %c0_2 = arith.constant 0 : index
    %2 = vector.load %arg2[%c0_1, %c0_2] : memref<1x8xf32, #tpu.memory_space<vmem>>, vector<1x8xf32>
    %3 = vector.broadcast %2 : vector<1x8xf32> to vector<1024x8xf32>
    %4 = arith.mulf %1, %3 : vector<1024x8xf32>
    %c0_3 = arith.constant 0 : index
    %c0_4 = arith.constant 0 : index
    %5 = vector.load %arg3[%c0_3, %c0_4] : memref<1x8xf32, #tpu.memory_space<vmem>>, vector<1x8xf32>
    %6 = vector.broadcast %5 : vector<1x8xf32> to vector<1024x8xf32>
    %7 = arith.addf %4, %6 : vector<1024x8xf32>
    %cst = arith.constant 0.000000e+00 : f32
    %8 = vector.broadcast %cst : f32 to vector<1024x8xf32>
    %9 = arith.maximumf %7, %8 : vector<1024x8xf32>
    %10 = arith.truncf %9 : vector<1024x8xf32> to vector<1024x8xbf16>
    %c0_5 = arith.constant 0 : index
    %c0_6 = arith.constant 0 : index
    %11 = vector.load %arg4[%c0_5, %c0_6] : memref<1024x8xbf16, #tpu.memory_space<vmem>>, vector<1024x8xbf16>
    tpu.vector_store %arg4[%c0_5, %c0_6], %10 {strides = array<i32>} : memref<1024x8xbf16, #tpu.memory_space<vmem>>, vector<1024x8xbf16>,
    return
  }
  func.func @transform_0(%arg0: i32) -> (i32, i32) {
    %c0_i32 = arith.constant 0 : i32
    %c0_i32_0 = arith.constant 0 : i32
    return %arg0, %c0_i32 : i32, i32
  }
  func.func @transform_1(%arg0: i32) -> (i32, i32) {
    %c0_i32 = arith.constant 0 : i32
    %c0_i32_0 = arith.constant 0 : i32
    %c0_i32_1 = arith.constant 0 : i32
    return %c0_i32, %c0_i32_0 : i32, i32
  }
  func.func @transform_2(%arg0: i32) -> (i32, i32) {
    %c0_i32 = arith.constant 0 : i32
    %c0_i32_0 = arith.constant 0 : i32
    %c0_i32_1 = arith.constant 0 : i32
    return %c0_i32, %c0_i32_0 : i32, i32
  }
  func.func @transform_3(%arg0: i32) -> (i32, i32) {
    %c0_i32 = arith.constant 0 : i32
    %c0_i32_0 = arith.constant 0 : i32
    return %arg0, %c0_i32 : i32, i32
  }
}

module attributes {stable_mosaic.version = 11 : i64} {
  func.func @kernel(%arg0: i32, %arg1: i32, %arg2: i32, %arg3: memref<1x512x32xbf16, #tpu.memory_space<vmem>>, %arg4: memref<1x32x3xbf16, #tpu.memory_space<vmem>>, %arg5: memref<1x3xf32, #tpu.memory_space<vmem>>, %arg6: memref<1x512x3xf32, #tpu.memory_space<vmem>>, %arg7: memref<512x3xf32, #tpu.memory_space<vmem>>) attributes {dimension_semantics = [#tpu.dimension_semantics<parallel>, #tpu.dimension_semantics<parallel>, #tpu.dimension_semantics<arbitrary>], iteration_bounds = array<i64: 4, 2, 1>, scalar_prefetch = 0 : i64, scratch_operands = 1 : i64, tpu.core_type = #tpu.core_type<tc>, window_params = [{transform_indices = @transform_0, window_bounds = array<i64: 1, 512, 32>}, {transform_indices = @transform_1, window_bounds = array<i64: 1, 32, 3>}, {pipeline_mode = #tpu.pipeline_mode<synchronous>, transform_indices = @transform_2, window_bounds = array<i64: 1, 3>}, {transform_indices = @transform_3, window_bounds = array<i64: 1, 512, 3>}]} {
    %c0_i32 = arith.constant 0 : i32
    %0 = arith.cmpi eq, %arg2, %c0_i32 : i32
    %1 = arith.extui %0 : i1 to i32
    %c0_i32_0 = arith.constant 0 : i32
    %2 = arith.cmpi ne, %1, %c0_i32_0 : i32
    scf.if %2 {
      %cst_12 = arith.constant 0.000000e+00 : f32
      %14 = vector.broadcast %cst_12 : f32 to vector<512x3xf32>
      %c0_13 = arith.constant 0 : index
      %c0_14 = arith.constant 0 : index
      %15 = vector.load %arg7[%c0_13, %c0_14] : memref<512x3xf32, #tpu.memory_space<vmem>>, vector<512x3xf32>
      tpu.vector_store %arg7[%c0_13, %c0_14], %14 {strides = array<i32>} : memref<512x3xf32, #tpu.memory_space<vmem>>, vector<512x3xf32>,
    } else {
    }
    %c0 = arith.constant 0 : index
    %c0_1 = arith.constant 0 : index
    %3 = vector.load %arg7[%c0, %c0_1] : memref<512x3xf32, #tpu.memory_space<vmem>>, vector<512x3xf32>
    %c0_2 = arith.constant 0 : index
    %c0_3 = arith.constant 0 : index
    %c0_4 = arith.constant 0 : index
    %4 = vector.load %arg3[%c0_2, %c0_3, %c0_4] : memref<1x512x32xbf16, #tpu.memory_space<vmem>>, vector<1x512x32xbf16>
    %5 = vector.shape_cast %4 : vector<1x512x32xbf16> to vector<512x32xbf16>
    %c0_5 = arith.constant 0 : index
    %c0_6 = arith.constant 0 : index
    %c0_7 = arith.constant 0 : index
    %6 = vector.load %arg4[%c0_5, %c0_6, %c0_7] : memref<1x32x3xbf16, #tpu.memory_space<vmem>>, vector<1x32x3xbf16>
    %7 = vector.shape_cast %6 : vector<1x32x3xbf16> to vector<32x3xbf16>
    %cst = arith.constant dense<0.000000e+00> : vector<512x3xf32>
    %8 = tpu.matmul %5, %7, %cst {dimension_numbers = #tpu.dot_dimension_numbers<[1], [0], [0], [1], [0, 0, 1, 1], [], []>} : vector<512x32xbf16>, vector<32x3xbf16>, vector<512x3xf32> -> vector<512x3xf32>
    %9 = arith.addf %3, %8 : vector<512x3xf32>
    %c0_8 = arith.constant 0 : index
    %c0_9 = arith.constant 0 : index
    %10 = vector.load %arg7[%c0_8, %c0_9] : memref<512x3xf32, #tpu.memory_space<vmem>>, vector<512x3xf32>
    tpu.vector_store %arg7[%c0_8, %c0_9], %9 {strides = array<i32>} : memref<512x3xf32, #tpu.memory_space<vmem>>, vector<512x3xf32>,
    %c0_i32_10 = arith.constant 0 : i32
    %11 = arith.cmpi eq, %arg2, %c0_i32_10 : i32
    %12 = arith.extui %11 : i1 to i32
    %c0_i32_11 = arith.constant 0 : i32
    %13 = arith.cmpi ne, %12, %c0_i32_11 : i32
    scf.if %13 {
      %c0_12 = arith.constant 0 : index
      %c0_13 = arith.constant 0 : index
      %14 = vector.load %arg7[%c0_12, %c0_13] : memref<512x3xf32, #tpu.memory_space<vmem>>, vector<512x3xf32>
      %c0_14 = arith.constant 0 : index
      %c0_15 = arith.constant 0 : index
      %15 = vector.load %arg5[%c0_14, %c0_15] : memref<1x3xf32, #tpu.memory_space<vmem>>, vector<1x3xf32>
      %16 = vector.broadcast %15 : vector<1x3xf32> to vector<512x3xf32>
      %17 = arith.addf %14, %16 : vector<512x3xf32>
      %c0_16 = arith.constant 0 : index
      %c0_17 = arith.constant 0 : index
      %c0_18 = arith.constant 0 : index
      %18 = vector.load %arg6[%c0_16, %c0_17, %c0_18] : memref<1x512x3xf32, #tpu.memory_space<vmem>>, vector<1x512x3xf32>
      %19 = vector.shape_cast %18 : vector<1x512x3xf32> to vector<512x3xf32>
      %20 = vector.shape_cast %17 : vector<512x3xf32> to vector<1x512x3xf32>
      tpu.vector_store %arg6[%c0_16, %c0_17, %c0_18], %20 {strides = array<i32>} : memref<1x512x3xf32, #tpu.memory_space<vmem>>, vector<1x512x3xf32>,
    } else {
    }
    return
  }
  func.func @transform_0(%arg0: i32, %arg1: i32, %arg2: i32) -> (i32, i32, i32) {
    %c0_i32 = arith.constant 0 : i32
    return %arg0, %arg1, %arg2 : i32, i32, i32
  }
  func.func @transform_1(%arg0: i32, %arg1: i32, %arg2: i32) -> (i32, i32, i32) {
    %c0_i32 = arith.constant 0 : i32
    %c0_i32_0 = arith.constant 0 : i32
    return %arg0, %arg2, %c0_i32 : i32, i32, i32
  }
  func.func @transform_2(%arg0: i32, %arg1: i32, %arg2: i32) -> (i32, i32) {
    %c0_i32 = arith.constant 0 : i32
    %c0_i32_0 = arith.constant 0 : i32
    %c0_i32_1 = arith.constant 0 : i32
    return %c0_i32, %c0_i32_0 : i32, i32
  }
  func.func @transform_3(%arg0: i32, %arg1: i32, %arg2: i32) -> (i32, i32, i32) {
    %c0_i32 = arith.constant 0 : i32
    %c0_i32_0 = arith.constant 0 : i32
    return %arg0, %arg1, %c0_i32 : i32, i32, i32
  }
}

</mosaic_0001>

<llo_original>
// kernel: squeeze.5
$region0: #{squeeze.5}
  %s0 = inlined_call_operand.vmem [shape: bf16[1,16,256], index: 0, kind: input, shape index: {}]
  %s1 = inlined_call_operand.vmem [shape: bf16[256,16], index: 1, kind: output, shape index: {}]
  $region1: #{squeeze.5} parent=0
    #allocation0 [shape = 'u8[131072]{0}', space=vmem, size = 0x20000, scoped, tag = 'scoped mem for output reshape']
    #allocation1 [shape = 'u8[16384]{0}', space=vmem, size = 0x4000, scoped, tag = 'scoped mem for input reshape']
    %s3 = ssub.s32 256, 1
    %s4 = scalar_lea.vmem %s0, 12
    %s5 = sshrl.u32 %s3, 1
    %s6 = sor.u32 %s3, %s5
    %s7 = sand.u32 %s6, 85
    %s8 = sshrl.u32 %s7, 1
    %s9 = sor.u32 %s7, %s8
    %s10 = sand.u32 51, %s9
    %s11 = sshrl.u32 %s10, 2
    %s12 = sor.u32 %s10, %s11
    %s13 = sand.u32 15, %s12
    %v14 = vld [vmem:[%s4] sm:%s13]
    %v15 = vunpack.c.l.bf16 %v14
    %v16 = vunpack.c.h.bf16 %v14
    %s17 = scalar_lea.vmem [#allocation1], 24
    %18 = vst [vmem:[%s17] sm:%s3] %v15
    %s19 = scalar_lea.vmem %s0, 8
    %s20 = sshrl.u32 %s3, 1
    %s21 = sor.u32 %s3, %s20
    %s22 = sand.u32 %s21, 85
    %s23 = sshrl.u32 %s22, 1
    %s24 = sor.u32 %s22, %s23
    %s25 = sand.u32 51, %s24
    %s26 = sshrl.u32 %s25, 2
    %s27 = sor.u32 %s25, %s26
    %s28 = sand.u32 15, %s27
    %v29 = vld [vmem:[%s19] sm:%s28]
    %v30 = vunpack.c.l.bf16 %v29
    %v31 = vunpack.c.h.bf16 %v29
    %s32 = scalar_lea.vmem [#allocation1], 16
    %33 = vst [vmem:[%s32] sm:%s3] %v30
    %s34 = scalar_lea.vmem %s0, 4
    %s35 = sshrl.u32 %s3, 1
    %s36 = sor.u32 %s3, %s35
    %s37 = sand.u32 %s36, 85
    %s38 = sshrl.u32 %s37, 1
    %s39 = sor.u32 %s37, %s38
    %s40 = sand.u32 51, %s39
    %s41 = sshrl.u32 %s40, 2
    %s42 = sor.u32 %s40, %s41
    %s43 = sand.u32 15, %s42
    %v44 = vld [vmem:[%s34] sm:%s43]
    %v45 = vunpack.c.l.bf16 %v44
    %v46 = vunpack.c.h.bf16 %v44
    %s47 = scalar_lea.vmem [#allocation1], 8
    %48 = vst [vmem:[%s47] sm:%s3] %v45
    %s49 = sshrl.u32 %s3, 1
    %s50 = sor.u32 %s3, %s49
    %s51 = sand.u32 %s50, 85
    %s52 = sshrl.u32 %s51, 1
    %s53 = sor.u32 %s51, %s52
    %s54 = sand.u32 51, %s53
    %s55 = sshrl.u32 %s54, 2
    %s56 = sor.u32 %s54, %s55
    %s57 = sand.u32 15, %s56
    %v58 = vld [vmem:[%s0] sm:%s57]
    %v59 = vunpack.c.l.bf16 %v58
    %v60 = vunpack.c.h.bf16 %v58
    %61 = vst [vmem:[#allocation1] sm:%s3] %v59
    %v62 = vld [vmem:[#allocation1] sm:$0xff]
    %vm63 = vcmask 130048
    %64 = vst.msk [vmem:[#allocation0] ss:$16 sm:$0x3] %vm63, %v62
    %65 = vst.msk [vmem:[#allocation0] ss:$16 sm:$0xc] %vm63, %v62
    %66 = vst.msk [vmem:[#allocation0] ss:$16 sm:$0x30] %vm63, %v62
    %67 = vst.msk [vmem:[#allocation0] ss:$16 sm:$0xc0] %vm63, %v62
    %s68 = scalar_lea.vmem [#allocation1], 8
    %v69 = vld [vmem:[%s68] sm:$0xff]
    %vm70 = vcmask 130048
    %s71 = scalar_lea.vmem [#allocation0], 8
    %72 = vst.msk [vmem:[%s71] ss:$16 sm:$0x3] %vm70, %v69
    %s73 = scalar_lea.vmem [#allocation0], 8
    %74 = vst.msk [vmem:[%s73] ss:$16 sm:$0xc] %vm70, %v69
    %s75 = scalar_lea.vmem [#allocation0], 8
    %76 = vst.msk [vmem:[%s75] ss:$16 sm:$0x30] %vm70, %v69
    %s77 = scalar_lea.vmem [#allocation0], 8
    %78 = vst.msk [vmem:[%s77] ss:$16 sm:$0xc0] %vm70, %v69
    %s79 = scalar_lea.vmem [#allocation1], 16
    %v80 = vld [vmem:[%s79] sm:$0xff]
    %vm81 = vcmask 130048
    %s82 = scalar_lea.vmem [#allocation0], 128
    %83 = vst.msk [vmem:[%s82] ss:$16 sm:$0x3] %vm81, %v80
    %s84 = scalar_lea.vmem [#allocation0], 128
    %85 = vst.msk [vmem:[%s84] ss:$16 sm:$0xc] %vm81, %v80
    %s86 = scalar_lea.vmem [#allocation0], 128
    %87 = vst.msk [vmem:[%s86] ss:$16 sm:$0x30] %vm81, %v80
    %s88 = scalar_lea.vmem [#allocation0], 128
    %89 = vst.msk [vmem:[%s88] ss:$16 sm:$0xc0] %vm81, %v80
    %s90 = scalar_lea.vmem [#allocation1], 24
    %v91 = vld [vmem:[%s90] sm:$0xff]
    %vm92 = vcmask 130048
    %s93 = scalar_lea.vmem [#allocation0], 136
    %94 = vst.msk [vmem:[%s93] ss:$16 sm:$0x3] %vm92, %v91
    %s95 = scalar_lea.vmem [#allocation0], 136
    %96 = vst.msk [vmem:[%s95] ss:$16 sm:$0xc] %vm92, %v91
    %s97 = scalar_lea.vmem [#allocation0], 136
    %98 = vst.msk [vmem:[%s97] ss:$16 sm:$0x30] %vm92, %v91
    %s99 = scalar_lea.vmem [#allocation0], 136
    %100 = vst.msk [vmem:[%s99] ss:$16 sm:$0xc0] %vm92, %v91
    %v101 = vld.sshfl [vmem:[#allocation1] sm:$0xff pattern:$0xb3a29180]
    %102 = vrot.lane.b32.xlu0 %v101, 112
    %v103 = vpop.permute.xlu0 %102
    %vm104 = vcmask 130048
    %s105 = scalar_lea.vmem [#allocation0], 1
    %106 = vst.msk [vmem:[%s105] ss:$8 sm:$0xf] %vm104, %v103
    %s107 = scalar_lea.vmem [#allocation0], 1
    %108 = vst.msk [vmem:[%s107] ss:$8 sm:$0xf0] %vm104, %v103
    %s109 = scalar_lea.vmem [#allocation1], 4
    %v110 = vld.sshfl [vmem:[%s109] sm:$0xff pattern:$0xb3a29180]
    %111 = vrot.lane.b32.xlu0 %v110, 112
    %v112 = vpop.permute.xlu0 %111
    %vm113 = vcmask 130048
    %s114 = scalar_lea.vmem [#allocation0], 65
    %115 = vst.msk [vmem:[%s114] ss:$8 sm:$0xf] %vm113, %v112
    %s116 = scalar_lea.vmem [#allocation0], 65
    %117 = vst.msk [vmem:[%s116] ss:$8 sm:$0xf0] %vm113, %v112
    %s118 = scalar_lea.vmem [#allocation1], 16
    %v119 = vld.sshfl [vmem:[%s118] sm:$0xff pattern:$0xb3a29180]
    %120 = vrot.lane.b32.xlu0 %v119, 112
    %v121 = vpop.permute.xlu0 %120
    %vm122 = vcmask 130048
    %s123 = scalar_lea.vmem [#allocation0], 129
    %124 = vst.msk [vmem:[%s123] ss:$8 sm:$0xf] %vm122, %v121
    %s125 = scalar_lea.vmem [#allocation0], 129
    %126 = vst.msk [vmem:[%s125] ss:$8 sm:$0xf0] %vm122, %v121
    %s127 = scalar_lea.vmem [#allocation1], 20
    %v128 = vld.sshfl [vmem:[%s127] sm:$0xff pattern:$0xb3a29180]
    %129 = vrot.lane.b32.xlu0 %v128, 112
    %v130 = vpop.permute.xlu0 %129
    %vm131 = vcmask 130048
    %s132 = scalar_lea.vmem [#allocation0], 193
    %133 = vst.msk [vmem:[%s132] ss:$8 sm:$0xf] %vm131, %v130
    %s134 = scalar_lea.vmem [#allocation0], 193
    %135 = vst.msk [vmem:[%s134] ss:$8 sm:$0xf0] %vm131, %v130
    %v136 = vld.sshfl [vmem:[#allocation1] sm:$0xff pattern:$0xb3a29180]
    %137 = vrot.lane.b32.xlu0 %v136, 96
    %v138 = vpop.permute.xlu0 %137
    %vm139 = vcmask 130048
    %s140 = scalar_lea.vmem [#allocation0], 2
    %141 = vst.msk [vmem:[%s140] ss:$8 sm:$0xf] %vm139, %v138
    %s142 = scalar_lea.vmem [#allocation0], 2
    %143 = vst.msk [vmem:[%s142] ss:$8 sm:$0xf0] %vm139, %v138
    %s144 = scalar_lea.vmem [#allocation1], 4
    %v145 = vld.sshfl [vmem:[%s144] sm:$0xff pattern:$0xb3a29180]
    %146 = vrot.lane.b32.xlu0 %v145, 96
    %v147 = vpop.permute.xlu0 %146
    %vm148 = vcmask 130048
    %s149 = scalar_lea.vmem [#allocation0], 66
    %150 = vst.msk [vmem:[%s149] ss:$8 sm:$0xf] %vm148, %v147
    %s151 = scalar_lea.vmem [#allocation0], 66
    %152 = vst.msk [vmem:[%s151] ss:$8 sm:$0xf0] %vm148, %v147
    %s153 = scalar_lea.vmem [#allocation1], 16
    %v154 = vld.sshfl [vmem:[%s153] sm:$0xff pattern:$0xb3a29180]
    %155 = vrot.lane.b32.xlu0 %v154, 96
    %v156 = vpop.permute.xlu0 %155
    %vm157 = vcmask 130048
    %s158 = scalar_lea.vmem [#allocation0], 130
    %159 = vst.msk [vmem:[%s158] ss:$8 sm:$0xf] %vm157, %v156
    %s160 = scalar_lea.vmem [#allocation0], 130
    %161 = vst.msk [vmem:[%s160] ss:$8 sm:$0xf0] %vm157, %v156
    %s162 = scalar_lea.vmem [#allocation1], 20
    %v163 = vld.sshfl [vmem:[%s162] sm:$0xff pattern:$0xb3a29180]
    %164 = vrot.lane.b32.xlu0 %v163, 96
    %v165 = vpop.permute.xlu0 %164
    %vm166 = vcmask 130048
    %s167 = scalar_lea.vmem [#allocation0], 194
    %168 = vst.msk [vmem:[%s167] ss:$8 sm:$0xf] %vm166, %v165
    %s169 = scalar_lea.vmem [#allocation0], 194
    %170 = vst.msk [vmem:[%s169] ss:$8 sm:$0xf0] %vm166, %v165
    %v171 = vld.sshfl [vmem:[#allocation1] sm:$0xff pattern:$0xb3a29180]
    %172 = vrot.lane.b32.xlu0 %v171, 80
    %v173 = vpop.permute.xlu0 %172
    %vm174 = vcmask 130048
    %s175 = scalar_lea.vmem [#allocation0], 3
    %176 = vst.msk [vmem:[%s175] ss:$8 sm:$0xf] %vm174, %v173
    %s177 = scalar_lea.vmem [#allocation0], 3
    %178 = vst.msk [vmem:[%s177] ss:$8 sm:$0xf0] %vm174, %v173
    %s179 = scalar_lea.vmem [#allocation1], 4
    %v180 = vld.sshfl [vmem:[%s179] sm:$0xff pattern:$0xb3a29180]
    %181 = vrot.lane.b32.xlu0 %v180, 80
    %v182 = vpop.permute.xlu0 %181
    %vm183 = vcmask 130048
    %s184 = scalar_lea.vmem [#allocation0], 67
    %185 = vst.msk [vmem:[%s184] ss:$8 sm:$0xf] %vm183, %v182
    %s186 = scalar_lea.vmem [#allocation0], 67
    %187 = vst.msk [vmem:[%s186] ss:$8 sm:$0xf0] %vm183, %v182
    %s188 = scalar_lea.vmem [#allocation1], 16
    %v189 = vld.sshfl [vmem:[%s188] sm:$0xff pattern:$0xb3a29180]
    %190 = vrot.lane.b32.xlu0 %v189, 80
    %v191 = vpop.permute.xlu0 %190
    %vm192 = vcmask 130048
    %s193 = scalar_lea.vmem [#allocation0], 131
    %194 = vst.msk [vmem:[%s193] ss:$8 sm:$0xf] %vm192, %v191
    %s195 = scalar_lea.vmem [#allocation0], 131
    %196 = vst.msk [vmem:[%s195] ss:$8 sm:$0xf0] %vm192, %v191
    %s197 = scalar_lea.vmem [#allocation1], 20
    %v198 = vld.sshfl [vmem:[%s197] sm:$0xff pattern:$0xb3a29180]
    %199 = vrot.lane.b32.xlu0 %v198, 80
    %v200 = vpop.permute.xlu0 %199
    %vm201 = vcmask 130048
    %s202 = scalar_lea.vmem [#allocation0], 195
    %203 = vst.msk [vmem:[%s202] ss:$8 sm:$0xf] %vm201, %v200
    %s204 = scalar_lea.vmem [#allocation0], 195
    %205 = vst.msk [vmem:[%s204] ss:$8 sm:$0xf0] %vm201, %v200
    %v206 = vld.sshfl [vmem:[#allocation1] sm:$0xff pattern:$0xb3a29180]
    %207 = vrot.lane.b32.xlu0 %v206, 64
    %v208 = vpop.permute.xlu0 %207
    %vm209 = vcmask 130048
    %s210 = scalar_lea.vmem [#allocation0], 4
    %211 = vst.msk [vmem:[%s210] ss:$8 sm:$0xf] %vm209, %v208
    %s212 = scalar_lea.vmem [#allocation0], 4
    %213 = vst.msk [vmem:[%s212] ss:$8 sm:$0xf0] %vm209, %v208
    %s214 = scalar_lea.vmem [#allocation1], 4
    %v215 = vld.sshfl [vmem:[%s214] sm:$0xff pattern:$0xb3a29180]
    %216 = vrot.lane.b32.xlu0 %v215, 64
    %v217 = vpop.permute.xlu0 %216
    %vm218 = vcmask 130048
    %s219 = scalar_lea.vmem [#allocation0], 68
    %220 = vst.msk [vmem:[%s219] ss:$8 sm:$0xf] %vm218, %v217
    %s221 = scalar_lea.vmem [#allocation0], 68
    %222 = vst.msk [vmem:[%s221] ss:$8 sm:$0xf0] %vm218, %v217
    %s223 = scalar_lea.vmem [#allocation1], 16
    %v224 = vld.sshfl [vmem:[%s223] sm:$0xff pattern:$0xb3a29180]
    %225 = vrot.lane.b32.xlu0 %v224, 64
    %v226 = vpop.permute.xlu0 %225
    %vm227 = vcmask 130048
    %s228 = scalar_lea.vmem [#allocation0], 132
    %229 = vst.msk [vmem:[%s228] ss:$8 sm:$0xf] %vm227, %v226
    %s230 = scalar_lea.vmem [#allocation0], 132
    %231 = vst.msk [vmem:[%s230] ss:$8 sm:$0xf0] %vm227, %v226
    %s232 = scalar_lea.vmem [#allocation1], 20
    %v233 = vld.sshfl [vmem:[%s232] sm:$0xff pattern:$0xb3a29180]
    %234 = vrot.lane.b32.xlu0 %v233, 64
    %v235 = vpop.permute.xlu0 %234
    %vm236 = vcmask 130048
    %s237 = scalar_lea.vmem [#allocation0], 196
    %238 = vst.msk [vmem:[%s237] ss:$8 sm:$0xf] %vm236, %v235
    %s239 = scalar_lea.vmem [#allocation0], 196
    %240 = vst.msk [vmem:[%s239] ss:$8 sm:$0xf0] %vm236, %v235
    %v241 = vld.sshfl [vmem:[#allocation1] sm:$0xff pattern:$0xb3a29180]
    %242 = vrot.lane.b32.xlu0 %v241, 48
    %v243 = vpop.permute.xlu0 %242
    %vm244 = vcmask 130048
    %s245 = scalar_lea.vmem [#allocation0], 5
    %246 = vst.msk [vmem:[%s245] ss:$8 sm:$0xf] %vm244, %v243
    %s247 = scalar_lea.vmem [#allocation0], 5
    %248 = vst.msk [vmem:[%s247] ss:$8 sm:$0xf0] %vm244, %v243
    %s249 = scalar_lea.vmem [#allocation1], 4
    %v250 = vld.sshfl [vmem:[%s249] sm:$0xff pattern:$0xb3a29180]
    %251 = vrot.lane.b32.xlu0 %v250, 48
    %v252 = vpop.permute.xlu0 %251
    %vm253 = vcmask 130048
    %s254 = scalar_lea.vmem [#allocation0], 69
    %255 = vst.msk [vmem:[%s254] ss:$8 sm:$0xf] %vm253, %v252
    %s256 = scalar_lea.vmem [#allocation0], 69
    %257 = vst.msk [vmem:[%s256] ss:$8 sm:$0xf0] %vm253, %v252
    %s258 = scalar_lea.vmem [#allocation1], 16
    %v259 = vld.sshfl [vmem:[%s258] sm:$0xff pattern:$0xb3a29180]
    %260 = vrot.lane.b32.xlu0 %v259, 48
    %v261 = vpop.permute.xlu0 %260
    %vm262 = vcmask 130048
    %s263 = scalar_lea.vmem [#allocation0], 133
    %264 = vst.msk [vmem:[%s263] ss:$8 sm:$0xf] %vm262, %v261
    %s265 = scalar_lea.vmem [#allocation0], 133
    %266 = vst.msk [vmem:[%s265] ss:$8 sm:$0xf0] %vm262, %v261
    %s267 = scalar_lea.vmem [#allocation1], 20
    %v268 = vld.sshfl [vmem:[%s267] sm:$0xff pattern:$0xb3a29180]
    %269 = vrot.lane.b32.xlu0 %v268, 48
    %v270 = vpop.permute.xlu0 %269
    %vm271 = vcmask 130048
    %s272 = scalar_lea.vmem [#allocation0], 197
    %273 = vst.msk [vmem:[%s272] ss:$8 sm:$0xf] %vm271, %v270
    %s274 = scalar_lea.vmem [#allocation0], 197
    %275 = vst.msk [vmem:[%s274] ss:$8 sm:$0xf0] %vm271, %v270
    %v276 = vld.sshfl [vmem:[#allocation1] sm:$0xff pattern:$0xb3a29180]
    %277 = vrot.lane.b32.xlu0 %v276, 32
    %v278 = vpop.permute.xlu0 %277
    %vm279 = vcmask 130048
    %s280 = scalar_lea.vmem [#allocation0], 6
    %281 = vst.msk [vmem:[%s280] ss:$8 sm:$0xf] %vm279, %v278
    %s282 = scalar_lea.vmem [#allocation0], 6
    %283 = vst.msk [vmem:[%s282] ss:$8 sm:$0xf0] %vm279, %v278
    %s284 = scalar_lea.vmem [#allocation1], 4
    %v285 = vld.sshfl [vmem:[%s284] sm:$0xff pattern:$0xb3a29180]
    %286 = vrot.lane.b32.xlu0 %v285, 32
    %v287 = vpop.permute.xlu0 %286
    %vm288 = vcmask 130048
    %s289 = scalar_lea.vmem [#allocation0], 70
    %290 = vst.msk [vmem:[%s289] ss:$8 sm:$0xf] %vm288, %v287
    %s291 = scalar_lea.vmem [#allocation0], 70
    %292 = vst.msk [vmem:[%s291] ss:$8 sm:$0xf0] %vm288, %v287
    %s293 = scalar_lea.vmem [#allocation1], 16
    %v294 = vld.sshfl [vmem:[%s293] sm:$0xff pattern:$0xb3a29180]
    %295 = vrot.lane.b32.xlu0 %v294, 32
    %v296 = vpop.permute.xlu0 %295
    %vm297 = vcmask 130048
    %s298 = scalar_lea.vmem [#allocation0], 134
    %299 = vst.msk [vmem:[%s298] ss:$8 sm:$0xf] %vm297, %v296
    %s300 = scalar_lea.vmem [#allocation0], 134
    %301 = vst.msk [vmem:[%s300] ss:$8 sm:$0xf0] %vm297, %v296
    %s302 = scalar_lea.vmem [#allocation1], 20
    %v303 = vld.sshfl [vmem:[%s302] sm:$0xff pattern:$0xb3a29180]
    %304 = vrot.lane.b32.xlu0 %v303, 32
    %v305 = vpop.permute.xlu0 %304
    %vm306 = vcmask 130048
    %s307 = scalar_lea.vmem [#allocation0], 198
    %308 = vst.msk [vmem:[%s307] ss:$8 sm:$0xf] %vm306, %v305
    %s309 = scalar_lea.vmem [#allocation0], 198
    %310 = vst.msk [vmem:[%s309] ss:$8 sm:$0xf0] %vm306, %v305
    %v311 = vld.sshfl [vmem:[#allocation1] sm:$0xff pattern:$0xb3a29180]
    %312 = vrot.lane.b32.xlu0 %v311, 16
    %v313 = vpop.permute.xlu0 %312
    %vm314 = vcmask 130048
    %s315 = scalar_lea.vmem [#allocation0], 7
    %316 = vst.msk [vmem:[%s315] ss:$8 sm:$0xf] %vm314, %v313
    %s317 = scalar_lea.vmem [#allocation0], 7
    %318 = vst.msk [vmem:[%s317] ss:$8 sm:$0xf0] %vm314, %v313
    %s319 = scalar_lea.vmem [#allocation1], 4
    %v320 = vld.sshfl [vmem:[%s319] sm:$0xff pattern:$0xb3a29180]
    %321 = vrot.lane.b32.xlu0 %v320, 16
    %v322 = vpop.permute.xlu0 %321
    %vm323 = vcmask 130048
    %s324 = scalar_lea.vmem [#allocation0], 71
    %325 = vst.msk [vmem:[%s324] ss:$8 sm:$0xf] %vm323, %v322
    %s326 = scalar_lea.vmem [#allocation0], 71
    %327 = vst.msk [vmem:[%s326] ss:$8 sm:$0xf0] %vm323, %v322
    %s328 = scalar_lea.vmem [#allocation1], 16
    %v329 = vld.sshfl [vmem:[%s328] sm:$0xff pattern:$0xb3a29180]
    %330 = vrot.lane.b32.xlu0 %v329, 16
    %v331 = vpop.permute.xlu0 %330
    %vm332 = vcmask 130048
    %s333 = scalar_lea.vmem [#allocation0], 135
    %334 = vst.msk [vmem:[%s333] ss:$8 sm:$0xf] %vm332, %v331
    %s335 = scalar_lea.vmem [#allocation0], 135
    %336 = vst.msk [vmem:[%s335] ss:$8 sm:$0xf0] %vm332, %v331
    %s337 = scalar_lea.vmem [#allocation1], 20
    %v338 = vld.sshfl [vmem:[%s337] sm:$0xff pattern:$0xb3a29180]
    %339 = vrot.lane.b32.xlu0 %v338, 16
    %v340 = vpop.permute.xlu0 %339
    %vm341 = vcmask 130048
    %s342 = scalar_lea.vmem [#allocation0], 199
    %343 = vst.msk [vmem:[%s342] ss:$8 sm:$0xf] %vm341, %v340
    %s344 = scalar_lea.vmem [#allocation0], 199
    %345 = vst.msk [vmem:[%s344] ss:$8 sm:$0xf0] %vm341, %v340
    %s347 = ssub.s32 256, 1
    %v348 = vld [vmem:[#allocation0] sm:%s347]
    %v349 = vpack.c.bf16 0.0, %v348
    %s351 = ssub.s32 16, 1
    %352 = vst [vmem:[%s1] sm:%s351] %v349
    %s353 = scalar_lea.vmem [#allocation0], 8
    %v354 = vld [vmem:[%s353] sm:%s347]
    %v355 = vpack.c.bf16 0.0, %v354
    %s357 = ssub.s32 16, 1
    %s358 = scalar_lea.vmem %s1, 4
    %359 = vst [vmem:[%s358] sm:%s357] %v355
    %s360 = scalar_lea.vmem [#allocation0], 16
    %v361 = vld [vmem:[%s360] sm:%s347]
    %v362 = vpack.c.bf16 0.0, %v361
    %s364 = ssub.s32 16, 1
    %s365 = scalar_lea.vmem %s1, 8
    %366 = vst [vmem:[%s365] sm:%s364] %v362
    %s367 = scalar_lea.vmem [#allocation0], 24
    %v368 = vld [vmem:[%s367] sm:%s347]
    %v369 = vpack.c.bf16 0.0, %v368
    %s371 = ssub.s32 16, 1
    %s372 = scalar_lea.vmem %s1, 12
    %373 = vst [vmem:[%s372] sm:%s371] %v369
    %s374 = scalar_lea.vmem [#allocation0], 32
    %v375 = vld [vmem:[%s374] sm:%s347]
    %v376 = vpack.c.bf16 0.0, %v375
    %s378 = ssub.s32 16, 1
    %s379 = scalar_lea.vmem %s1, 16
    %380 = vst [vmem:[%s379] sm:%s378] %v376
    %s381 = scalar_lea.vmem [#allocation0], 40
    %v382 = vld [vmem:[%s381] sm:%s347]
    %v383 = vpack.c.bf16 0.0, %v382
    %s385 = ssub.s32 16, 1
    %s386 = scalar_lea.vmem %s1, 20
    %387 = vst [vmem:[%s386] sm:%s385] %v383
    %s388 = scalar_lea.vmem [#allocation0], 48
    %v389 = vld [vmem:[%s388] sm:%s347]
    %v390 = vpack.c.bf16 0.0, %v389
    %s392 = ssub.s32 16, 1
    %s393 = scalar_lea.vmem %s1, 24
    %394 = vst [vmem:[%s393] sm:%s392] %v390
    %s395 = scalar_lea.vmem [#allocation0], 56
    %v396 = vld [vmem:[%s395] sm:%s347]
    %v397 = vpack.c.bf16 0.0, %v396
    %s399 = ssub.s32 16, 1
    %s400 = scalar_lea.vmem %s1, 28
    %401 = vst [vmem:[%s400] sm:%s399] %v397
    %s402 = scalar_lea.vmem [#allocation0], 64
    %v403 = vld [vmem:[%s402] sm:%s347]
    %v404 = vpack.c.bf16 0.0, %v403
    %s406 = ssub.s32 16, 1
    %s407 = scalar_lea.vmem %s1, 32
    %408 = vst [vmem:[%s407] sm:%s406] %v404
    %s409 = scalar_lea.vmem [#allocation0], 72
    %v410 = vld [vmem:[%s409] sm:%s347]
    %v411 = vpack.c.bf16 0.0, %v410
    %s413 = ssub.s32 16, 1
    %s414 = scalar_lea.vmem %s1, 36
    %415 = vst [vmem:[%s414] sm:%s413] %v411
    %s416 = scalar_lea.vmem [#allocation0], 80
    %v417 = vld [vmem:[%s416] sm:%s347]
    %v418 = vpack.c.bf16 0.0, %v417
    %s420 = ssub.s32 16, 1
    %s421 = scalar_lea.vmem %s1, 40
    %422 = vst [vmem:[%s421] sm:%s420] %v418
    %s423 = scalar_lea.vmem [#allocation0], 88
    %v424 = vld [vmem:[%s423] sm:%s347]
    %v425 = vpack.c.bf16 0.0, %v424
    %s427 = ssub.s32 16, 1
    %s428 = scalar_lea.vmem %s1, 44
    %429 = vst [vmem:[%s428] sm:%s427] %v425
    %s430 = scalar_lea.vmem [#allocation0], 96
    %v431 = vld [vmem:[%s430] sm:%s347]
    %v432 = vpack.c.bf16 0.0, %v431
    %s434 = ssub.s32 16, 1
    %s435 = scalar_lea.vmem %s1, 48
    %436 = vst [vmem:[%s435] sm:%s434] %v432
    %s437 = scalar_lea.vmem [#allocation0], 104
    %v438 = vld [vmem:[%s437] sm:%s347]
    %v439 = vpack.c.bf16 0.0, %v438
    %s441 = ssub.s32 16, 1
    %s442 = scalar_lea.vmem %s1, 52
    %443 = vst [vmem:[%s442] sm:%s441] %v439
    %s444 = scalar_lea.vmem [#allocation0], 112
    %v445 = vld [vmem:[%s444] sm:%s347]
    %v446 = vpack.c.bf16 0.0, %v445
    %s448 = ssub.s32 16, 1
    %s449 = scalar_lea.vmem %s1, 56
    %450 = vst [vmem:[%s449] sm:%s448] %v446
    %s451 = scalar_lea.vmem [#allocation0], 120
    %v452 = vld [vmem:[%s451] sm:%s347]
    %v453 = vpack.c.bf16 0.0, %v452
    %s455 = ssub.s32 16, 1
    %s456 = scalar_lea.vmem %s1, 60
    %457 = vst [vmem:[%s456] sm:%s455] %v453
    %s458 = scalar_lea.vmem [#allocation0], 128
    %v459 = vld [vmem:[%s458] sm:%s347]
    %v460 = vpack.c.bf16 0.0, %v459
    %s462 = ssub.s32 16, 1
    %s463 = scalar_lea.vmem %s1, 64
    %464 = vst [vmem:[%s463] sm:%s462] %v460
    %s465 = scalar_lea.vmem [#allocation0], 136
    %v466 = vld [vmem:[%s465] sm:%s347]
    %v467 = vpack.c.bf16 0.0, %v466
    %s469 = ssub.s32 16, 1
    %s470 = scalar_lea.vmem %s1, 68
    %471 = vst [vmem:[%s470] sm:%s469] %v467
    %s472 = scalar_lea.vmem [#allocation0], 144
    %v473 = vld [vmem:[%s472] sm:%s347]
    %v474 = vpack.c.bf16 0.0, %v473
    %s476 = ssub.s32 16, 1
    %s477 = scalar_lea.vmem %s1, 72
    %478 = vst [vmem:[%s477] sm:%s476] %v474
    %s479 = scalar_lea.vmem [#allocation0], 152
    %v480 = vld [vmem:[%s479] sm:%s347]
    %v481 = vpack.c.bf16 0.0, %v480
    %s483 = ssub.s32 16, 1
    %s484 = scalar_lea.vmem %s1, 76
    %485 = vst [vmem:[%s484] sm:%s483] %v481
    %s486 = scalar_lea.vmem [#allocation0], 160
    %v487 = vld [vmem:[%s486] sm:%s347]
    %v488 = vpack.c.bf16 0.0, %v487
    %s490 = ssub.s32 16, 1
    %s491 = scalar_lea.vmem %s1, 80
    %492 = vst [vmem:[%s491] sm:%s490] %v488
    %s493 = scalar_lea.vmem [#allocation0], 168
    %v494 = vld [vmem:[%s493] sm:%s347]
    %v495 = vpack.c.bf16 0.0, %v494
    %s497 = ssub.s32 16, 1
    %s498 = scalar_lea.vmem %s1, 84
    %499 = vst [vmem:[%s498] sm:%s497] %v495
    %s500 = scalar_lea.vmem [#allocation0], 176
    %v501 = vld [vmem:[%s500] sm:%s347]
    %v502 = vpack.c.bf16 0.0, %v501
    %s504 = ssub.s32 16, 1
    %s505 = scalar_lea.vmem %s1, 88
    %506 = vst [vmem:[%s505] sm:%s504] %v502
    %s507 = scalar_lea.vmem [#allocation0], 184
    %v508 = vld [vmem:[%s507] sm:%s347]
    %v509 = vpack.c.bf16 0.0, %v508
    %s511 = ssub.s32 16, 1
    %s512 = scalar_lea.vmem %s1, 92
    %513 = vst [vmem:[%s512] sm:%s511] %v509
    %s514 = scalar_lea.vmem [#allocation0], 192
    %v515 = vld [vmem:[%s514] sm:%s347]
    %v516 = vpack.c.bf16 0.0, %v515
    %s518 = ssub.s32 16, 1
    %s519 = scalar_lea.vmem %s1, 96
    %520 = vst [vmem:[%s519] sm:%s518] %v516
    %s521 = scalar_lea.vmem [#allocation0], 200
    %v522 = vld [vmem:[%s521] sm:%s347]
    %v523 = vpack.c.bf16 0.0, %v522
    %s525 = ssub.s32 16, 1
    %s526 = scalar_lea.vmem %s1, 100
    %527 = vst [vmem:[%s526] sm:%s525] %v523
    %s528 = scalar_lea.vmem [#allocation0], 208
    %v529 = vld [vmem:[%s528] sm:%s347]
    %v530 = vpack.c.bf16 0.0, %v529
    %s532 = ssub.s32 16, 1
    %s533 = scalar_lea.vmem %s1, 104
    %534 = vst [vmem:[%s533] sm:%s532] %v530
    %s535 = scalar_lea.vmem [#allocation0], 216
    %v536 = vld [vmem:[%s535] sm:%s347]
    %v537 = vpack.c.bf16 0.0, %v536
    %s539 = ssub.s32 16, 1
    %s540 = scalar_lea.vmem %s1, 108
    %541 = vst [vmem:[%s540] sm:%s539] %v537
    %s542 = scalar_lea.vmem [#allocation0], 224
    %v543 = vld [vmem:[%s542] sm:%s347]
    %v544 = vpack.c.bf16 0.0, %v543
    %s546 = ssub.s32 16, 1
    %s547 = scalar_lea.vmem %s1, 112
    %548 = vst [vmem:[%s547] sm:%s546] %v544
    %s549 = scalar_lea.vmem [#allocation0], 232
    %v550 = vld [vmem:[%s549] sm:%s347]
    %v551 = vpack.c.bf16 0.0, %v550
    %s553 = ssub.s32 16, 1
    %s554 = scalar_lea.vmem %s1, 116
    %555 = vst [vmem:[%s554] sm:%s553] %v551
    %s556 = scalar_lea.vmem [#allocation0], 240
    %v557 = vld [vmem:[%s556] sm:%s347]
    %v558 = vpack.c.bf16 0.0, %v557
    %s560 = ssub.s32 16, 1
    %s561 = scalar_lea.vmem %s1, 120
    %562 = vst [vmem:[%s561] sm:%s560] %v558
    %s563 = scalar_lea.vmem [#allocation0], 248
    %v564 = vld [vmem:[%s563] sm:%s347]
    %v565 = vpack.c.bf16 0.0, %v564
    %s567 = ssub.s32 16, 1
    %s568 = scalar_lea.vmem %s1, 124
    %569 = vst [vmem:[%s568] sm:%s567] %v565

// kernel: decoder_bn_forward.6
$region0: #{decoder_bn_forward.6}
  #allocation0 [shape = 'u32[]', space=smem, size = 0x4, offset = 0x4, fixed_abs, tag = 'smem constant byte address 0x4 - core index']
  #allocation1 [shape = 'u32[72,128]{1,0:T(1,128)}', space=vmem, size = 0x9000, scoped, tag = 'internal scratch']
  #allocation2 [shape = 'f32[16,256]{1,0:T(8,128)}', space=vmem, size = 0x4000, scoped, tag = 'scratch operand']
  %s0 = inlined_call_operand.vmem [shape: bf16[1,16,32], index: 0, kind: input, shape index: {}]
  %s1 = inlined_call_operand.hbm [shape: bf16[1,32,256], index: 1, kind: input, shape index: {}]
  %s2 = inlined_call_operand.vmem [shape: bf16[1,16,256], index: 2, kind: output, shape index: {}]
  %s3 = sld [smem:[#allocation0]]
  $region30: #{decoder_bn_forward.6} parent=0
    _
  %s5 = ssub.s32 1, %s3
  %s6 = scalar_select 0, %s5, %s3
  $region1: #{decoder_bn_forward.6} parent=0
    #allocation3 [shape = 'u8[16384]{0}', space=vmem, size = 0x4000, scoped, tag = 'input window, operand 1, single buffered']
    #allocation4 [shape = 's32[1]{0}', space=sflag, size = 0x4, scoped, tag = 'scoped memory for decoder_bn_forward.6']
    %7 = vsyncpa [#allocation4], 0
    // Predicated region
    $region2: #{decoder_bn_forward.6} parent=1 // pred_check
      _
    $region3: #{decoder_bn_forward.6} parent=1 // pred_check_branch
      %9 = sbr.rel (0) target = $region5
    $region4: #{decoder_bn_forward.6} parent=1 // pred_region
      _
    $region5: #{decoder_bn_forward.6} parent=1 // pred_fallthru
      _
    // Predicated region
    $region6: #{decoder_bn_forward.6} parent=1 // pred_check
      _
    $region7: #{decoder_bn_forward.6} parent=1 // pred_check_branch
      %11 = sbr.rel (0) target = $region9
    $region8: #{decoder_bn_forward.6} parent=1 // pred_region
      %13 = vsyncadd [#allocation4], 0
      %s14 = sshll.u32 %s1, 4
      %s15 = int_to_ptr.hbm [resolvable:$true] %s14
      %s16 = sshll.u32 [#allocation3], 4
      %s17 = int_to_ptr.vmem [resolvable:$true] %s16
      %22 = dma.hbm_to_vmem [thread:$0]  %s15, 512, %s17, [#allocation4], 128, 128, 8
    $region9: #{decoder_bn_forward.6} parent=1 // pred_fallthru
      _
    // Predicated region
    $region10: #{decoder_bn_forward.6} parent=1 // pred_check
      _
    $region11: #{decoder_bn_forward.6} parent=1 // pred_check_branch
      %24 = sbr.rel (0) target = $region13
    $region12: #{decoder_bn_forward.6} parent=1 // pred_region
      %26 = dma.done [#allocation4], 512
    $region13: #{decoder_bn_forward.6} parent=1 // pred_fallthru
      _
    %p28 = scmp.eq.s32.totalorder 0, 0
    // Predicated region
    $region14: #{decoder_bn_forward.6} parent=1 // pred_check
      %p29 = pneg %p28
    $region15: #{decoder_bn_forward.6} parent=1 // pred_check_branch
      %31 = sbr.rel (%p29) target = $region17
    $region16: #{decoder_bn_forward.6} parent=1 // pred_region
      %32 = vst [vmem:[#allocation2] sm:$0xff] 0.0
      %33 = vst [vmem:[#allocation2 + $0x8] sm:$0xff] 0.0
      %34 = vst [vmem:[#allocation2 + $0x10] sm:$0xff] 0.0
      %35 = vst [vmem:[#allocation2 + $0x18] sm:$0xff] 0.0
    $region17: #{decoder_bn_forward.6} parent=1 // pred_fallthru
      _
    %v36 = vld [vmem:[#allocation2] sm:$0xff]
    %v37 = vld [vmem:[#allocation2 + $0x8] sm:$0xff]
    %v38 = vld [vmem:[#allocation2 + $0x10] sm:$0xff]
    %v39 = vld [vmem:[#allocation2 + $0x18] sm:$0xff]
    %v40 = vld [vmem:[%s0] sm:$0xf]
    %v41 = vld [vmem:[%s0 + $0x4] sm:$0xf]
    %v42 = vld [vmem:[#allocation3] sm:$0xff]
    %v43 = vld [vmem:[#allocation3 + $0x8] sm:$0xff]
    %v44 = vld [vmem:[#allocation3 + $0x10] sm:$0xff]
    %v45 = vld [vmem:[#allocation3 + $0x18] sm:$0xff]
    %v48 = vunpack.c.l.b16 %v40
    %v49 = vunpack.c.l.b16 %v41
    %v50 = vpack.c.b16 %v49, %v48
    %v55 = vunpack.c.l.b16 %v42
    %v56 = vunpack.c.h.b16 %v42
    %v57 = vunpack.c.l.b16 %v43
    %v58 = vunpack.c.h.b16 %v43
    %v59 = vunpack.c.l.b16 %v44
    %v60 = vunpack.c.h.b16 %v44
    %v61 = vunpack.c.l.b16 %v45
    %v62 = vunpack.c.h.b16 %v45
    %v63 = vpack.c.b16 %v57, %v55
    %v64 = vpack.c.b16 %v58, %v56
    %v65 = vpack.c.b16 %v61, %v59
    %v66 = vpack.c.b16 %v62, %v60
    %vm71 = vcmask 261120
    %v73 = vsel %vm71, %v50, 0
    %75 = vmatpush.bf16.msra.mxu0 0
    %76 = vmatpush.bf16.msra.mxu0 0
    %77 = vmatpush.bf16.msra.mxu0 0
    %78 = vmatpush.bf16.msra.mxu0 0
    %79 = vmatpush.bf16.msra.mxu0 0
    %80 = vmatpush.bf16.msra.mxu0 0
    %81 = vmatpush.bf16.msra.mxu0 %v65
    %82 = vmatpush.bf16.msra.mxu0 %v63
    %83 = vmatmul.bf16.gmra.mxu0 %v73
    %v84 = vpop.f32.mrf.mxu0
    %v85 = vadd.f32 0.0, %v84
    %v86 = vpop.f32.mrf.mxu0
    %v87 = vadd.f32 0.0, %v86
    %88 = vdwg.mxu0
    %89 = vmatpush.bf16.msra.mxu0 0
    %90 = vmatpush.bf16.msra.mxu0 0
    %91 = vmatpush.bf16.msra.mxu0 0
    %92 = vmatpush.bf16.msra.mxu0 0
    %93 = vmatpush.bf16.msra.mxu0 0
    %94 = vmatpush.bf16.msra.mxu0 0
    %95 = vmatpush.bf16.msra.mxu0 %v66
    %96 = vmatpush.bf16.msra.mxu0 %v64
    %97 = vmatmul.bf16.gmra.mxu0 %v73
    %v98 = vpop.f32.mrf.mxu0
    %v99 = vadd.f32 0.0, %v98
    %v100 = vpop.f32.mrf.mxu0
    %v101 = vadd.f32 0.0, %v100
    %102 = vdwg.mxu0
    %v103 = vadd.f32 %v36, %v85
    %v104 = vadd.f32 %v37, %v99
    %v105 = vadd.f32 %v38, %v87
    %v106 = vadd.f32 %v39, %v101
    %107 = vst [vmem:[#allocation2] sm:$0xff] %v103
    %108 = vst [vmem:[#allocation2 + $0x8] sm:$0xff] %v104
    %109 = vst [vmem:[#allocation2 + $0x10] sm:$0xff] %v105
    %110 = vst [vmem:[#allocation2 + $0x18] sm:$0xff] %v106
    // Predicated region
    $region18: #{decoder_bn_forward.6} parent=1 // pred_check
      %p111 = pneg %p28
    $region19: #{decoder_bn_forward.6} parent=1 // pred_check_branch
      %113 = sbr.rel (%p111) target = $region21
    $region20: #{decoder_bn_forward.6} parent=1 // pred_region
      %v114 = vld [vmem:[#allocation2] sm:$0xff]
      %v115 = vld [vmem:[#allocation2 + $0x8] sm:$0xff]
      %v116 = vld [vmem:[#allocation2 + $0x10] sm:$0xff]
      %v117 = vld [vmem:[#allocation2 + $0x18] sm:$0xff]
      %v118 = vpack.c.bf16 %v115, %v114
      %v119 = vpack.c.bf16 %v117, %v116
      %120 = vst [vmem:[%s2] sm:$0xff] %v118
      %121 = vst [vmem:[%s2 + $0x8] sm:$0xff] %v119
    $region21: #{decoder_bn_forward.6} parent=1 // pred_fallthru
      _
    // Predicated region
    $region22: #{decoder_bn_forward.6} parent=1 // pred_check
      _
    $region23: #{decoder_bn_forward.6} parent=1 // pred_check_branch
      %123 = sbr.rel (0) target = $region25
    $region24: #{decoder_bn_forward.6} parent=1 // pred_region
      _
    $region25: #{decoder_bn_forward.6} parent=1 // pred_fallthru
      _
    // Predicated region
    $region26: #{decoder_bn_forward.6} parent=1 // pred_check
      _
    $region27: #{decoder_bn_forward.6} parent=1 // pred_check_branch
      %125 = sbr.rel (0) target = $region29
    $region28: #{decoder_bn_forward.6} parent=1 // pred_region
      _
    $region29: #{decoder_bn_forward.6} parent=1 // pred_fallthru
      _
    %126 = vsyncpa [#allocation4], 1

// kernel: decoder_bn_forward.7
$region0: #{decoder_bn_forward.7}
  #allocation0 [shape = 'u32[]', space=smem, size = 0x4, offset = 0x4, fixed_abs, tag = 'smem constant byte address 0x4 - core index']
  #allocation1 [shape = 'u32[72,128]{1,0:T(1,128)}', space=vmem, size = 0x9000, scoped, tag = 'internal scratch']
  %s0 = inlined_call_operand.vmem [shape: bf16[256,16], index: 0, kind: input, shape index: {}]
  %s1 = inlined_call_operand.vmem [shape: f32[8,16], index: 1, kind: output, shape index: {}]
  %s2 = sld [smem:[#allocation0]]
  $region14: #{decoder_bn_forward.7} parent=0
    _
  %s4 = ssub.s32 1, %s2
  %s5 = scalar_select 0, %s4, %s2
  // Predicated region
  $region2: #{decoder_bn_forward.7} parent=0 // pred_check
    _
  $region3: #{decoder_bn_forward.7} parent=0 // pred_check_branch
    %7 = sbr.rel (0) target = $region5
  $region4: #{decoder_bn_forward.7} parent=0 // pred_region
    _
  $region5: #{decoder_bn_forward.7} parent=0 // pred_fallthru
    _
  %v8 = vld [vmem:[%s0] sm:$0xf]
  %v9 = vld [vmem:[%s0 + $0x4] sm:$0xf]
  %v10 = vld [vmem:[%s0 + $0x8] sm:$0xf]
  %v11 = vld [vmem:[%s0 + $0xc] sm:$0xf]
  %v12 = vld [vmem:[%s0 + $0x10] sm:$0xf]
  %v13 = vld [vmem:[%s0 + $0x14] sm:$0xf]
  %v14 = vld [vmem:[%s0 + $0x18] sm:$0xf]
  %v15 = vld [vmem:[%s0 + $0x1c] sm:$0xf]
  %v16 = vld [vmem:[%s0 + $0x20] sm:$0xf]
  %v17 = vld [vmem:[%s0 + $0x24] sm:$0xf]
  %v18 = vld [vmem:[%s0 + $0x28] sm:$0xf]
  %v19 = vld [vmem:[%s0 + $0x2c] sm:$0xf]
  %v20 = vld [vmem:[%s0 + $0x30] sm:$0xf]
  %v21 = vld [vmem:[%s0 + $0x34] sm:$0xf]
  %v22 = vld [vmem:[%s0 + $0x38] sm:$0xf]
  %v23 = vld [vmem:[%s0 + $0x3c] sm:$0xf]
  %v24 = vld [vmem:[%s0 + $0x40] sm:$0xf]
  %v25 = vld [vmem:[%s0 + $0x44] sm:$0xf]
  %v26 = vld [vmem:[%s0 + $0x48] sm:$0xf]
  %v27 = vld [vmem:[%s0 + $0x4c] sm:$0xf]
  %v28 = vld [vmem:[%s0 + $0x50] sm:$0xf]
  %v29 = vld [vmem:[%s0 + $0x54] sm:$0xf]
  %v30 = vld [vmem:[%s0 + $0x58] sm:$0xf]
  %v31 = vld [vmem:[%s0 + $0x5c] sm:$0xf]
  %v32 = vld [vmem:[%s0 + $0x60] sm:$0xf]
  %v33 = vld [vmem:[%s0 + $0x64] sm:$0xf]
  %v34 = vld [vmem:[%s0 + $0x68] sm:$0xf]
  %v35 = vld [vmem:[%s0 + $0x6c] sm:$0xf]
  %v36 = vld [vmem:[%s0 + $0x70] sm:$0xf]
  %v37 = vld [vmem:[%s0 + $0x74] sm:$0xf]
  %v38 = vld [vmem:[%s0 + $0x78] sm:$0xf]
  %v39 = vld [vmem:[%s0 + $0x7c] sm:$0xf]
  %v40 = vunpack.c.l.bf16 %v8
  %v41 = vunpack.c.l.bf16 %v9
  %v42 = vunpack.c.l.bf16 %v10
  %v43 = vunpack.c.l.bf16 %v11
  %v44 = vunpack.c.l.bf16 %v12
  %v45 = vunpack.c.l.bf16 %v13
  %v46 = vunpack.c.l.bf16 %v14
  %v47 = vunpack.c.l.bf16 %v15
  %v48 = vunpack.c.l.bf16 %v16
  %v49 = vunpack.c.l.bf16 %v17
  %v50 = vunpack.c.l.bf16 %v18
  %v51 = vunpack.c.l.bf16 %v19
  %v52 = vunpack.c.l.bf16 %v20
  %v53 = vunpack.c.l.bf16 %v21
  %v54 = vunpack.c.l.bf16 %v22
  %v55 = vunpack.c.l.bf16 %v23
  %v56 = vunpack.c.l.bf16 %v24
  %v57 = vunpack.c.l.bf16 %v25
  %v58 = vunpack.c.l.bf16 %v26
  %v59 = vunpack.c.l.bf16 %v27
  %v60 = vunpack.c.l.bf16 %v28
  %v61 = vunpack.c.l.bf16 %v29
  %v62 = vunpack.c.l.bf16 %v30
  %v63 = vunpack.c.l.bf16 %v31
  %v64 = vunpack.c.l.bf16 %v32
  %v65 = vunpack.c.l.bf16 %v33
  %v66 = vunpack.c.l.bf16 %v34
  %v67 = vunpack.c.l.bf16 %v35
  %v68 = vunpack.c.l.bf16 %v36
  %v69 = vunpack.c.l.bf16 %v37
  %v70 = vunpack.c.l.bf16 %v38
  %v71 = vunpack.c.l.bf16 %v39
  %vm72 = vcmask 130048
  %v73 = vsel %vm72, %v40, 0.0
  %v74 = vsel %vm72, %v41, 0.0
  %v75 = vadd.f32 %v73, %v74
  %v76 = vsel %vm72, %v42, 0.0
  %v77 = vadd.f32 %v75, %v76
  %v78 = vsel %vm72, %v43, 0.0
  %v79 = vadd.f32 %v77, %v78
  %v80 = vsel %vm72, %v44, 0.0
  %v81 = vadd.f32 %v79, %v80
  %v82 = vsel %vm72, %v45, 0.0
  %v83 = vadd.f32 %v81, %v82
  %v84 = vsel %vm72, %v46, 0.0
  %v85 = vadd.f32 %v83, %v84
  %v86 = vsel %vm72, %v47, 0.0
  %v87 = vadd.f32 %v85, %v86
  %v88 = vsel %vm72, %v48, 0.0
  %v89 = vadd.f32 %v87, %v88
  %v90 = vsel %vm72, %v49, 0.0
  %v91 = vadd.f32 %v89, %v90
  %v92 = vsel %vm72, %v50, 0.0
  %v93 = vadd.f32 %v91, %v92
  %v94 = vsel %vm72, %v51, 0.0
  %v95 = vadd.f32 %v93, %v94
  %v96 = vsel %vm72, %v52, 0.0
  %v97 = vadd.f32 %v95, %v96
  %v98 = vsel %vm72, %v53, 0.0
  %v99 = vadd.f32 %v97, %v98
  %v100 = vsel %vm72, %v54, 0.0
  %v101 = vadd.f32 %v99, %v100
  %v102 = vsel %vm72, %v55, 0.0
  %v103 = vadd.f32 %v101, %v102
  %v104 = vsel %vm72, %v56, 0.0
  %v105 = vadd.f32 %v103, %v104
  %v106 = vsel %vm72, %v57, 0.0
  %v107 = vadd.f32 %v105, %v106
  %v108 = vsel %vm72, %v58, 0.0
  %v109 = vadd.f32 %v107, %v108
  %v110 = vsel %vm72, %v59, 0.0
  %v111 = vadd.f32 %v109, %v110
  %v112 = vsel %vm72, %v60, 0.0
  %v113 = vadd.f32 %v111, %v112
  %v114 = vsel %vm72, %v61, 0.0
  %v115 = vadd.f32 %v113, %v114
  %v116 = vsel %vm72, %v62, 0.0
  %v117 = vadd.f32 %v115, %v116
  %v118 = vsel %vm72, %v63, 0.0
  %v119 = vadd.f32 %v117, %v118
  %v120 = vsel %vm72, %v64, 0.0
  %v121 = vadd.f32 %v119, %v120
  %v122 = vsel %vm72, %v65, 0.0
  %v123 = vadd.f32 %v121, %v122
  %v124 = vsel %vm72, %v66, 0.0
  %v125 = vadd.f32 %v123, %v124
  %v126 = vsel %vm72, %v67, 0.0
  %v127 = vadd.f32 %v125, %v126
  %v128 = vsel %vm72, %v68, 0.0
  %v129 = vadd.f32 %v127, %v128
  %v130 = vsel %vm72, %v69, 0.0
  %v131 = vadd.f32 %v129, %v130
  %v132 = vsel %vm72, %v70, 0.0
  %v133 = vadd.f32 %v131, %v132
  %v134 = vsel %vm72, %v71, 0.0
  %v135 = vadd.f32 %v133, %v134
  %v136 = vrot.slane %v135, 4
  %v137 = vadd.f32 %v135, %v136
  %v138 = vrot.slane %v137, 2
  %v139 = vadd.f32 %v137, %v138
  %v140 = vrot.slane %v139, 1
  %v141 = vadd.f32 %v139, %v140
  %v142 = vmul.f32 %v40, %v40
  %v143 = vmul.f32 %v41, %v41
  %v144 = vmul.f32 %v42, %v42
  %v145 = vmul.f32 %v43, %v43
  %v146 = vmul.f32 %v44, %v44
  %v147 = vmul.f32 %v45, %v45
  %v148 = vmul.f32 %v46, %v46
  %v149 = vmul.f32 %v47, %v47
  %v150 = vmul.f32 %v48, %v48
  %v151 = vmul.f32 %v49, %v49
  %v152 = vmul.f32 %v50, %v50
  %v153 = vmul.f32 %v51, %v51
  %v154 = vmul.f32 %v52, %v52
  %v155 = vmul.f32 %v53, %v53
  %v156 = vmul.f32 %v54, %v54
  %v157 = vmul.f32 %v55, %v55
  %v158 = vmul.f32 %v56, %v56
  %v159 = vmul.f32 %v57, %v57
  %v160 = vmul.f32 %v58, %v58
  %v161 = vmul.f32 %v59, %v59
  %v162 = vmul.f32 %v60, %v60
  %v163 = vmul.f32 %v61, %v61
  %v164 = vmul.f32 %v62, %v62
  %v165 = vmul.f32 %v63, %v63
  %v166 = vmul.f32 %v64, %v64
  %v167 = vmul.f32 %v65, %v65
  %v168 = vmul.f32 %v66, %v66
  %v169 = vmul.f32 %v67, %v67
  %v170 = vmul.f32 %v68, %v68
  %v171 = vmul.f32 %v69, %v69
  %v172 = vmul.f32 %v70, %v70
  %v173 = vmul.f32 %v71, %v71
  %v174 = vsel %vm72, %v142, 0.0
  %v175 = vsel %vm72, %v143, 0.0
  %v176 = vadd.f32 %v174, %v175
  %v177 = vsel %vm72, %v144, 0.0
  %v178 = vadd.f32 %v176, %v177
  %v179 = vsel %vm72, %v145, 0.0
  %v180 = vadd.f32 %v178, %v179
  %v181 = vsel %vm72, %v146, 0.0
  %v182 = vadd.f32 %v180, %v181
  %v183 = vsel %vm72, %v147, 0.0
  %v184 = vadd.f32 %v182, %v183
  %v185 = vsel %vm72, %v148, 0.0
  %v186 = vadd.f32 %v184, %v185
  %v187 = vsel %vm72, %v149, 0.0
  %v188 = vadd.f32 %v186, %v187
  %v189 = vsel %vm72, %v150, 0.0
  %v190 = vadd.f32 %v188, %v189
  %v191 = vsel %vm72, %v151, 0.0
  %v192 = vadd.f32 %v190, %v191
  %v193 = vsel %vm72, %v152, 0.0
  %v194 = vadd.f32 %v192, %v193
  %v195 = vsel %vm72, %v153, 0.0
  %v196 = vadd.f32 %v194, %v195
  %v197 = vsel %vm72, %v154, 0.0
  %v198 = vadd.f32 %v196, %v197
  %v199 = vsel %vm72, %v155, 0.0
  %v200 = vadd.f32 %v198, %v199
  %v201 = vsel %vm72, %v156, 0.0
  %v202 = vadd.f32 %v200, %v201
  %v203 = vsel %vm72, %v157, 0.0
  %v204 = vadd.f32 %v202, %v203
  %v205 = vsel %vm72, %v158, 0.0
  %v206 = vadd.f32 %v204, %v205
  %v207 = vsel %vm72, %v159, 0.0
  %v208 = vadd.f32 %v206, %v207
  %v209 = vsel %vm72, %v160, 0.0
  %v210 = vadd.f32 %v208, %v209
  %v211 = vsel %vm72, %v161, 0.0
  %v212 = vadd.f32 %v210, %v211
  %v213 = vsel %vm72, %v162, 0.0
  %v214 = vadd.f32 %v212, %v213
  %v215 = vsel %vm72, %v163, 0.0
  %v216 = vadd.f32 %v214, %v215
  %v217 = vsel %vm72, %v164, 0.0
  %v218 = vadd.f32 %v216, %v217
  %v219 = vsel %vm72, %v165, 0.0
  %v220 = vadd.f32 %v218, %v219
  %v221 = vsel %vm72, %v166, 0.0
  %v222 = vadd.f32 %v220, %v221
  %v223 = vsel %vm72, %v167, 0.0
  %v224 = vadd.f32 %v222, %v223
  %v225 = vsel %vm72, %v168, 0.0
  %v226 = vadd.f32 %v224, %v225
  %v227 = vsel %vm72, %v169, 0.0
  %v228 = vadd.f32 %v226, %v227
  %v229 = vsel %vm72, %v170, 0.0
  %v230 = vadd.f32 %v228, %v229
  %v231 = vsel %vm72, %v171, 0.0
  %v232 = vadd.f32 %v230, %v231
  %v233 = vsel %vm72, %v172, 0.0
  %v234 = vadd.f32 %v232, %v233
  %v235 = vsel %vm72, %v173, 0.0
  %v236 = vadd.f32 %v234, %v235
  %v237 = vrot.slane %v236, 4
  %v238 = vadd.f32 %v236, %v237
  %v239 = vrot.slane %v238, 2
  %v240 = vadd.f32 %v238, %v239
  %v241 = vrot.slane %v240, 1
  %v242 = vadd.f32 %v240, %v241
  %vm243 = vcmask 1040384
  %v244 = vsel %vm243, %v141, %v242
  %vm245 = vcmask 1041408
  %v246 = vsel %vm245, %v244, 0.0
  %247 = vst.msk [vmem:[%s1] sm:$0xff] %vm72, %v246
  // Predicated region
  $region6: #{decoder_bn_forward.7} parent=0 // pred_check
    _
  $region7: #{decoder_bn_forward.7} parent=0 // pred_check_branch
    %249 = sbr.rel (0) target = $region9
  $region8: #{decoder_bn_forward.7} parent=0 // pred_region
    _
  $region9: #{decoder_bn_forward.7} parent=0 // pred_fallthru
    _
  // Predicated region
  $region10: #{decoder_bn_forward.7} parent=0 // pred_check
    _
  $region11: #{decoder_bn_forward.7} parent=0 // pred_check_branch
    %251 = sbr.rel (0) target = $region13
  $region12: #{decoder_bn_forward.7} parent=0 // pred_region
    _
  $region13: #{decoder_bn_forward.7} parent=0 // pred_fallthru
    _

// kernel: decoder_bn_forward.8
$region0: #{decoder_bn_forward.8}
  #allocation0 [shape = 'u32[]', space=smem, size = 0x4, offset = 0x4, fixed_abs, tag = 'smem constant byte address 0x4 - core index']
  #allocation1 [shape = 'u32[72,128]{1,0:T(1,128)}', space=vmem, size = 0x9000, scoped, tag = 'internal scratch']
  %s0 = inlined_call_operand.vmem [shape: bf16[256,16], index: 0, kind: input, shape index: {}]
  %s1 = inlined_call_operand.vmem [shape: f32[1,16], index: 1, kind: input, shape index: {}]
  %s2 = inlined_call_operand.vmem [shape: f32[1,16], index: 2, kind: input, shape index: {}]
  %s3 = inlined_call_operand.vmem [shape: bf16[256,16], index: 3, kind: output, shape index: {}]
  %s4 = sld [smem:[#allocation0]]
  $region22: #{decoder_bn_forward.8} parent=0
    _
  %s6 = ssub.s32 1, %s4
  %s7 = scalar_select 0, %s6, %s4
  // Predicated region
  $region2: #{decoder_bn_forward.8} parent=0 // pred_check
    _
  $region3: #{decoder_bn_forward.8} parent=0 // pred_check_branch
    %9 = sbr.rel (0) target = $region5
  $region4: #{decoder_bn_forward.8} parent=0 // pred_region
    _
  $region5: #{decoder_bn_forward.8} parent=0 // pred_fallthru
    _
  // Predicated region
  $region6: #{decoder_bn_forward.8} parent=0 // pred_check
    _
  $region7: #{decoder_bn_forward.8} parent=0 // pred_check_branch
    %11 = sbr.rel (0) target = $region9
  $region8: #{decoder_bn_forward.8} parent=0 // pred_region
    _
  $region9: #{decoder_bn_forward.8} parent=0 // pred_fallthru
    _
  // Predicated region
  $region10: #{decoder_bn_forward.8} parent=0 // pred_check
    _
  $region11: #{decoder_bn_forward.8} parent=0 // pred_check_branch
    %13 = sbr.rel (0) target = $region13
  $region12: #{decoder_bn_forward.8} parent=0 // pred_region
    _
  $region13: #{decoder_bn_forward.8} parent=0 // pred_fallthru
    _
  %v14 = vld [vmem:[%s0] sm:$0xf]
  %v15 = vld [vmem:[%s0 + $0x4] sm:$0xf]
  %v16 = vld [vmem:[%s0 + $0x8] sm:$0xf]
  %v17 = vld [vmem:[%s0 + $0xc] sm:$0xf]
  %v18 = vld [vmem:[%s0 + $0x10] sm:$0xf]
  %v19 = vld [vmem:[%s0 + $0x14] sm:$0xf]
  %v20 = vld [vmem:[%s0 + $0x18] sm:$0xf]
  %v21 = vld [vmem:[%s0 + $0x1c] sm:$0xf]
  %v22 = vld [vmem:[%s0 + $0x20] sm:$0xf]
  %v23 = vld [vmem:[%s0 + $0x24] sm:$0xf]
  %v24 = vld [vmem:[%s0 + $0x28] sm:$0xf]
  %v25 = vld [vmem:[%s0 + $0x2c] sm:$0xf]
  %v26 = vld [vmem:[%s0 + $0x30] sm:$0xf]
  %v27 = vld [vmem:[%s0 + $0x34] sm:$0xf]
  %v28 = vld [vmem:[%s0 + $0x38] sm:$0xf]
  %v29 = vld [vmem:[%s0 + $0x3c] sm:$0xf]
  %v30 = vld [vmem:[%s0 + $0x40] sm:$0xf]
  %v31 = vld [vmem:[%s0 + $0x44] sm:$0xf]
  %v32 = vld [vmem:[%s0 + $0x48] sm:$0xf]
  %v33 = vld [vmem:[%s0 + $0x4c] sm:$0xf]
  %v34 = vld [vmem:[%s0 + $0x50] sm:$0xf]
  %v35 = vld [vmem:[%s0 + $0x54] sm:$0xf]
  %v36 = vld [vmem:[%s0 + $0x58] sm:$0xf]
  %v37 = vld [vmem:[%s0 + $0x5c] sm:$0xf]
  %v38 = vld [vmem:[%s0 + $0x60] sm:$0xf]
  %v39 = vld [vmem:[%s0 + $0x64] sm:$0xf]
  %v40 = vld [vmem:[%s0 + $0x68] sm:$0xf]
  %v41 = vld [vmem:[%s0 + $0x6c] sm:$0xf]
  %v42 = vld [vmem:[%s0 + $0x70] sm:$0xf]
  %v43 = vld [vmem:[%s0 + $0x74] sm:$0xf]
  %v44 = vld [vmem:[%s0 + $0x78] sm:$0xf]
  %v45 = vld [vmem:[%s0 + $0x7c] sm:$0xf]
  %v46 = vunpack.c.l.bf16 %v14
  %v47 = vunpack.c.l.bf16 %v15
  %v48 = vunpack.c.l.bf16 %v16
  %v49 = vunpack.c.l.bf16 %v17
  %v50 = vunpack.c.l.bf16 %v18
  %v51 = vunpack.c.l.bf16 %v19
  %v52 = vunpack.c.l.bf16 %v20
  %v53 = vunpack.c.l.bf16 %v21
  %v54 = vunpack.c.l.bf16 %v22
  %v55 = vunpack.c.l.bf16 %v23
  %v56 = vunpack.c.l.bf16 %v24
  %v57 = vunpack.c.l.bf16 %v25
  %v58 = vunpack.c.l.bf16 %v26
  %v59 = vunpack.c.l.bf16 %v27
  %v60 = vunpack.c.l.bf16 %v28
  %v61 = vunpack.c.l.bf16 %v29
  %v62 = vunpack.c.l.bf16 %v30
  %v63 = vunpack.c.l.bf16 %v31
  %v64 = vunpack.c.l.bf16 %v32
  %v65 = vunpack.c.l.bf16 %v33
  %v66 = vunpack.c.l.bf16 %v34
  %v67 = vunpack.c.l.bf16 %v35
  %v68 = vunpack.c.l.bf16 %v36
  %v69 = vunpack.c.l.bf16 %v37
  %v70 = vunpack.c.l.bf16 %v38
  %v71 = vunpack.c.l.bf16 %v39
  %v72 = vunpack.c.l.bf16 %v40
  %v73 = vunpack.c.l.bf16 %v41
  %v74 = vunpack.c.l.bf16 %v42
  %v75 = vunpack.c.l.bf16 %v43
  %v76 = vunpack.c.l.bf16 %v44
  %v77 = vunpack.c.l.bf16 %v45
  %v78 = vld [vmem:[%s1] sm:$0x1]
  %v80 = vperm.slane %v78, 0
  %v82 = vmul.f32 %v46, %v80
  %v83 = vmul.f32 %v47, %v80
  %v84 = vmul.f32 %v48, %v80
  %v85 = vmul.f32 %v49, %v80
  %v86 = vmul.f32 %v50, %v80
  %v87 = vmul.f32 %v51, %v80
  %v88 = vmul.f32 %v52, %v80
  %v89 = vmul.f32 %v53, %v80
  %v90 = vmul.f32 %v54, %v80
  %v91 = vmul.f32 %v55, %v80
  %v92 = vmul.f32 %v56, %v80
  %v93 = vmul.f32 %v57, %v80
  %v94 = vmul.f32 %v58, %v80
  %v95 = vmul.f32 %v59, %v80
  %v96 = vmul.f32 %v60, %v80
  %v97 = vmul.f32 %v61, %v80
  %v98 = vmul.f32 %v62, %v80
  %v99 = vmul.f32 %v63, %v80
  %v100 = vmul.f32 %v64, %v80
  %v101 = vmul.f32 %v65, %v80
  %v102 = vmul.f32 %v66, %v80
  %v103 = vmul.f32 %v67, %v80
  %v104 = vmul.f32 %v68, %v80
  %v105 = vmul.f32 %v69, %v80
  %v106 = vmul.f32 %v70, %v80
  %v107 = vmul.f32 %v71, %v80
  %v108 = vmul.f32 %v72, %v80
  %v109 = vmul.f32 %v73, %v80
  %v110 = vmul.f32 %v74, %v80
  %v111 = vmul.f32 %v75, %v80
  %v112 = vmul.f32 %v76, %v80
  %v113 = vmul.f32 %v77, %v80
  %v114 = vld [vmem:[%s2] sm:$0x1]
  %v116 = vperm.slane %v114, 0
  %v118 = vadd.f32 %v82, %v116
  %v119 = vadd.f32 %v83, %v116
  %v120 = vadd.f32 %v84, %v116
  %v121 = vadd.f32 %v85, %v116
  %v122 = vadd.f32 %v86, %v116
  %v123 = vadd.f32 %v87, %v116
  %v124 = vadd.f32 %v88, %v116
  %v125 = vadd.f32 %v89, %v116
  %v126 = vadd.f32 %v90, %v116
  %v127 = vadd.f32 %v91, %v116
  %v128 = vadd.f32 %v92, %v116
  %v129 = vadd.f32 %v93, %v116
  %v130 = vadd.f32 %v94, %v116
  %v131 = vadd.f32 %v95, %v116
  %v132 = vadd.f32 %v96, %v116
  %v133 = vadd.f32 %v97, %v116
  %v134 = vadd.f32 %v98, %v116
  %v135 = vadd.f32 %v99, %v116
  %v136 = vadd.f32 %v100, %v116
  %v137 = vadd.f32 %v101, %v116
  %v138 = vadd.f32 %v102, %v116
  %v139 = vadd.f32 %v103, %v116
  %v140 = vadd.f32 %v104, %v116
  %v141 = vadd.f32 %v105, %v116
  %v142 = vadd.f32 %v106, %v116
  %v143 = vadd.f32 %v107, %v116
  %v144 = vadd.f32 %v108, %v116
  %v145 = vadd.f32 %v109, %v116
  %v146 = vadd.f32 %v110, %v116
  %v147 = vadd.f32 %v111, %v116
  %v148 = vadd.f32 %v112, %v116
  %v149 = vadd.f32 %v113, %v116
  %v150 = vmax.f32 %v118, 0.0
  %v151 = vmax.f32 %v119, 0.0
  %v152 = vmax.f32 %v120, 0.0
  %v153 = vmax.f32 %v121, 0.0
  %v154 = vmax.f32 %v122, 0.0
  %v155 = vmax.f32 %v123, 0.0
  %v156 = vmax.f32 %v124, 0.0
  %v157 = vmax.f32 %v125, 0.0
  %v158 = vmax.f32 %v126, 0.0
  %v159 = vmax.f32 %v127, 0.0
  %v160 = vmax.f32 %v128, 0.0
  %v161 = vmax.f32 %v129, 0.0
  %v162 = vmax.f32 %v130, 0.0
  %v163 = vmax.f32 %v131, 0.0
  %v164 = vmax.f32 %v132, 0.0
  %v165 = vmax.f32 %v133, 0.0
  %v166 = vmax.f32 %v134, 0.0
  %v167 = vmax.f32 %v135, 0.0
  %v168 = vmax.f32 %v136, 0.0
  %v169 = vmax.f32 %v137, 0.0
  %v170 = vmax.f32 %v138, 0.0
  %v171 = vmax.f32 %v139, 0.0
  %v172 = vmax.f32 %v140, 0.0
  %v173 = vmax.f32 %v141, 0.0
  %v174 = vmax.f32 %v142, 0.0
  %v175 = vmax.f32 %v143, 0.0
  %v176 = vmax.f32 %v144, 0.0
  %v177 = vmax.f32 %v145, 0.0
  %v178 = vmax.f32 %v146, 0.0
  %v179 = vmax.f32 %v147, 0.0
  %v180 = vmax.f32 %v148, 0.0
  %v181 = vmax.f32 %v149, 0.0
  %v182 = vpack.c.bf16 %v150, %v150
  %v183 = vpack.c.bf16 %v151, %v151
  %v184 = vpack.c.bf16 %v152, %v152
  %v185 = vpack.c.bf16 %v153, %v153
  %v186 = vpack.c.bf16 %v154, %v154
  %v187 = vpack.c.bf16 %v155, %v155
  %v188 = vpack.c.bf16 %v156, %v156
  %v189 = vpack.c.bf16 %v157, %v157
  %v190 = vpack.c.bf16 %v158, %v158
  %v191 = vpack.c.bf16 %v159, %v159
  %v192 = vpack.c.bf16 %v160, %v160
  %v193 = vpack.c.bf16 %v161, %v161
  %v194 = vpack.c.bf16 %v162, %v162
  %v195 = vpack.c.bf16 %v163, %v163
  %v196 = vpack.c.bf16 %v164, %v164
  %v197 = vpack.c.bf16 %v165, %v165
  %v198 = vpack.c.bf16 %v166, %v166
  %v199 = vpack.c.bf16 %v167, %v167
  %v200 = vpack.c.bf16 %v168, %v168
  %v201 = vpack.c.bf16 %v169, %v169
  %v202 = vpack.c.bf16 %v170, %v170
  %v203 = vpack.c.bf16 %v171, %v171
  %v204 = vpack.c.bf16 %v172, %v172
  %v205 = vpack.c.bf16 %v173, %v173
  %v206 = vpack.c.bf16 %v174, %v174
  %v207 = vpack.c.bf16 %v175, %v175
  %v208 = vpack.c.bf16 %v176, %v176
  %v209 = vpack.c.bf16 %v177, %v177
  %v210 = vpack.c.bf16 %v178, %v178
  %v211 = vpack.c.bf16 %v179, %v179
  %v212 = vpack.c.bf16 %v180, %v180
  %v213 = vpack.c.bf16 %v181, %v181
  %vm214 = vcmask 125952
  %215 = vst.msk [vmem:[%s3] sm:$0xf] %vm214, %v182
  %216 = vst.msk [vmem:[%s3 + $0x4] sm:$0xf] %vm214, %v183
  %217 = vst.msk [vmem:[%s3 + $0x8] sm:$0xf] %vm214, %v184
  %218 = vst.msk [vmem:[%s3 + $0xc] sm:$0xf] %vm214, %v185
  %219 = vst.msk [vmem:[%s3 + $0x10] sm:$0xf] %vm214, %v186
  %220 = vst.msk [vmem:[%s3 + $0x14] sm:$0xf] %vm214, %v187
  %221 = vst.msk [vmem:[%s3 + $0x18] sm:$0xf] %vm214, %v188
  %222 = vst.msk [vmem:[%s3 + $0x1c] sm:$0xf] %vm214, %v189
  %223 = vst.msk [vmem:[%s3 + $0x20] sm:$0xf] %vm214, %v190
  %224 = vst.msk [vmem:[%s3 + $0x24] sm:$0xf] %vm214, %v191
  %225 = vst.msk [vmem:[%s3 + $0x28] sm:$0xf] %vm214, %v192
  %226 = vst.msk [vmem:[%s3 + $0x2c] sm:$0xf] %vm214, %v193
  %227 = vst.msk [vmem:[%s3 + $0x30] sm:$0xf] %vm214, %v194
  %228 = vst.msk [vmem:[%s3 + $0x34] sm:$0xf] %vm214, %v195
  %229 = vst.msk [vmem:[%s3 + $0x38] sm:$0xf] %vm214, %v196
  %230 = vst.msk [vmem:[%s3 + $0x3c] sm:$0xf] %vm214, %v197
  %231 = vst.msk [vmem:[%s3 + $0x40] sm:$0xf] %vm214, %v198
  %232 = vst.msk [vmem:[%s3 + $0x44] sm:$0xf] %vm214, %v199
  %233 = vst.msk [vmem:[%s3 + $0x48] sm:$0xf] %vm214, %v200
  %234 = vst.msk [vmem:[%s3 + $0x4c] sm:$0xf] %vm214, %v201
  %235 = vst.msk [vmem:[%s3 + $0x50] sm:$0xf] %vm214, %v202
  %236 = vst.msk [vmem:[%s3 + $0x54] sm:$0xf] %vm214, %v203
  %237 = vst.msk [vmem:[%s3 + $0x58] sm:$0xf] %vm214, %v204
  %238 = vst.msk [vmem:[%s3 + $0x5c] sm:$0xf] %vm214, %v205
  %239 = vst.msk [vmem:[%s3 + $0x60] sm:$0xf] %vm214, %v206
  %240 = vst.msk [vmem:[%s3 + $0x64] sm:$0xf] %vm214, %v207
  %241 = vst.msk [vmem:[%s3 + $0x68] sm:$0xf] %vm214, %v208
  %242 = vst.msk [vmem:[%s3 + $0x6c] sm:$0xf] %vm214, %v209
  %243 = vst.msk [vmem:[%s3 + $0x70] sm:$0xf] %vm214, %v210
  %244 = vst.msk [vmem:[%s3 + $0x74] sm:$0xf] %vm214, %v211
  %245 = vst.msk [vmem:[%s3 + $0x78] sm:$0xf] %vm214, %v212
  %246 = vst.msk [vmem:[%s3 + $0x7c] sm:$0xf] %vm214, %v213
  // Predicated region
  $region14: #{decoder_bn_forward.8} parent=0 // pred_check
    _
  $region15: #{decoder_bn_forward.8} parent=0 // pred_check_branch
    %248 = sbr.rel (0) target = $region17
  $region16: #{decoder_bn_forward.8} parent=0 // pred_region
    _
  $region17: #{decoder_bn_forward.8} parent=0 // pred_fallthru
    _
  // Predicated region
  $region18: #{decoder_bn_forward.8} parent=0 // pred_check
    _
  $region19: #{decoder_bn_forward.8} parent=0 // pred_check_branch
    %250 = sbr.rel (0) target = $region21
  $region20: #{decoder_bn_forward.8} parent=0 // pred_region
    _
  $region21: #{decoder_bn_forward.8} parent=0 // pred_fallthru
    _

// kernel: decoder_bn_forward.9
$region0: #{decoder_bn_forward.9}
  #allocation0 [shape = 'u32[]', space=smem, size = 0x4, offset = 0x4, fixed_abs, tag = 'smem constant byte address 0x4 - core index']
  #allocation1 [shape = 'u32[72,128]{1,0:T(1,128)}', space=vmem, size = 0x9000, scoped, tag = 'internal scratch']
  #allocation2 [shape = 'f32[256,8]{1,0:T(8,128)}', space=vmem, size = 0x20000, scoped, tag = 'scratch operand']
  %s0 = inlined_call_operand.vmem [shape: bf16[4,256,64], index: 0, kind: input, shape index: {}]
  %s1 = inlined_call_operand.hbm [shape: bf16[4,64,8], index: 1, kind: input, shape index: {}]
  %s2 = inlined_call_operand.vmem [shape: bf16[4,256,8], index: 2, kind: output, shape index: {0}]
  %s3 = inlined_call_operand.vmem [shape: f32[4,8,8], index: 3, kind: output, shape index: {1}]
  %4 = xla_tuple %s2, %s3
  %s5 = sld [smem:[#allocation0]]
  $region61: #{decoder_bn_forward.9} parent=0
    _
  %s7 = ssub.s32 1, %s5
  %s8 = scalar_select 0, %s7, %s5
  $region1: #{decoder_bn_forward.9} parent=0
    #allocation3 [shape = 'u8[32768]{0}', space=vmem, size = 0x8000, scoped, tag = 'input window, operand 1']
    #allocation4 [shape = 's32[2]{0}', space=sflag, size = 0x8, scoped, tag = 'scoped memory for decoder_bn_forward.9']
    %9 = vsyncpa [#allocation4], 0
    %s10 = scalar_lea.sflag [#allocation4], 1
    %11 = vsyncpa %s10, 0
    loop: start=0, step=1, limit=6
    $region2: #{decoder_bn_forward.9} parent=1 // loop_pre_header
      _
    $region3: #{decoder_bn_forward.9} parent=1 // loop_header
      %s13 = sphi 0, %s17
      %p14 = scmp.ge.s32.totalorder %s13, 6
      %s20 = sphi 0, %s39
      %s21 = sphi 0, %s35
      %s22 = sphi 0, %s31
      %s23 = sphi 0, %s20
      %s24 = sphi 0, %s21
      %s25 = sphi 0, %s22
      %s26 = sphi 0, %s23
      %s27 = sphi 0, %s24
      %s28 = sphi 0, %s25
      %s46 = sphi 0, %s48
      %s49 = sphi 0, %s46
      %s50 = sphi 0, %s49
      %s66 = sphi 0, %s50
      %s74 = sphi 0, %s76
      %s77 = sphi 0, %s74
      %s78 = sphi 0, %s77
      %s94 = sphi 0, %s78
      %s102 = sphi 0, %s104
      %s105 = sphi 0, %s102
      %s106 = sphi 0, %s105
      %s122 = sphi 0, %s106
      %s130 = sphi 0, %s132
      %s133 = sphi 0, %s130
      %s134 = sphi 0, %s133
      %s150 = sphi 0, %s134
    $region4: #{decoder_bn_forward.9} parent=1 // loop_header_branch
      %16 = sbr.rel (%p14) target = $region8
    $region5: #{decoder_bn_forward.9} parent=1 // loop_body
      %s18 = ssub.s32 %s13, 1
      %s19 = ssub.s32 %s13, 2
      %s29 = sadd.s32 1, %s22
      %p30 = scmp.ge.s32.totalorder %s29, 1
      %s31 = scalar_select %p30, 0, %s29
      %s32 = sadd.s32 1, %s21
      %s33 = scalar_select %p30, %s32, %s21
      %p34 = scmp.ge.s32.totalorder %s33, 1
      %s35 = scalar_select %p34, 0, %s33
      %s36 = sadd.s32 1, %s20
      %s37 = scalar_select %p34, %s36, %s20
      %p38 = scmp.ge.s32.totalorder %s37, 4
      %s39 = scalar_select %p38, 0, %s37
      %s40 = ssub.s32 %s20, %s39
      %s41 = ssub.s32 %s21, %s35
      %s42 = sor.u32 %s40, %s41
      %s43 = ssub.s32 %s22, %s31
      %s44 = sor.u32 %s42, %s43
      %p45 = scmp.eq.s32.totalorder %s44, 0
      %s47 = sadd.s32 %s46, 1
      %s48 = scalar_select %p45, %s46, %s47
      %p51 = pneg %p45
      %p52 = scmp.eq.s32.totalorder %s13, 3
      %p53 = por %p51, %p52
      %p54 = scmp.ne.s32.totalorder %s46, %s49
      %p55 = scmp.eq.s32.totalorder %s13, 0
      %p56 = por %p54, %p55
      %p57 = scmp.ne.s32.totalorder %s46, %s49
      %p58 = scmp.eq.s32.totalorder %s18, 3
      %p59 = por %p57, %p58
      %p60 = scmp.ne.s32.totalorder %s49, %s50
      %p61 = scmp.eq.s32.totalorder %s18, 0
      %p62 = por %p60, %p61
      %p63 = scmp.ne.s32.totalorder %s49, %s50
      %p64 = scmp.eq.s32.totalorder %s19, 3
      %p65 = por %p63, %p64
      %p67 = scmp.ne.s32.totalorder %s50, %s66
      %p68 = scmp.eq.s32.totalorder %s19, 0
      %p69 = por %p67, %p68
      %s70 = ssub.s32 %s20, %s39
      %s71 = ssub.s32 %s22, %s31
      %s72 = sor.u32 %s70, %s71
      %p73 = scmp.eq.s32.totalorder %s72, 0
      %s75 = sadd.s32 %s74, 1
      %s76 = scalar_select %p73, %s74, %s75
      %p79 = pneg %p73
      %p80 = scmp.eq.s32.totalorder %s13, 3
      %p81 = por %p79, %p80
      %p82 = scmp.ne.s32.totalorder %s74, %s77
      %p83 = scmp.eq.s32.totalorder %s13, 0
      %p84 = por %p82, %p83
      %p85 = scmp.ne.s32.totalorder %s74, %s77
      %p86 = scmp.eq.s32.totalorder %s18, 3
      %p87 = por %p85, %p86
      %p88 = scmp.ne.s32.totalorder %s77, %s78
      %p89 = scmp.eq.s32.totalorder %s18, 0
      %p90 = por %p88, %p89
      %p91 = scmp.ne.s32.totalorder %s77, %s78
      %p92 = scmp.eq.s32.totalorder %s19, 3
      %p93 = por %p91, %p92
      %p95 = scmp.ne.s32.totalorder %s78, %s94
      %p96 = scmp.eq.s32.totalorder %s19, 0
      %p97 = por %p95, %p96
      %s98 = ssub.s32 %s20, %s39
      %s99 = ssub.s32 %s21, %s35
      %s100 = sor.u32 %s98, %s99
      %p101 = scmp.eq.s32.totalorder %s100, 0
      %s103 = sadd.s32 %s102, 1
      %s104 = scalar_select %p101, %s102, %s103
      %p107 = pneg %p101
      %p108 = scmp.eq.s32.totalorder %s13, 3
      %p109 = por %p107, %p108
      %p110 = scmp.ne.s32.totalorder %s102, %s105
      %p111 = scmp.eq.s32.totalorder %s13, 0
      %p112 = por %p110, %p111
      %p113 = scmp.ne.s32.totalorder %s102, %s105
      %p114 = scmp.eq.s32.totalorder %s18, 3
      %p115 = por %p113, %p114
      %p116 = scmp.ne.s32.totalorder %s105, %s106
      %p117 = scmp.eq.s32.totalorder %s18, 0
      %p118 = por %p116, %p117
      %p119 = scmp.ne.s32.totalorder %s105, %s106
      %p120 = scmp.eq.s32.totalorder %s19, 3
      %p121 = por %p119, %p120
      %p123 = scmp.ne.s32.totalorder %s106, %s122
      %p124 = scmp.eq.s32.totalorder %s19, 0
      %p125 = por %p123, %p124
      %s126 = ssub.s32 %s20, %s39
      %s127 = ssub.s32 %s21, %s35
      %s128 = sor.u32 %s126, %s127
      %p129 = scmp.eq.s32.totalorder %s128, 0
      %s131 = sadd.s32 %s130, 1
      %s132 = scalar_select %p129, %s130, %s131
      %p135 = pneg %p129
      %p136 = scmp.eq.s32.totalorder %s13, 3
      %p137 = por %p135, %p136
      %p138 = scmp.ne.s32.totalorder %s130, %s133
      %p139 = scmp.eq.s32.totalorder %s13, 0
      %p140 = por %p138, %p139
      %p141 = scmp.ne.s32.totalorder %s130, %s133
      %p142 = scmp.eq.s32.totalorder %s18, 3
      %p143 = por %p141, %p142
      %p144 = scmp.ne.s32.totalorder %s133, %s134
      %p145 = scmp.eq.s32.totalorder %s18, 0
      %p146 = por %p144, %p145
      %p147 = scmp.ne.s32.totalorder %s133, %s134
      %p148 = scmp.eq.s32.totalorder %s19, 3
      %p149 = por %p147, %p148
      %p151 = scmp.ne.s32.totalorder %s134, %s150
      %p152 = scmp.eq.s32.totalorder %s19, 0
      %p153 = por %p151, %p152
      %p154 = scmp.le.s32.totalorder 1, %s13
      %p155 = scmp.lt.s32.totalorder %s13, 5
      %p156 = pnand %p154, %p155
      %p157 = pneg %p156
      // Predicated region
      $region9: #{decoder_bn_forward.9} parent=5 // pred_check
        _
      $region10: #{decoder_bn_forward.9} parent=5 // pred_check_branch
        %159 = sbr.rel (%p156) target = $region12
      $region11: #{decoder_bn_forward.9} parent=5 // pred_region
        %s160 = ssub.s32 %s13, 1
      $region12: #{decoder_bn_forward.9} parent=5 // pred_fallthru
        _
      %p161 = scmp.lt.s32.totalorder %s13, 4
      // Predicated region
      $region13: #{decoder_bn_forward.9} parent=5 // pred_check
        %p162 = pneg %p161
      $region14: #{decoder_bn_forward.9} parent=5 // pred_check_branch
        %164 = sbr.rel (%p162) target = $region16
      $region15: #{decoder_bn_forward.9} parent=5 // pred_region
        // Predicated region
        $region17: #{decoder_bn_forward.9} parent=15 // pred_check
          %p165 = pneg %p56
        $region18: #{decoder_bn_forward.9} parent=15 // pred_check_branch
          %167 = sbr.rel (%p165) target = $region20
        $region19: #{decoder_bn_forward.9} parent=15 // pred_region
          %s168 = smul.u32 32, %s21
          %p169 = scmp.lt.s32.totalorder %s20, 3
          %s170 = scalar_select %p169, %s20, 3
          %p171 = scmp.lt.s32.totalorder %s168, 31
          %s172 = scalar_select %p171, %s168, 31
          %p173 = scmp.lt.s32.totalorder %s22, 0
          %s174 = scalar_select %p173, %s22, 0
          %s175 = sadd.s32 %s174, %s172
          %s176 = smul.addr %s170, 32
          %s177 = sadd.s32 %s175, %s176
          %s178 = smul.addr %s177, 4
          %s179 = scalar_lea.vmem %s0, %s178
          %s180 = smul.u32 32, %s21
        $region20: #{decoder_bn_forward.9} parent=15 // pred_fallthru
          _
        // Predicated region
        $region21: #{decoder_bn_forward.9} parent=15 // pred_check
          %p181 = pneg %p84
        $region22: #{decoder_bn_forward.9} parent=15 // pred_check_branch
          %183 = sbr.rel (%p181) target = $region24
        $region23: #{decoder_bn_forward.9} parent=15 // pred_region
          %s184 = sand.u32 %s74, 1
          %s185 = scalar_lea.sflag [#allocation4], %s184
          %s186 = sand.u32 %s74, 1
          %s187 = smul.addr %s186, 32
          %s188 = scalar_lea.vmem [#allocation3], %s187
          %s189 = smul.u32 8, %s22
          %191 = vsyncadd %s185, 0
          %s192 = smul.addr %s20, 8
          %s193 = sadd.s32 %s189, %s192
          %s194 = smul.addr %s193, 4
          %s195 = scalar_lea.hbm %s1, %s194
          %s196 = sshll.u32 %s195, 4
          %s197 = int_to_ptr.hbm [resolvable:$true] %s196
          %s198 = sshll.u32 %s188, 4
          %s199 = int_to_ptr.vmem [resolvable:$true] %s198
          %204 = dma.hbm_to_vmem [thread:$0]  %s197, 512, %s199, %s185, 64, 64, 4
        $region24: #{decoder_bn_forward.9} parent=15 // pred_fallthru
          _
      $region16: #{decoder_bn_forward.9} parent=5 // pred_fallthru
        _
      %p205 = scmp.le.s32.totalorder 1, %s13
      %p206 = scmp.lt.s32.totalorder %s13, 5
      %p207 = pnand %p205, %p206
      %p208 = pneg %p207
      // Predicated region
      $region25: #{decoder_bn_forward.9} parent=5 // pred_check
        _
      $region26: #{decoder_bn_forward.9} parent=5 // pred_check_branch
        %210 = sbr.rel (%p207) target = $region28
      $region27: #{decoder_bn_forward.9} parent=5 // pred_region
        %s211 = ssub.s32 %s13, 1
        %s212 = sand.u32 %s77, 1
        %s213 = scalar_lea.sflag [#allocation4], %s212
        %s214 = sand.u32 %s77, 1
        %s215 = smul.addr %s214, 32
        %s216 = scalar_lea.vmem [#allocation3], %s215
        // Predicated region
        $region29: #{decoder_bn_forward.9} parent=27 // pred_check
          %p217 = pneg %p90
        $region30: #{decoder_bn_forward.9} parent=27 // pred_check_branch
          %219 = sbr.rel (%p217) target = $region32
        $region31: #{decoder_bn_forward.9} parent=27 // pred_region
          %221 = dma.done %s213, 512
        $region32: #{decoder_bn_forward.9} parent=27 // pred_fallthru
          _
        %s222 = smul.u32 32, %s24
        %p223 = scmp.lt.s32.totalorder %s23, 3
        %s224 = scalar_select %p223, %s23, 3
        %p225 = scmp.lt.s32.totalorder %s222, 31
        %s226 = scalar_select %p225, %s222, 31
        %p227 = scmp.lt.s32.totalorder %s25, 0
        %s228 = scalar_select %p227, %s25, 0
        %s229 = sadd.s32 %s228, %s226
        %s230 = smul.addr %s224, 32
        %s231 = sadd.s32 %s229, %s230
        %s232 = smul.addr %s231, 4
        %s233 = scalar_lea.vmem %s0, %s232
        %p234 = pneg %p62
        %p235 = pneg %p59
        %s236 = sand.u32 %s77, 1
        %s237 = scalar_lea.sflag [#allocation4], %s236
        %s238 = sand.u32 %s77, 1
        %s239 = smul.addr %s238, 32
        %s240 = scalar_lea.vmem [#allocation3], %s239
        %p241 = pneg %p90
        %p242 = pneg %p87
        %p243 = pneg %p118
        %p244 = pneg %p115
        %s245 = smul.u32 32, %s24
        %p246 = scmp.lt.s32.totalorder %s23, 3
        %s247 = scalar_select %p246, %s23, 3
        %p248 = scmp.lt.s32.totalorder %s245, 31
        %s249 = scalar_select %p248, %s245, 31
        %s250 = smul.addr %s247, 32
        %s251 = sadd.s32 %s249, %s250
        %s252 = smul.addr %s251, 4
        %s253 = scalar_lea.vmem %s2, %s252
        %p254 = pneg %p146
        %p255 = pneg %p143
        %p256 = scmp.lt.s32.totalorder %s23, 3
        %s257 = scalar_select %p256, %s23, 3
        %p258 = scmp.lt.s32.totalorder %s24, 0
        %s259 = scalar_select %p258, %s24, 0
        %s260 = sadd.s32 %s259, %s257
        %s261 = smul.addr %s260, 8
        %s262 = scalar_lea.vmem %s3, %s261
        %s263 = smul.u32 32, %s24
        %p264 = scmp.lt.s32.totalorder %s23, 3
        %s265 = scalar_select %p264, %s23, 3
        %p266 = scmp.lt.s32.totalorder %s263, 31
        %s267 = scalar_select %p266, %s263, 31
        %p268 = scmp.lt.s32.totalorder %s25, 0
        %s269 = scalar_select %p268, %s25, 0
        %s270 = sadd.s32 %s269, %s267
        %s271 = smul.addr %s265, 32
        %s272 = sadd.s32 %s270, %s271
        %s273 = smul.addr %s272, 4
        %s274 = scalar_lea.vmem %s0, %s273
        %s275 = smul.u32 32, %s24
        %s276 = smul.u32 8, %s25
        %s277 = smul.u32 32, %s24
        %p278 = scmp.lt.s32.totalorder %s23, 3
        %s279 = scalar_select %p278, %s23, 3
        %p280 = scmp.lt.s32.totalorder %s277, 31
        %s281 = scalar_select %p280, %s277, 31
        %s282 = smul.addr %s279, 32
        %s283 = sadd.s32 %s281, %s282
        %s284 = smul.addr %s283, 4
        %s285 = scalar_lea.vmem %s2, %s284
        %s286 = smul.u32 32, %s24
        %p287 = scmp.lt.s32.totalorder %s23, 3
        %s288 = scalar_select %p287, %s23, 3
        %p289 = scmp.lt.s32.totalorder %s24, 0
        %s290 = scalar_select %p289, %s24, 0
        %s291 = sadd.s32 %s290, %s288
        %s292 = smul.addr %s291, 8
        %s293 = scalar_lea.vmem %s3, %s292
        %p295 = scmp.eq.s32.totalorder %s25, 0
        // Predicated region
        $region33: #{decoder_bn_forward.9} parent=27 // pred_check
          %p296 = pneg %p295
        $region34: #{decoder_bn_forward.9} parent=27 // pred_check_branch
          %298 = sbr.rel (%p296) target = $region36
        $region35: #{decoder_bn_forward.9} parent=27 // pred_region
          %vm299 = vcmask 64512
          %300 = vst.msk [vmem:[#allocation2] sm:$0xff] %vm299, 0.0
          %301 = vst.msk [vmem:[#allocation2 + $0x8] sm:$0xff] %vm299, 0.0
          %302 = vst.msk [vmem:[#allocation2 + $0x10] sm:$0xff] %vm299, 0.0
          %303 = vst.msk [vmem:[#allocation2 + $0x18] sm:$0xff] %vm299, 0.0
          %304 = vst.msk [vmem:[#allocation2 + $0x20] sm:$0xff] %vm299, 0.0
          %305 = vst.msk [vmem:[#allocation2 + $0x28] sm:$0xff] %vm299, 0.0
          %306 = vst.msk [vmem:[#allocation2 + $0x30] sm:$0xff] %vm299, 0.0
          %307 = vst.msk [vmem:[#allocation2 + $0x38] sm:$0xff] %vm299, 0.0
          %308 = vst.msk [vmem:[#allocation2 + $0x40] sm:$0xff] %vm299, 0.0
          %309 = vst.msk [vmem:[#allocation2 + $0x48] sm:$0xff] %vm299, 0.0
          %310 = vst.msk [vmem:[#allocation2 + $0x50] sm:$0xff] %vm299, 0.0
          %311 = vst.msk [vmem:[#allocation2 + $0x58] sm:$0xff] %vm299, 0.0
          %312 = vst.msk [vmem:[#allocation2 + $0x60] sm:$0xff] %vm299, 0.0
          %313 = vst.msk [vmem:[#allocation2 + $0x68] sm:$0xff] %vm299, 0.0
          %314 = vst.msk [vmem:[#allocation2 + $0x70] sm:$0xff] %vm299, 0.0
          %315 = vst.msk [vmem:[#allocation2 + $0x78] sm:$0xff] %vm299, 0.0
          %316 = vst.msk [vmem:[#allocation2 + $0x80] sm:$0xff] %vm299, 0.0
          %317 = vst.msk [vmem:[#allocation2 + $0x88] sm:$0xff] %vm299, 0.0
          %318 = vst.msk [vmem:[#allocation2 + $0x90] sm:$0xff] %vm299, 0.0
          %319 = vst.msk [vmem:[#allocation2 + $0x98] sm:$0xff] %vm299, 0.0
          %320 = vst.msk [vmem:[#allocation2 + $0xa0] sm:$0xff] %vm299, 0.0
          %321 = vst.msk [vmem:[#allocation2 + $0xa8] sm:$0xff] %vm299, 0.0
          %322 = vst.msk [vmem:[#allocation2 + $0xb0] sm:$0xff] %vm299, 0.0
          %323 = vst.msk [vmem:[#allocation2 + $0xb8] sm:$0xff] %vm299, 0.0
          %324 = vst.msk [vmem:[#allocation2 + $0xc0] sm:$0xff] %vm299, 0.0
          %325 = vst.msk [vmem:[#allocation2 + $0xc8] sm:$0xff] %vm299, 0.0
          %326 = vst.msk [vmem:[#allocation2 + $0xd0] sm:$0xff] %vm299, 0.0
          %327 = vst.msk [vmem:[#allocation2 + $0xd8] sm:$0xff] %vm299, 0.0
          %328 = vst.msk [vmem:[#allocation2 + $0xe0] sm:$0xff] %vm299, 0.0
          %329 = vst.msk [vmem:[#allocation2 + $0xe8] sm:$0xff] %vm299, 0.0
          %330 = vst.msk [vmem:[#allocation2 + $0xf0] sm:$0xff] %vm299, 0.0
          %331 = vst.msk [vmem:[#allocation2 + $0xf8] sm:$0xff] %vm299, 0.0
        $region36: #{decoder_bn_forward.9} parent=27 // pred_fallthru
          _
        %v332 = vld [vmem:[#allocation2] sm:$0xff]
        %v333 = vld [vmem:[#allocation2 + $0x8] sm:$0xff]
        %v334 = vld [vmem:[#allocation2 + $0x10] sm:$0xff]
        %v335 = vld [vmem:[#allocation2 + $0x18] sm:$0xff]
        %v336 = vld [vmem:[#allocation2 + $0x20] sm:$0xff]
        %v337 = vld [vmem:[#allocation2 + $0x28] sm:$0xff]
        %v338 = vld [vmem:[#allocation2 + $0x30] sm:$0xff]
        %v339 = vld [vmem:[#allocation2 + $0x38] sm:$0xff]
        %v340 = vld [vmem:[#allocation2 + $0x40] sm:$0xff]
        %v341 = vld [vmem:[#allocation2 + $0x48] sm:$0xff]
        %v342 = vld [vmem:[#allocation2 + $0x50] sm:$0xff]
        %v343 = vld [vmem:[#allocation2 + $0x58] sm:$0xff]
        %v344 = vld [vmem:[#allocation2 + $0x60] sm:$0xff]
        %v345 = vld [vmem:[#allocation2 + $0x68] sm:$0xff]
        %v346 = vld [vmem:[#allocation2 + $0x70] sm:$0xff]
        %v347 = vld [vmem:[#allocation2 + $0x78] sm:$0xff]
        %v348 = vld [vmem:[#allocation2 + $0x80] sm:$0xff]
        %v349 = vld [vmem:[#allocation2 + $0x88] sm:$0xff]
        %v350 = vld [vmem:[#allocation2 + $0x90] sm:$0xff]
        %v351 = vld [vmem:[#allocation2 + $0x98] sm:$0xff]
        %v352 = vld [vmem:[#allocation2 + $0xa0] sm:$0xff]
        %v353 = vld [vmem:[#allocation2 + $0xa8] sm:$0xff]
        %v354 = vld [vmem:[#allocation2 + $0xb0] sm:$0xff]
        %v355 = vld [vmem:[#allocation2 + $0xb8] sm:$0xff]
        %v356 = vld [vmem:[#allocation2 + $0xc0] sm:$0xff]
        %v357 = vld [vmem:[#allocation2 + $0xc8] sm:$0xff]
        %v358 = vld [vmem:[#allocation2 + $0xd0] sm:$0xff]
        %v359 = vld [vmem:[#allocation2 + $0xd8] sm:$0xff]
        %v360 = vld [vmem:[#allocation2 + $0xe0] sm:$0xff]
        %v361 = vld [vmem:[#allocation2 + $0xe8] sm:$0xff]
        %v362 = vld [vmem:[#allocation2 + $0xf0] sm:$0xff]
        %v363 = vld [vmem:[#allocation2 + $0xf8] sm:$0xff]
        %v364 = vld [vmem:[%s274] sm:$0xf]
        %v365 = vld [vmem:[%s274 + $0x4] sm:$0xf]
        %v366 = vld [vmem:[%s274 + $0x8] sm:$0xf]
        %v367 = vld [vmem:[%s274 + $0xc] sm:$0xf]
        %v368 = vld [vmem:[%s274 + $0x10] sm:$0xf]
        %v369 = vld [vmem:[%s274 + $0x14] sm:$0xf]
        %v370 = vld [vmem:[%s274 + $0x18] sm:$0xf]
        %v371 = vld [vmem:[%s274 + $0x1c] sm:$0xf]
        %v372 = vld [vmem:[%s274 + $0x20] sm:$0xf]
        %v373 = vld [vmem:[%s274 + $0x24] sm:$0xf]
        %v374 = vld [vmem:[%s274 + $0x28] sm:$0xf]
        %v375 = vld [vmem:[%s274 + $0x2c] sm:$0xf]
        %v376 = vld [vmem:[%s274 + $0x30] sm:$0xf]
        %v377 = vld [vmem:[%s274 + $0x34] sm:$0xf]
        %v378 = vld [vmem:[%s274 + $0x38] sm:$0xf]
        %v379 = vld [vmem:[%s274 + $0x3c] sm:$0xf]
        %v380 = vld [vmem:[%s274 + $0x40] sm:$0xf]
        %v381 = vld [vmem:[%s274 + $0x44] sm:$0xf]
        %v382 = vld [vmem:[%s274 + $0x48] sm:$0xf]
        %v383 = vld [vmem:[%s274 + $0x4c] sm:$0xf]
        %v384 = vld [vmem:[%s274 + $0x50] sm:$0xf]
        %v385 = vld [vmem:[%s274 + $0x54] sm:$0xf]
        %v386 = vld [vmem:[%s274 + $0x58] sm:$0xf]
        %v387 = vld [vmem:[%s274 + $0x5c] sm:$0xf]
        %v388 = vld [vmem:[%s274 + $0x60] sm:$0xf]
        %v389 = vld [vmem:[%s274 + $0x64] sm:$0xf]
        %v390 = vld [vmem:[%s274 + $0x68] sm:$0xf]
        %v391 = vld [vmem:[%s274 + $0x6c] sm:$0xf]
        %v392 = vld [vmem:[%s274 + $0x70] sm:$0xf]
        %v393 = vld [vmem:[%s274 + $0x74] sm:$0xf]
        %v394 = vld [vmem:[%s274 + $0x78] sm:$0xf]
        %v395 = vld [vmem:[%s274 + $0x7c] sm:$0xf]
        %v396 = vld [vmem:[%s216] sm:$0xf]
        %v397 = vld [vmem:[%s216 + $0x4] sm:$0xf]
        %v398 = vld [vmem:[%s216 + $0x8] sm:$0xf]
        %v399 = vld [vmem:[%s216 + $0xc] sm:$0xf]
        %v400 = vld [vmem:[%s216 + $0x10] sm:$0xf]
        %v401 = vld [vmem:[%s216 + $0x14] sm:$0xf]
        %v402 = vld [vmem:[%s216 + $0x18] sm:$0xf]
        %v403 = vld [vmem:[%s216 + $0x1c] sm:$0xf]
        %v436 = vunpack.c.l.b16 %v364
        %v437 = vunpack.c.l.b16 %v365
        %v438 = vunpack.c.l.b16 %v366
        %v439 = vunpack.c.l.b16 %v367
        %v440 = vunpack.c.l.b16 %v368
        %v441 = vunpack.c.l.b16 %v369
        %v442 = vunpack.c.l.b16 %v370
        %v443 = vunpack.c.l.b16 %v371
        %v444 = vunpack.c.l.b16 %v372
        %v445 = vunpack.c.l.b16 %v373
        %v446 = vunpack.c.l.b16 %v374
        %v447 = vunpack.c.l.b16 %v375
        %v448 = vunpack.c.l.b16 %v376
        %v449 = vunpack.c.l.b16 %v377
        %v450 = vunpack.c.l.b16 %v378
        %v451 = vunpack.c.l.b16 %v379
        %v452 = vunpack.c.l.b16 %v380
        %v453 = vunpack.c.l.b16 %v381
        %v454 = vunpack.c.l.b16 %v382
        %v455 = vunpack.c.l.b16 %v383
        %v456 = vunpack.c.l.b16 %v384
        %v457 = vunpack.c.l.b16 %v385
        %v458 = vunpack.c.l.b16 %v386
        %v459 = vunpack.c.l.b16 %v387
        %v460 = vunpack.c.l.b16 %v388
        %v461 = vunpack.c.l.b16 %v389
        %v462 = vunpack.c.l.b16 %v390
        %v463 = vunpack.c.l.b16 %v391
        %v464 = vunpack.c.l.b16 %v392
        %v465 = vunpack.c.l.b16 %v393
        %v466 = vunpack.c.l.b16 %v394
        %v467 = vunpack.c.l.b16 %v395
        %v468 = vpack.c.b16 %v437, %v436
        %v469 = vpack.c.b16 %v439, %v438
        %v470 = vpack.c.b16 %v441, %v440
        %v471 = vpack.c.b16 %v443, %v442
        %v472 = vpack.c.b16 %v445, %v444
        %v473 = vpack.c.b16 %v447, %v446
        %v474 = vpack.c.b16 %v449, %v448
        %v475 = vpack.c.b16 %v451, %v450
        %v476 = vpack.c.b16 %v453, %v452
        %v477 = vpack.c.b16 %v455, %v454
        %v478 = vpack.c.b16 %v457, %v456
        %v479 = vpack.c.b16 %v459, %v458
        %v480 = vpack.c.b16 %v461, %v460
        %v481 = vpack.c.b16 %v463, %v462
        %v482 = vpack.c.b16 %v465, %v464
        %v483 = vpack.c.b16 %v467, %v466
        %v492 = vunpack.c.l.b16 %v396
        %v493 = vunpack.c.l.b16 %v397
        %v494 = vunpack.c.l.b16 %v398
        %v495 = vunpack.c.l.b16 %v399
        %v496 = vunpack.c.l.b16 %v400
        %v497 = vunpack.c.l.b16 %v401
        %v498 = vunpack.c.l.b16 %v402
        %v499 = vunpack.c.l.b16 %v403
        %v500 = vpack.c.b16 %v493, %v492
        %v501 = vpack.c.b16 %v495, %v494
        %v502 = vpack.c.b16 %v497, %v496
        %v503 = vpack.c.b16 %v499, %v498
        %vm508 = vcmask 523264
        %v510 = vsel %vm508, %v468, 0
        %v513 = vsel %vm508, %v469, 0
        %v516 = vsel %vm508, %v470, 0
        %v519 = vsel %vm508, %v471, 0
        %v522 = vsel %vm508, %v472, 0
        %v525 = vsel %vm508, %v473, 0
        %v528 = vsel %vm508, %v474, 0
        %v531 = vsel %vm508, %v475, 0
        %v534 = vsel %vm508, %v476, 0
        %v537 = vsel %vm508, %v477, 0
        %v540 = vsel %vm508, %v478, 0
        %v543 = vsel %vm508, %v479, 0
        %v546 = vsel %vm508, %v480, 0
        %v549 = vsel %vm508, %v481, 0
        %v552 = vsel %vm508, %v482, 0
        %v555 = vsel %vm508, %v483, 0
        %557 = vmatpush.bf16.msra.mxu0 0
        %558 = vmatpush.bf16.msra.mxu0 0
        %559 = vmatpush.bf16.msra.mxu0 0
        %560 = vmatpush.bf16.msra.mxu0 0
        %561 = vmatpush.bf16.msra.mxu0 %v503
        %562 = vmatpush.bf16.msra.mxu0 %v502
        %563 = vmatpush.bf16.msra.mxu0 %v501
        %564 = vmatpush.bf16.msra.mxu0 %v500
        %565 = vmatmul.bf16.gmra.mxu0 %v510
        %v566 = vpop.f32.mrf.mxu0
        %v567 = vadd.f32 0.0, %v566
        %v568 = vpop.f32.mrf.mxu0
        %v569 = vadd.f32 0.0, %v568
        %570 = vmatmul.bf16.gmra.mxu0 %v513
        %v571 = vpop.f32.mrf.mxu0
        %v572 = vadd.f32 0.0, %v571
        %v573 = vpop.f32.mrf.mxu0
        %v574 = vadd.f32 0.0, %v573
        %575 = vmatmul.bf16.gmra.mxu0 %v516
        %v576 = vpop.f32.mrf.mxu0
        %v577 = vadd.f32 0.0, %v576
        %v578 = vpop.f32.mrf.mxu0
        %v579 = vadd.f32 0.0, %v578
        %580 = vmatmul.bf16.gmra.mxu0 %v519
        %v581 = vpop.f32.mrf.mxu0
        %v582 = vadd.f32 0.0, %v581
        %v583 = vpop.f32.mrf.mxu0
        %v584 = vadd.f32 0.0, %v583
        %585 = vmatmul.bf16.gmra.mxu0 %v522
        %v586 = vpop.f32.mrf.mxu0
        %v587 = vadd.f32 0.0, %v586
        %v588 = vpop.f32.mrf.mxu0
        %v589 = vadd.f32 0.0, %v588
        %590 = vmatmul.bf16.gmra.mxu0 %v525
        %v591 = vpop.f32.mrf.mxu0
        %v592 = vadd.f32 0.0, %v591
        %v593 = vpop.f32.mrf.mxu0
        %v594 = vadd.f32 0.0, %v593
        %595 = vmatmul.bf16.gmra.mxu0 %v528
        %v596 = vpop.f32.mrf.mxu0
        %v597 = vadd.f32 0.0, %v596
        %v598 = vpop.f32.mrf.mxu0
        %v599 = vadd.f32 0.0, %v598
        %600 = vmatmul.bf16.gmra.mxu0 %v531
        %v601 = vpop.f32.mrf.mxu0
        %v602 = vadd.f32 0.0, %v601
        %v603 = vpop.f32.mrf.mxu0
        %v604 = vadd.f32 0.0, %v603
        %605 = vmatmul.bf16.gmra.mxu0 %v534
        %v606 = vpop.f32.mrf.mxu0
        %v607 = vadd.f32 0.0, %v606
        %v608 = vpop.f32.mrf.mxu0
        %v609 = vadd.f32 0.0, %v608
        %610 = vmatmul.bf16.gmra.mxu0 %v537
        %v611 = vpop.f32.mrf.mxu0
        %v612 = vadd.f32 0.0, %v611
        %v613 = vpop.f32.mrf.mxu0
        %v614 = vadd.f32 0.0, %v613
        %615 = vmatmul.bf16.gmra.mxu0 %v540
        %v616 = vpop.f32.mrf.mxu0
        %v617 = vadd.f32 0.0, %v616
        %v618 = vpop.f32.mrf.mxu0
        %v619 = vadd.f32 0.0, %v618
        %620 = vmatmul.bf16.gmra.mxu0 %v543
        %v621 = vpop.f32.mrf.mxu0
        %v622 = vadd.f32 0.0, %v621
        %v623 = vpop.f32.mrf.mxu0
        %v624 = vadd.f32 0.0, %v623
        %625 = vmatmul.bf16.gmra.mxu0 %v546
        %v626 = vpop.f32.mrf.mxu0
        %v627 = vadd.f32 0.0, %v626
        %v628 = vpop.f32.mrf.mxu0
        %v629 = vadd.f32 0.0, %v628
        %630 = vmatmul.bf16.gmra.mxu0 %v549
        %v631 = vpop.f32.mrf.mxu0
        %v632 = vadd.f32 0.0, %v631
        %v633 = vpop.f32.mrf.mxu0
        %v634 = vadd.f32 0.0, %v633
        %635 = vmatmul.bf16.gmra.mxu0 %v552
        %v636 = vpop.f32.mrf.mxu0
        %v637 = vadd.f32 0.0, %v636
        %v638 = vpop.f32.mrf.mxu0
        %v639 = vadd.f32 0.0, %v638
        %640 = vmatmul.bf16.gmra.mxu0 %v555
        %v641 = vpop.f32.mrf.mxu0
        %v642 = vadd.f32 0.0, %v641
        %v643 = vpop.f32.mrf.mxu0
        %v644 = vadd.f32 0.0, %v643
        %645 = vdwg.mxu0
        %v646 = vadd.f32 %v332, %v567
        %v647 = vadd.f32 %v333, %v569
        %v648 = vadd.f32 %v334, %v572
        %v649 = vadd.f32 %v335, %v574
        %v650 = vadd.f32 %v336, %v577
        %v651 = vadd.f32 %v337, %v579
        %v652 = vadd.f32 %v338, %v582
        %v653 = vadd.f32 %v339, %v584
        %v654 = vadd.f32 %v340, %v587
        %v655 = vadd.f32 %v341, %v589
        %v656 = vadd.f32 %v342, %v592
        %v657 = vadd.f32 %v343, %v594
        %v658 = vadd.f32 %v344, %v597
        %v659 = vadd.f32 %v345, %v599
        %v660 = vadd.f32 %v346, %v602
        %v661 = vadd.f32 %v347, %v604
        %v662 = vadd.f32 %v348, %v607
        %v663 = vadd.f32 %v349, %v609
        %v664 = vadd.f32 %v350, %v612
        %v665 = vadd.f32 %v351, %v614
        %v666 = vadd.f32 %v352, %v617
        %v667 = vadd.f32 %v353, %v619
        %v668 = vadd.f32 %v354, %v622
        %v669 = vadd.f32 %v355, %v624
        %v670 = vadd.f32 %v356, %v627
        %v671 = vadd.f32 %v357, %v629
        %v672 = vadd.f32 %v358, %v632
        %v673 = vadd.f32 %v359, %v634
        %v674 = vadd.f32 %v360, %v637
        %v675 = vadd.f32 %v361, %v639
        %v676 = vadd.f32 %v362, %v642
        %v677 = vadd.f32 %v363, %v644
        %vm678 = vcmask 64512
        %679 = vst.msk [vmem:[#allocation2] sm:$0xff] %vm678, %v646
        %680 = vst.msk [vmem:[#allocation2 + $0x8] sm:$0xff] %vm678, %v647
        %681 = vst.msk [vmem:[#allocation2 + $0x10] sm:$0xff] %vm678, %v648
        %682 = vst.msk [vmem:[#allocation2 + $0x18] sm:$0xff] %vm678, %v649
        %683 = vst.msk [vmem:[#allocation2 + $0x20] sm:$0xff] %vm678, %v650
        %684 = vst.msk [vmem:[#allocation2 + $0x28] sm:$0xff] %vm678, %v651
        %685 = vst.msk [vmem:[#allocation2 + $0x30] sm:$0xff] %vm678, %v652
        %686 = vst.msk [vmem:[#allocation2 + $0x38] sm:$0xff] %vm678, %v653
        %687 = vst.msk [vmem:[#allocation2 + $0x40] sm:$0xff] %vm678, %v654
        %688 = vst.msk [vmem:[#allocation2 + $0x48] sm:$0xff] %vm678, %v655
        %689 = vst.msk [vmem:[#allocation2 + $0x50] sm:$0xff] %vm678, %v656
        %690 = vst.msk [vmem:[#allocation2 + $0x58] sm:$0xff] %vm678, %v657
        %691 = vst.msk [vmem:[#allocation2 + $0x60] sm:$0xff] %vm678, %v658
        %692 = vst.msk [vmem:[#allocation2 + $0x68] sm:$0xff] %vm678, %v659
        %693 = vst.msk [vmem:[#allocation2 + $0x70] sm:$0xff] %vm678, %v660
        %694 = vst.msk [vmem:[#allocation2 + $0x78] sm:$0xff] %vm678, %v661
        %695 = vst.msk [vmem:[#allocation2 + $0x80] sm:$0xff] %vm678, %v662
        %696 = vst.msk [vmem:[#allocation2 + $0x88] sm:$0xff] %vm678, %v663
        %697 = vst.msk [vmem:[#allocation2 + $0x90] sm:$0xff] %vm678, %v664
        %698 = vst.msk [vmem:[#allocation2 + $0x98] sm:$0xff] %vm678, %v665
        %699 = vst.msk [vmem:[#allocation2 + $0xa0] sm:$0xff] %vm678, %v666
        %700 = vst.msk [vmem:[#allocation2 + $0xa8] sm:$0xff] %vm678, %v667
        %701 = vst.msk [vmem:[#allocation2 + $0xb0] sm:$0xff] %vm678, %v668
        %702 = vst.msk [vmem:[#allocation2 + $0xb8] sm:$0xff] %vm678, %v669
        %703 = vst.msk [vmem:[#allocation2 + $0xc0] sm:$0xff] %vm678, %v670
        %704 = vst.msk [vmem:[#allocation2 + $0xc8] sm:$0xff] %vm678, %v671
        %705 = vst.msk [vmem:[#allocation2 + $0xd0] sm:$0xff] %vm678, %v672
        %706 = vst.msk [vmem:[#allocation2 + $0xd8] sm:$0xff] %vm678, %v673
        %707 = vst.msk [vmem:[#allocation2 + $0xe0] sm:$0xff] %vm678, %v674
        %708 = vst.msk [vmem:[#allocation2 + $0xe8] sm:$0xff] %vm678, %v675
        %709 = vst.msk [vmem:[#allocation2 + $0xf0] sm:$0xff] %vm678, %v676
        %710 = vst.msk [vmem:[#allocation2 + $0xf8] sm:$0xff] %vm678, %v677
        // Predicated region
        $region37: #{decoder_bn_forward.9} parent=27 // pred_check
          %p711 = pneg %p295
        $region38: #{decoder_bn_forward.9} parent=27 // pred_check_branch
          %713 = sbr.rel (%p711) target = $region40
        $region39: #{decoder_bn_forward.9} parent=27 // pred_region
          %v714 = vld [vmem:[#allocation2] sm:$0xff]
          %v715 = vld [vmem:[#allocation2 + $0x8] sm:$0xff]
          %v716 = vld [vmem:[#allocation2 + $0x10] sm:$0xff]
          %v717 = vld [vmem:[#allocation2 + $0x18] sm:$0xff]
          %v718 = vld [vmem:[#allocation2 + $0x20] sm:$0xff]
          %v719 = vld [vmem:[#allocation2 + $0x28] sm:$0xff]
          %v720 = vld [vmem:[#allocation2 + $0x30] sm:$0xff]
          %v721 = vld [vmem:[#allocation2 + $0x38] sm:$0xff]
          %v722 = vld [vmem:[#allocation2 + $0x40] sm:$0xff]
          %v723 = vld [vmem:[#allocation2 + $0x48] sm:$0xff]
          %v724 = vld [vmem:[#allocation2 + $0x50] sm:$0xff]
          %v725 = vld [vmem:[#allocation2 + $0x58] sm:$0xff]
          %v726 = vld [vmem:[#allocation2 + $0x60] sm:$0xff]
          %v727 = vld [vmem:[#allocation2 + $0x68] sm:$0xff]
          %v728 = vld [vmem:[#allocation2 + $0x70] sm:$0xff]
          %v729 = vld [vmem:[#allocation2 + $0x78] sm:$0xff]
          %v730 = vld [vmem:[#allocation2 + $0x80] sm:$0xff]
          %v731 = vld [vmem:[#allocation2 + $0x88] sm:$0xff]
          %v732 = vld [vmem:[#allocation2 + $0x90] sm:$0xff]
          %v733 = vld [vmem:[#allocation2 + $0x98] sm:$0xff]
          %v734 = vld [vmem:[#allocation2 + $0xa0] sm:$0xff]
          %v735 = vld [vmem:[#allocation2 + $0xa8] sm:$0xff]
          %v736 = vld [vmem:[#allocation2 + $0xb0] sm:$0xff]
          %v737 = vld [vmem:[#allocation2 + $0xb8] sm:$0xff]
          %v738 = vld [vmem:[#allocation2 + $0xc0] sm:$0xff]
          %v739 = vld [vmem:[#allocation2 + $0xc8] sm:$0xff]
          %v740 = vld [vmem:[#allocation2 + $0xd0] sm:$0xff]
          %v741 = vld [vmem:[#allocation2 + $0xd8] sm:$0xff]
          %v742 = vld [vmem:[#allocation2 + $0xe0] sm:$0xff]
          %v743 = vld [vmem:[#allocation2 + $0xe8] sm:$0xff]
          %v744 = vld [vmem:[#allocation2 + $0xf0] sm:$0xff]
          %v745 = vld [vmem:[#allocation2 + $0xf8] sm:$0xff]
          %v746 = vpack.c.bf16 %v714, %v714
          %v747 = vpack.c.bf16 %v715, %v715
          %v748 = vpack.c.bf16 %v716, %v716
          %v749 = vpack.c.bf16 %v717, %v717
          %v750 = vpack.c.bf16 %v718, %v718
          %v751 = vpack.c.bf16 %v719, %v719
          %v752 = vpack.c.bf16 %v720, %v720
          %v753 = vpack.c.bf16 %v721, %v721
          %v754 = vpack.c.bf16 %v722, %v722
          %v755 = vpack.c.bf16 %v723, %v723
          %v756 = vpack.c.bf16 %v724, %v724
          %v757 = vpack.c.bf16 %v725, %v725
          %v758 = vpack.c.bf16 %v726, %v726
          %v759 = vpack.c.bf16 %v727, %v727
          %v760 = vpack.c.bf16 %v728, %v728
          %v761 = vpack.c.bf16 %v729, %v729
          %v762 = vpack.c.bf16 %v730, %v730
          %v763 = vpack.c.bf16 %v731, %v731
          %v764 = vpack.c.bf16 %v732, %v732
          %v765 = vpack.c.bf16 %v733, %v733
          %v766 = vpack.c.bf16 %v734, %v734
          %v767 = vpack.c.bf16 %v735, %v735
          %v768 = vpack.c.bf16 %v736, %v736
          %v769 = vpack.c.bf16 %v737, %v737
          %v770 = vpack.c.bf16 %v738, %v738
          %v771 = vpack.c.bf16 %v739, %v739
          %v772 = vpack.c.bf16 %v740, %v740
          %v773 = vpack.c.bf16 %v741, %v741
          %v774 = vpack.c.bf16 %v742, %v742
          %v775 = vpack.c.bf16 %v743, %v743
          %v776 = vpack.c.bf16 %v744, %v744
          %v777 = vpack.c.bf16 %v745, %v745
          %vm778 = vcmask 60416
          %779 = vst.msk [vmem:[%s285] sm:$0xf] %vm778, %v746
          %780 = vst.msk [vmem:[%s285 + $0x4] sm:$0xf] %vm778, %v747
          %781 = vst.msk [vmem:[%s285 + $0x8] sm:$0xf] %vm778, %v748
          %782 = vst.msk [vmem:[%s285 + $0xc] sm:$0xf] %vm778, %v749
          %783 = vst.msk [vmem:[%s285 + $0x10] sm:$0xf] %vm778, %v750
          %784 = vst.msk [vmem:[%s285 + $0x14] sm:$0xf] %vm778, %v751
          %785 = vst.msk [vmem:[%s285 + $0x18] sm:$0xf] %vm778, %v752
          %786 = vst.msk [vmem:[%s285 + $0x1c] sm:$0xf] %vm778, %v753
          %787 = vst.msk [vmem:[%s285 + $0x20] sm:$0xf] %vm778, %v754
          %788 = vst.msk [vmem:[%s285 + $0x24] sm:$0xf] %vm778, %v755
          %789 = vst.msk [vmem:[%s285 + $0x28] sm:$0xf] %vm778, %v756
          %790 = vst.msk [vmem:[%s285 + $0x2c] sm:$0xf] %vm778, %v757
          %791 = vst.msk [vmem:[%s285 + $0x30] sm:$0xf] %vm778, %v758
          %792 = vst.msk [vmem:[%s285 + $0x34] sm:$0xf] %vm778, %v759
          %793 = vst.msk [vmem:[%s285 + $0x38] sm:$0xf] %vm778, %v760
          %794 = vst.msk [vmem:[%s285 + $0x3c] sm:$0xf] %vm778, %v761
          %795 = vst.msk [vmem:[%s285 + $0x40] sm:$0xf] %vm778, %v762
          %796 = vst.msk [vmem:[%s285 + $0x44] sm:$0xf] %vm778, %v763
          %797 = vst.msk [vmem:[%s285 + $0x48] sm:$0xf] %vm778, %v764
          %798 = vst.msk [vmem:[%s285 + $0x4c] sm:$0xf] %vm778, %v765
          %799 = vst.msk [vmem:[%s285 + $0x50] sm:$0xf] %vm778, %v766
          %800 = vst.msk [vmem:[%s285 + $0x54] sm:$0xf] %vm778, %v767
          %801 = vst.msk [vmem:[%s285 + $0x58] sm:$0xf] %vm778, %v768
          %802 = vst.msk [vmem:[%s285 + $0x5c] sm:$0xf] %vm778, %v769
          %803 = vst.msk [vmem:[%s285 + $0x60] sm:$0xf] %vm778, %v770
          %804 = vst.msk [vmem:[%s285 + $0x64] sm:$0xf] %vm778, %v771
          %805 = vst.msk [vmem:[%s285 + $0x68] sm:$0xf] %vm778, %v772
          %806 = vst.msk [vmem:[%s285 + $0x6c] sm:$0xf] %vm778, %v773
          %807 = vst.msk [vmem:[%s285 + $0x70] sm:$0xf] %vm778, %v774
          %808 = vst.msk [vmem:[%s285 + $0x74] sm:$0xf] %vm778, %v775
          %809 = vst.msk [vmem:[%s285 + $0x78] sm:$0xf] %vm778, %v776
          %810 = vst.msk [vmem:[%s285 + $0x7c] sm:$0xf] %vm778, %v777
          %v811 = vsel %vm678, %v714, 0.0
          %v812 = vsel %vm678, %v715, 0.0
          %v813 = vadd.f32 %v811, %v812
          %v814 = vsel %vm678, %v716, 0.0
          %v815 = vadd.f32 %v813, %v814
          %v816 = vsel %vm678, %v717, 0.0
          %v817 = vadd.f32 %v815, %v816
          %v818 = vsel %vm678, %v718, 0.0
          %v819 = vadd.f32 %v817, %v818
          %v820 = vsel %vm678, %v719, 0.0
          %v821 = vadd.f32 %v819, %v820
          %v822 = vsel %vm678, %v720, 0.0
          %v823 = vadd.f32 %v821, %v822
          %v824 = vsel %vm678, %v721, 0.0
          %v825 = vadd.f32 %v823, %v824
          %v826 = vsel %vm678, %v722, 0.0
          %v827 = vadd.f32 %v825, %v826
          %v828 = vsel %vm678, %v723, 0.0
          %v829 = vadd.f32 %v827, %v828
          %v830 = vsel %vm678, %v724, 0.0
          %v831 = vadd.f32 %v829, %v830
          %v832 = vsel %vm678, %v725, 0.0
          %v833 = vadd.f32 %v831, %v832
          %v834 = vsel %vm678, %v726, 0.0
          %v835 = vadd.f32 %v833, %v834
          %v836 = vsel %vm678, %v727, 0.0
          %v837 = vadd.f32 %v835, %v836
          %v838 = vsel %vm678, %v728, 0.0
          %v839 = vadd.f32 %v837, %v838
          %v840 = vsel %vm678, %v729, 0.0
          %v841 = vadd.f32 %v839, %v840
          %v842 = vsel %vm678, %v730, 0.0
          %v843 = vadd.f32 %v841, %v842
          %v844 = vsel %vm678, %v731, 0.0
          %v845 = vadd.f32 %v843, %v844
          %v846 = vsel %vm678, %v732, 0.0
          %v847 = vadd.f32 %v845, %v846
          %v848 = vsel %vm678, %v733, 0.0
          %v849 = vadd.f32 %v847, %v848
          %v850 = vsel %vm678, %v734, 0.0
          %v851 = vadd.f32 %v849, %v850
          %v852 = vsel %vm678, %v735, 0.0
          %v853 = vadd.f32 %v851, %v852
          %v854 = vsel %vm678, %v736, 0.0
          %v855 = vadd.f32 %v853, %v854
          %v856 = vsel %vm678, %v737, 0.0
          %v857 = vadd.f32 %v855, %v856
          %v858 = vsel %vm678, %v738, 0.0
          %v859 = vadd.f32 %v857, %v858
          %v860 = vsel %vm678, %v739, 0.0
          %v861 = vadd.f32 %v859, %v860
          %v862 = vsel %vm678, %v740, 0.0
          %v863 = vadd.f32 %v861, %v862
          %v864 = vsel %vm678, %v741, 0.0
          %v865 = vadd.f32 %v863, %v864
          %v866 = vsel %vm678, %v742, 0.0
          %v867 = vadd.f32 %v865, %v866
          %v868 = vsel %vm678, %v743, 0.0
          %v869 = vadd.f32 %v867, %v868
          %v870 = vsel %vm678, %v744, 0.0
          %v871 = vadd.f32 %v869, %v870
          %v872 = vsel %vm678, %v745, 0.0
          %v873 = vadd.f32 %v871, %v872
          %v874 = vrot.slane %v873, 4
          %v875 = vadd.f32 %v873, %v874
          %v876 = vrot.slane %v875, 2
          %v877 = vadd.f32 %v875, %v876
          %v878 = vrot.slane %v877, 1
          %v879 = vadd.f32 %v877, %v878
          %v880 = vmul.f32 %v714, %v714
          %v881 = vmul.f32 %v715, %v715
          %v882 = vmul.f32 %v716, %v716
          %v883 = vmul.f32 %v717, %v717
          %v884 = vmul.f32 %v718, %v718
          %v885 = vmul.f32 %v719, %v719
          %v886 = vmul.f32 %v720, %v720
          %v887 = vmul.f32 %v721, %v721
          %v888 = vmul.f32 %v722, %v722
          %v889 = vmul.f32 %v723, %v723
          %v890 = vmul.f32 %v724, %v724
          %v891 = vmul.f32 %v725, %v725
          %v892 = vmul.f32 %v726, %v726
          %v893 = vmul.f32 %v727, %v727
          %v894 = vmul.f32 %v728, %v728
          %v895 = vmul.f32 %v729, %v729
          %v896 = vmul.f32 %v730, %v730
          %v897 = vmul.f32 %v731, %v731
          %v898 = vmul.f32 %v732, %v732
          %v899 = vmul.f32 %v733, %v733
          %v900 = vmul.f32 %v734, %v734
          %v901 = vmul.f32 %v735, %v735
          %v902 = vmul.f32 %v736, %v736
          %v903 = vmul.f32 %v737, %v737
          %v904 = vmul.f32 %v738, %v738
          %v905 = vmul.f32 %v739, %v739
          %v906 = vmul.f32 %v740, %v740
          %v907 = vmul.f32 %v741, %v741
          %v908 = vmul.f32 %v742, %v742
          %v909 = vmul.f32 %v743, %v743
          %v910 = vmul.f32 %v744, %v744
          %v911 = vmul.f32 %v745, %v745
          %v912 = vsel %vm678, %v880, 0.0
          %v913 = vsel %vm678, %v881, 0.0
          %v914 = vadd.f32 %v912, %v913
          %v915 = vsel %vm678, %v882, 0.0
          %v916 = vadd.f32 %v914, %v915
          %v917 = vsel %vm678, %v883, 0.0
          %v918 = vadd.f32 %v916, %v917
          %v919 = vsel %vm678, %v884, 0.0
          %v920 = vadd.f32 %v918, %v919
          %v921 = vsel %vm678, %v885, 0.0
          %v922 = vadd.f32 %v920, %v921
          %v923 = vsel %vm678, %v886, 0.0
          %v924 = vadd.f32 %v922, %v923
          %v925 = vsel %vm678, %v887, 0.0
          %v926 = vadd.f32 %v924, %v925
          %v927 = vsel %vm678, %v888, 0.0
          %v928 = vadd.f32 %v926, %v927
          %v929 = vsel %vm678, %v889, 0.0
          %v930 = vadd.f32 %v928, %v929
          %v931 = vsel %vm678, %v890, 0.0
          %v932 = vadd.f32 %v930, %v931
          %v933 = vsel %vm678, %v891, 0.0
          %v934 = vadd.f32 %v932, %v933
          %v935 = vsel %vm678, %v892, 0.0
          %v936 = vadd.f32 %v934, %v935
          %v937 = vsel %vm678, %v893, 0.0
          %v938 = vadd.f32 %v936, %v937
          %v939 = vsel %vm678, %v894, 0.0
          %v940 = vadd.f32 %v938, %v939
          %v941 = vsel %vm678, %v895, 0.0
          %v942 = vadd.f32 %v940, %v941
          %v943 = vsel %vm678, %v896, 0.0
          %v944 = vadd.f32 %v942, %v943
          %v945 = vsel %vm678, %v897, 0.0
          %v946 = vadd.f32 %v944, %v945
          %v947 = vsel %vm678, %v898, 0.0
          %v948 = vadd.f32 %v946, %v947
          %v949 = vsel %vm678, %v899, 0.0
          %v950 = vadd.f32 %v948, %v949
          %v951 = vsel %vm678, %v900, 0.0
          %v952 = vadd.f32 %v950, %v951
          %v953 = vsel %vm678, %v901, 0.0
          %v954 = vadd.f32 %v952, %v953
          %v955 = vsel %vm678, %v902, 0.0
          %v956 = vadd.f32 %v954, %v955
          %v957 = vsel %vm678, %v903, 0.0
          %v958 = vadd.f32 %v956, %v957
          %v959 = vsel %vm678, %v904, 0.0
          %v960 = vadd.f32 %v958, %v959
          %v961 = vsel %vm678, %v905, 0.0
          %v962 = vadd.f32 %v960, %v961
          %v963 = vsel %vm678, %v906, 0.0
          %v964 = vadd.f32 %v962, %v963
          %v965 = vsel %vm678, %v907, 0.0
          %v966 = vadd.f32 %v964, %v965
          %v967 = vsel %vm678, %v908, 0.0
          %v968 = vadd.f32 %v966, %v967
          %v969 = vsel %vm678, %v909, 0.0
          %v970 = vadd.f32 %v968, %v969
          %v971 = vsel %vm678, %v910, 0.0
          %v972 = vadd.f32 %v970, %v971
          %v973 = vsel %vm678, %v911, 0.0
          %v974 = vadd.f32 %v972, %v973
          %v975 = vrot.slane %v974, 4
          %v976 = vadd.f32 %v974, %v975
          %v977 = vrot.slane %v976, 2
          %v978 = vadd.f32 %v976, %v977
          %v979 = vrot.slane %v978, 1
          %v980 = vadd.f32 %v978, %v979
          %vm981 = vcmask 1040384
          %v982 = vsel %vm981, %v879, %v980
          %vm983 = vcmask 1041408
          %v984 = vsel %vm983, %v982, 0.0
          %985 = vst.msk [vmem:[%s293] sm:$0xff] %vm678, %v984
        $region40: #{decoder_bn_forward.9} parent=27 // pred_fallthru
          _
        %s986 = smul.u32 32, %s24
        %p987 = scmp.lt.s32.totalorder %s23, 3
        %s988 = scalar_select %p987, %s23, 3
        %p989 = scmp.lt.s32.totalorder %s986, 31
        %s990 = scalar_select %p989, %s986, 31
        %s991 = smul.addr %s988, 32
        %s992 = sadd.s32 %s990, %s991
        %s993 = smul.addr %s992, 4
        %s994 = scalar_lea.vmem %s2, %s993
        %p995 = scmp.lt.s32.totalorder %s23, 3
        %s996 = scalar_select %p995, %s23, 3
        %p997 = scmp.lt.s32.totalorder %s24, 0
        %s998 = scalar_select %p997, %s24, 0
        %s999 = sadd.s32 %s998, %s996
        %s1000 = smul.addr %s999, 8
        %s1001 = scalar_lea.vmem %s3, %s1000
        // Predicated region
        $region41: #{decoder_bn_forward.9} parent=27 // pred_check
          %p1002 = pneg %p115
        $region42: #{decoder_bn_forward.9} parent=27 // pred_check_branch
          %1004 = sbr.rel (%p1002) target = $region44
        $region43: #{decoder_bn_forward.9} parent=27 // pred_region
          %s1005 = smul.u32 32, %s24
        $region44: #{decoder_bn_forward.9} parent=27 // pred_fallthru
          _
        // Predicated region
        $region45: #{decoder_bn_forward.9} parent=27 // pred_check
          %p1006 = pneg %p143
        $region46: #{decoder_bn_forward.9} parent=27 // pred_check_branch
          %1008 = sbr.rel (%p1006) target = $region48
        $region47: #{decoder_bn_forward.9} parent=27 // pred_region
          _
        $region48: #{decoder_bn_forward.9} parent=27 // pred_fallthru
          _
      $region28: #{decoder_bn_forward.9} parent=5 // pred_fallthru
        _
      %p1009 = scmp.le.s32.totalorder 2, %s13
      // Predicated region
      $region49: #{decoder_bn_forward.9} parent=5 // pred_check
        %p1010 = pneg %p1009
      $region50: #{decoder_bn_forward.9} parent=5 // pred_check_branch
        %1012 = sbr.rel (%p1010) target = $region52
      $region51: #{decoder_bn_forward.9} parent=5 // pred_region
        %s1013 = ssub.s32 %s13, 2
        // Predicated region
        $region53: #{decoder_bn_forward.9} parent=51 // pred_check
          %p1014 = pneg %p121
        $region54: #{decoder_bn_forward.9} parent=51 // pred_check_branch
          %1016 = sbr.rel (%p1014) target = $region56
        $region55: #{decoder_bn_forward.9} parent=51 // pred_region
          %s1017 = smul.u32 32, %s27
          %p1018 = scmp.lt.s32.totalorder %s26, 3
          %s1019 = scalar_select %p1018, %s26, 3
          %p1020 = scmp.lt.s32.totalorder %s1017, 31
          %s1021 = scalar_select %p1020, %s1017, 31
          %s1022 = smul.addr %s1019, 32
          %s1023 = sadd.s32 %s1021, %s1022
          %s1024 = smul.addr %s1023, 4
          %s1025 = scalar_lea.vmem %s2, %s1024
        $region56: #{decoder_bn_forward.9} parent=51 // pred_fallthru
          _
        // Predicated region
        $region57: #{decoder_bn_forward.9} parent=51 // pred_check
          %p1026 = pneg %p149
        $region58: #{decoder_bn_forward.9} parent=51 // pred_check_branch
          %1028 = sbr.rel (%p1026) target = $region60
        $region59: #{decoder_bn_forward.9} parent=51 // pred_region
          %p1029 = scmp.lt.s32.totalorder %s26, 3
          %s1030 = scalar_select %p1029, %s26, 3
          %p1031 = scmp.lt.s32.totalorder %s27, 0
          %s1032 = scalar_select %p1031, %s27, 0
          %s1033 = sadd.s32 %s1032, %s1030
          %s1034 = smul.addr %s1033, 8
          %s1035 = scalar_lea.vmem %s3, %s1034
        $region60: #{decoder_bn_forward.9} parent=51 // pred_fallthru
          _
      $region52: #{decoder_bn_forward.9} parent=5 // pred_fallthru
        _
    $region6: #{decoder_bn_forward.9} parent=1 // loop_footer
      %s17 = sadd.s32 1, %s13
    $region7: #{decoder_bn_forward.9} parent=1 // loop_footer_branch
      %12 = sbr.rel target = $region3
    $region8: #{decoder_bn_forward.9} parent=1 // loop_exit
      _
    %1036 = vsyncpa [#allocation4], 1
    %s1037 = scalar_lea.sflag [#allocation4], 1
    %1038 = vsyncpa %s1037, 1

// kernel: decoder_bn_forward.10
$region0: #{decoder_bn_forward.10}
  #allocation0 [shape = 'u32[]', space=smem, size = 0x4, offset = 0x4, fixed_abs, tag = 'smem constant byte address 0x4 - core index']
  #allocation1 [shape = 'u32[72,128]{1,0:T(1,128)}', space=vmem, size = 0x9000, scoped, tag = 'internal scratch']
  %s0 = inlined_call_operand.vmem [shape: bf16[1024,8], index: 0, kind: input, shape index: {}]
  %s1 = inlined_call_operand.vmem [shape: f32[1,8], index: 1, kind: input, shape index: {}]
  %s2 = inlined_call_operand.vmem [shape: f32[1,8], index: 2, kind: input, shape index: {}]
  %s3 = inlined_call_operand.vmem [shape: bf16[1024,8], index: 3, kind: output, shape index: {}]
  %s4 = sld [smem:[#allocation0]]
  $region22: #{decoder_bn_forward.10} parent=0
    _
  %s6 = ssub.s32 1, %s4
  %s7 = scalar_select 0, %s6, %s4
  // Predicated region
  $region2: #{decoder_bn_forward.10} parent=0 // pred_check
    _
  $region3: #{decoder_bn_forward.10} parent=0 // pred_check_branch
    %9 = sbr.rel (0) target = $region5
  $region4: #{decoder_bn_forward.10} parent=0 // pred_region
    _
  $region5: #{decoder_bn_forward.10} parent=0 // pred_fallthru
    _
  // Predicated region
  $region6: #{decoder_bn_forward.10} parent=0 // pred_check
    _
  $region7: #{decoder_bn_forward.10} parent=0 // pred_check_branch
    %11 = sbr.rel (0) target = $region9
  $region8: #{decoder_bn_forward.10} parent=0 // pred_region
    _
  $region9: #{decoder_bn_forward.10} parent=0 // pred_fallthru
    _
  // Predicated region
  $region10: #{decoder_bn_forward.10} parent=0 // pred_check
    _
  $region11: #{decoder_bn_forward.10} parent=0 // pred_check_branch
    %13 = sbr.rel (0) target = $region13
  $region12: #{decoder_bn_forward.10} parent=0 // pred_region
    _
  $region13: #{decoder_bn_forward.10} parent=0 // pred_fallthru
    _
  %v14 = vld [vmem:[%s0] sm:$0xf]
  %v15 = vld [vmem:[%s0 + $0x4] sm:$0xf]
  %v16 = vld [vmem:[%s0 + $0x8] sm:$0xf]
  %v17 = vld [vmem:[%s0 + $0xc] sm:$0xf]
  %v18 = vld [vmem:[%s0 + $0x10] sm:$0xf]
  %v19 = vld [vmem:[%s0 + $0x14] sm:$0xf]
  %v20 = vld [vmem:[%s0 + $0x18] sm:$0xf]
  %v21 = vld [vmem:[%s0 + $0x1c] sm:$0xf]
  %v22 = vld [vmem:[%s0 + $0x20] sm:$0xf]
  %v23 = vld [vmem:[%s0 + $0x24] sm:$0xf]
  %v24 = vld [vmem:[%s0 + $0x28] sm:$0xf]
  %v25 = vld [vmem:[%s0 + $0x2c] sm:$0xf]
  %v26 = vld [vmem:[%s0 + $0x30] sm:$0xf]
  %v27 = vld [vmem:[%s0 + $0x34] sm:$0xf]
  %v28 = vld [vmem:[%s0 + $0x38] sm:$0xf]
  %v29 = vld [vmem:[%s0 + $0x3c] sm:$0xf]
  %v30 = vld [vmem:[%s0 + $0x40] sm:$0xf]
  %v31 = vld [vmem:[%s0 + $0x44] sm:$0xf]
  %v32 = vld [vmem:[%s0 + $0x48] sm:$0xf]
  %v33 = vld [vmem:[%s0 + $0x4c] sm:$0xf]
  %v34 = vld [vmem:[%s0 + $0x50] sm:$0xf]
  %v35 = vld [vmem:[%s0 + $0x54] sm:$0xf]
  %v36 = vld [vmem:[%s0 + $0x58] sm:$0xf]
  %v37 = vld [vmem:[%s0 + $0x5c] sm:$0xf]
  %v38 = vld [vmem:[%s0 + $0x60] sm:$0xf]
  %v39 = vld [vmem:[%s0 + $0x64] sm:$0xf]
  %v40 = vld [vmem:[%s0 + $0x68] sm:$0xf]
  %v41 = vld [vmem:[%s0 + $0x6c] sm:$0xf]
  %v42 = vld [vmem:[%s0 + $0x70] sm:$0xf]
  %v43 = vld [vmem:[%s0 + $0x74] sm:$0xf]
  %v44 = vld [vmem:[%s0 + $0x78] sm:$0xf]
  %v45 = vld [vmem:[%s0 + $0x7c] sm:$0xf]
  %v46 = vld [vmem:[%s0 + $0x80] sm:$0xf]
  %v47 = vld [vmem:[%s0 + $0x84] sm:$0xf]
  %v48 = vld [vmem:[%s0 + $0x88] sm:$0xf]
  %v49 = vld [vmem:[%s0 + $0x8c] sm:$0xf]
  %v50 = vld [vmem:[%s0 + $0x90] sm:$0xf]
  %v51 = vld [vmem:[%s0 + $0x94] sm:$0xf]
  %v52 = vld [vmem:[%s0 + $0x98] sm:$0xf]
  %v53 = vld [vmem:[%s0 + $0x9c] sm:$0xf]
  %v54 = vld [vmem:[%s0 + $0xa0] sm:$0xf]
  %v55 = vld [vmem:[%s0 + $0xa4] sm:$0xf]
  %v56 = vld [vmem:[%s0 + $0xa8] sm:$0xf]
  %v57 = vld [vmem:[%s0 + $0xac] sm:$0xf]
  %v58 = vld [vmem:[%s0 + $0xb0] sm:$0xf]
  %v59 = vld [vmem:[%s0 + $0xb4] sm:$0xf]
  %v60 = vld [vmem:[%s0 + $0xb8] sm:$0xf]
  %v61 = vld [vmem:[%s0 + $0xbc] sm:$0xf]
  %v62 = vld [vmem:[%s0 + $0xc0] sm:$0xf]
  %v63 = vld [vmem:[%s0 + $0xc4] sm:$0xf]
  %v64 = vld [vmem:[%s0 + $0xc8] sm:$0xf]
  %v65 = vld [vmem:[%s0 + $0xcc] sm:$0xf]
  %v66 = vld [vmem:[%s0 + $0xd0] sm:$0xf]
  %v67 = vld [vmem:[%s0 + $0xd4] sm:$0xf]
  %v68 = vld [vmem:[%s0 + $0xd8] sm:$0xf]
  %v69 = vld [vmem:[%s0 + $0xdc] sm:$0xf]
  %v70 = vld [vmem:[%s0 + $0xe0] sm:$0xf]
  %v71 = vld [vmem:[%s0 + $0xe4] sm:$0xf]
  %v72 = vld [vmem:[%s0 + $0xe8] sm:$0xf]
  %v73 = vld [vmem:[%s0 + $0xec] sm:$0xf]
  %v74 = vld [vmem:[%s0 + $0xf0] sm:$0xf]
  %v75 = vld [vmem:[%s0 + $0xf4] sm:$0xf]
  %v76 = vld [vmem:[%s0 + $0xf8] sm:$0xf]
  %v77 = vld [vmem:[%s0 + $0xfc] sm:$0xf]
  %v78 = vld [vmem:[%s0 + $0x100] sm:$0xf]
  %v79 = vld [vmem:[%s0 + $0x104] sm:$0xf]
  %v80 = vld [vmem:[%s0 + $0x108] sm:$0xf]
  %v81 = vld [vmem:[%s0 + $0x10c] sm:$0xf]
  %v82 = vld [vmem:[%s0 + $0x110] sm:$0xf]
  %v83 = vld [vmem:[%s0 + $0x114] sm:$0xf]
  %v84 = vld [vmem:[%s0 + $0x118] sm:$0xf]
  %v85 = vld [vmem:[%s0 + $0x11c] sm:$0xf]
  %v86 = vld [vmem:[%s0 + $0x120] sm:$0xf]
  %v87 = vld [vmem:[%s0 + $0x124] sm:$0xf]
  %v88 = vld [vmem:[%s0 + $0x128] sm:$0xf]
  %v89 = vld [vmem:[%s0 + $0x12c] sm:$0xf]
  %v90 = vld [vmem:[%s0 + $0x130] sm:$0xf]
  %v91 = vld [vmem:[%s0 + $0x134] sm:$0xf]
  %v92 = vld [vmem:[%s0 + $0x138] sm:$0xf]
  %v93 = vld [vmem:[%s0 + $0x13c] sm:$0xf]
  %v94 = vld [vmem:[%s0 + $0x140] sm:$0xf]
  %v95 = vld [vmem:[%s0 + $0x144] sm:$0xf]
  %v96 = vld [vmem:[%s0 + $0x148] sm:$0xf]
  %v97 = vld [vmem:[%s0 + $0x14c] sm:$0xf]
  %v98 = vld [vmem:[%s0 + $0x150] sm:$0xf]
  %v99 = vld [vmem:[%s0 + $0x154] sm:$0xf]
  %v100 = vld [vmem:[%s0 + $0x158] sm:$0xf]
  %v101 = vld [vmem:[%s0 + $0x15c] sm:$0xf]
  %v102 = vld [vmem:[%s0 + $0x160] sm:$0xf]
  %v103 = vld [vmem:[%s0 + $0x164] sm:$0xf]
  %v104 = vld [vmem:[%s0 + $0x168] sm:$0xf]
  %v105 = vld [vmem:[%s0 + $0x16c] sm:$0xf]
  %v106 = vld [vmem:[%s0 + $0x170] sm:$0xf]
  %v107 = vld [vmem:[%s0 + $0x174] sm:$0xf]
  %v108 = vld [vmem:[%s0 + $0x178] sm:$0xf]
  %v109 = vld [vmem:[%s0 + $0x17c] sm:$0xf]
  %v110 = vld [vmem:[%s0 + $0x180] sm:$0xf]
  %v111 = vld [vmem:[%s0 + $0x184] sm:$0xf]
  %v112 = vld [vmem:[%s0 + $0x188] sm:$0xf]
  %v113 = vld [vmem:[%s0 + $0x18c] sm:$0xf]
  %v114 = vld [vmem:[%s0 + $0x190] sm:$0xf]
  %v115 = vld [vmem:[%s0 + $0x194] sm:$0xf]
  %v116 = vld [vmem:[%s0 + $0x198] sm:$0xf]
  %v117 = vld [vmem:[%s0 + $0x19c] sm:$0xf]
  %v118 = vld [vmem:[%s0 + $0x1a0] sm:$0xf]
  %v119 = vld [vmem:[%s0 + $0x1a4] sm:$0xf]
  %v120 = vld [vmem:[%s0 + $0x1a8] sm:$0xf]
  %v121 = vld [vmem:[%s0 + $0x1ac] sm:$0xf]
  %v122 = vld [vmem:[%s0 + $0x1b0] sm:$0xf]
  %v123 = vld [vmem:[%s0 + $0x1b4] sm:$0xf]
  %v124 = vld [vmem:[%s0 + $0x1b8] sm:$0xf]
  %v125 = vld [vmem:[%s0 + $0x1bc] sm:$0xf]
  %v126 = vld [vmem:[%s0 + $0x1c0] sm:$0xf]
  %v127 = vld [vmem:[%s0 + $0x1c4] sm:$0xf]
  %v128 = vld [vmem:[%s0 + $0x1c8] sm:$0xf]
  %v129 = vld [vmem:[%s0 + $0x1cc] sm:$0xf]
  %v130 = vld [vmem:[%s0 + $0x1d0] sm:$0xf]
  %v131 = vld [vmem:[%s0 + $0x1d4] sm:$0xf]
  %v132 = vld [vmem:[%s0 + $0x1d8] sm:$0xf]
  %v133 = vld [vmem:[%s0 + $0x1dc] sm:$0xf]
  %v134 = vld [vmem:[%s0 + $0x1e0] sm:$0xf]
  %v135 = vld [vmem:[%s0 + $0x1e4] sm:$0xf]
  %v136 = vld [vmem:[%s0 + $0x1e8] sm:$0xf]
  %v137 = vld [vmem:[%s0 + $0x1ec] sm:$0xf]
  %v138 = vld [vmem:[%s0 + $0x1f0] sm:$0xf]
  %v139 = vld [vmem:[%s0 + $0x1f4] sm:$0xf]
  %v140 = vld [vmem:[%s0 + $0x1f8] sm:$0xf]
  %v141 = vld [vmem:[%s0 + $0x1fc] sm:$0xf]
  %v142 = vunpack.c.l.bf16 %v14
  %v143 = vunpack.c.l.bf16 %v15
  %v144 = vunpack.c.l.bf16 %v16
  %v145 = vunpack.c.l.bf16 %v17
  %v146 = vunpack.c.l.bf16 %v18
  %v147 = vunpack.c.l.bf16 %v19
  %v148 = vunpack.c.l.bf16 %v20
  %v149 = vunpack.c.l.bf16 %v21
  %v150 = vunpack.c.l.bf16 %v22
  %v151 = vunpack.c.l.bf16 %v23
  %v152 = vunpack.c.l.bf16 %v24
  %v153 = vunpack.c.l.bf16 %v25
  %v154 = vunpack.c.l.bf16 %v26
  %v155 = vunpack.c.l.bf16 %v27
  %v156 = vunpack.c.l.bf16 %v28
  %v157 = vunpack.c.l.bf16 %v29
  %v158 = vunpack.c.l.bf16 %v30
  %v159 = vunpack.c.l.bf16 %v31
  %v160 = vunpack.c.l.bf16 %v32
  %v161 = vunpack.c.l.bf16 %v33
  %v162 = vunpack.c.l.bf16 %v34
  %v163 = vunpack.c.l.bf16 %v35
  %v164 = vunpack.c.l.bf16 %v36
  %v165 = vunpack.c.l.bf16 %v37
  %v166 = vunpack.c.l.bf16 %v38
  %v167 = vunpack.c.l.bf16 %v39
  %v168 = vunpack.c.l.bf16 %v40
  %v169 = vunpack.c.l.bf16 %v41
  %v170 = vunpack.c.l.bf16 %v42
  %v171 = vunpack.c.l.bf16 %v43
  %v172 = vunpack.c.l.bf16 %v44
  %v173 = vunpack.c.l.bf16 %v45
  %v174 = vunpack.c.l.bf16 %v46
  %v175 = vunpack.c.l.bf16 %v47
  %v176 = vunpack.c.l.bf16 %v48
  %v177 = vunpack.c.l.bf16 %v49
  %v178 = vunpack.c.l.bf16 %v50
  %v179 = vunpack.c.l.bf16 %v51
  %v180 = vunpack.c.l.bf16 %v52
  %v181 = vunpack.c.l.bf16 %v53
  %v182 = vunpack.c.l.bf16 %v54
  %v183 = vunpack.c.l.bf16 %v55
  %v184 = vunpack.c.l.bf16 %v56
  %v185 = vunpack.c.l.bf16 %v57
  %v186 = vunpack.c.l.bf16 %v58
  %v187 = vunpack.c.l.bf16 %v59
  %v188 = vunpack.c.l.bf16 %v60
  %v189 = vunpack.c.l.bf16 %v61
  %v190 = vunpack.c.l.bf16 %v62
  %v191 = vunpack.c.l.bf16 %v63
  %v192 = vunpack.c.l.bf16 %v64
  %v193 = vunpack.c.l.bf16 %v65
  %v194 = vunpack.c.l.bf16 %v66
  %v195 = vunpack.c.l.bf16 %v67
  %v196 = vunpack.c.l.bf16 %v68
  %v197 = vunpack.c.l.bf16 %v69
  %v198 = vunpack.c.l.bf16 %v70
  %v199 = vunpack.c.l.bf16 %v71
  %v200 = vunpack.c.l.bf16 %v72
  %v201 = vunpack.c.l.bf16 %v73
  %v202 = vunpack.c.l.bf16 %v74
  %v203 = vunpack.c.l.bf16 %v75
  %v204 = vunpack.c.l.bf16 %v76
  %v205 = vunpack.c.l.bf16 %v77
  %v206 = vunpack.c.l.bf16 %v78
  %v207 = vunpack.c.l.bf16 %v79
  %v208 = vunpack.c.l.bf16 %v80
  %v209 = vunpack.c.l.bf16 %v81
  %v210 = vunpack.c.l.bf16 %v82
  %v211 = vunpack.c.l.bf16 %v83
  %v212 = vunpack.c.l.bf16 %v84
  %v213 = vunpack.c.l.bf16 %v85
  %v214 = vunpack.c.l.bf16 %v86
  %v215 = vunpack.c.l.bf16 %v87
  %v216 = vunpack.c.l.bf16 %v88
  %v217 = vunpack.c.l.bf16 %v89
  %v218 = vunpack.c.l.bf16 %v90
  %v219 = vunpack.c.l.bf16 %v91
  %v220 = vunpack.c.l.bf16 %v92
  %v221 = vunpack.c.l.bf16 %v93
  %v222 = vunpack.c.l.bf16 %v94
  %v223 = vunpack.c.l.bf16 %v95
  %v224 = vunpack.c.l.bf16 %v96
  %v225 = vunpack.c.l.bf16 %v97
  %v226 = vunpack.c.l.bf16 %v98
  %v227 = vunpack.c.l.bf16 %v99
  %v228 = vunpack.c.l.bf16 %v100
  %v229 = vunpack.c.l.bf16 %v101
  %v230 = vunpack.c.l.bf16 %v102
  %v231 = vunpack.c.l.bf16 %v103
  %v232 = vunpack.c.l.bf16 %v104
  %v233 = vunpack.c.l.bf16 %v105
  %v234 = vunpack.c.l.bf16 %v106
  %v235 = vunpack.c.l.bf16 %v107
  %v236 = vunpack.c.l.bf16 %v108
  %v237 = vunpack.c.l.bf16 %v109
  %v238 = vunpack.c.l.bf16 %v110
  %v239 = vunpack.c.l.bf16 %v111
  %v240 = vunpack.c.l.bf16 %v112
  %v241 = vunpack.c.l.bf16 %v113
  %v242 = vunpack.c.l.bf16 %v114
  %v243 = vunpack.c.l.bf16 %v115
  %v244 = vunpack.c.l.bf16 %v116
  %v245 = vunpack.c.l.bf16 %v117
  %v246 = vunpack.c.l.bf16 %v118
  %v247 = vunpack.c.l.bf16 %v119
  %v248 = vunpack.c.l.bf16 %v120
  %v249 = vunpack.c.l.bf16 %v121
  %v250 = vunpack.c.l.bf16 %v122
  %v251 = vunpack.c.l.bf16 %v123
  %v252 = vunpack.c.l.bf16 %v124
  %v253 = vunpack.c.l.bf16 %v125
  %v254 = vunpack.c.l.bf16 %v126
  %v255 = vunpack.c.l.bf16 %v127
  %v256 = vunpack.c.l.bf16 %v128
  %v257 = vunpack.c.l.bf16 %v129
  %v258 = vunpack.c.l.bf16 %v130
  %v259 = vunpack.c.l.bf16 %v131
  %v260 = vunpack.c.l.bf16 %v132
  %v261 = vunpack.c.l.bf16 %v133
  %v262 = vunpack.c.l.bf16 %v134
  %v263 = vunpack.c.l.bf16 %v135
  %v264 = vunpack.c.l.bf16 %v136
  %v265 = vunpack.c.l.bf16 %v137
  %v266 = vunpack.c.l.bf16 %v138
  %v267 = vunpack.c.l.bf16 %v139
  %v268 = vunpack.c.l.bf16 %v140
  %v269 = vunpack.c.l.bf16 %v141
  %v270 = vld [vmem:[%s1] sm:$0x1]
  %v272 = vperm.slane %v270, 0
  %v274 = vmul.f32 %v142, %v272
  %v275 = vmul.f32 %v143, %v272
  %v276 = vmul.f32 %v144, %v272
  %v277 = vmul.f32 %v145, %v272
  %v278 = vmul.f32 %v146, %v272
  %v279 = vmul.f32 %v147, %v272
  %v280 = vmul.f32 %v148, %v272
  %v281 = vmul.f32 %v149, %v272
  %v282 = vmul.f32 %v150, %v272
  %v283 = vmul.f32 %v151, %v272
  %v284 = vmul.f32 %v152, %v272
  %v285 = vmul.f32 %v153, %v272
  %v286 = vmul.f32 %v154, %v272
  %v287 = vmul.f32 %v155, %v272
  %v288 = vmul.f32 %v156, %v272
  %v289 = vmul.f32 %v157, %v272
  %v290 = vmul.f32 %v158, %v272
  %v291 = vmul.f32 %v159, %v272
  %v292 = vmul.f32 %v160, %v272
  %v293 = vmul.f32 %v161, %v272
  %v294 = vmul.f32 %v162, %v272
  %v295 = vmul.f32 %v163, %v272
  %v296 = vmul.f32 %v164, %v272
  %v297 = vmul.f32 %v165, %v272
  %v298 = vmul.f32 %v166, %v272
  %v299 = vmul.f32 %v167, %v272
  %v300 = vmul.f32 %v168, %v272
  %v301 = vmul.f32 %v169, %v272
  %v302 = vmul.f32 %v170, %v272
  %v303 = vmul.f32 %v171, %v272
  %v304 = vmul.f32 %v172, %v272
  %v305 = vmul.f32 %v173, %v272
  %v306 = vmul.f32 %v174, %v272
  %v307 = vmul.f32 %v175, %v272
  %v308 = vmul.f32 %v176, %v272
  %v309 = vmul.f32 %v177, %v272
  %v310 = vmul.f32 %v178, %v272
  %v311 = vmul.f32 %v179, %v272
  %v312 = vmul.f32 %v180, %v272
  %v313 = vmul.f32 %v181, %v272
  %v314 = vmul.f32 %v182, %v272
  %v315 = vmul.f32 %v183, %v272
  %v316 = vmul.f32 %v184, %v272
  %v317 = vmul.f32 %v185, %v272
  %v318 = vmul.f32 %v186, %v272
  %v319 = vmul.f32 %v187, %v272
  %v320 = vmul.f32 %v188, %v272
  %v321 = vmul.f32 %v189, %v272
  %v322 = vmul.f32 %v190, %v272
  %v323 = vmul.f32 %v191, %v272
  %v324 = vmul.f32 %v192, %v272
  %v325 = vmul.f32 %v193, %v272
  %v326 = vmul.f32 %v194, %v272
  %v327 = vmul.f32 %v195, %v272
  %v328 = vmul.f32 %v196, %v272
  %v329 = vmul.f32 %v197, %v272
  %v330 = vmul.f32 %v198, %v272
  %v331 = vmul.f32 %v199, %v272
  %v332 = vmul.f32 %v200, %v272
  %v333 = vmul.f32 %v201, %v272
  %v334 = vmul.f32 %v202, %v272
  %v335 = vmul.f32 %v203, %v272
  %v336 = vmul.f32 %v204, %v272
  %v337 = vmul.f32 %v205, %v272
  %v338 = vmul.f32 %v206, %v272
  %v339 = vmul.f32 %v207, %v272
  %v340 = vmul.f32 %v208, %v272
  %v341 = vmul.f32 %v209, %v272
  %v342 = vmul.f32 %v210, %v272
  %v343 = vmul.f32 %v211, %v272
  %v344 = vmul.f32 %v212, %v272
  %v345 = vmul.f32 %v213, %v272
  %v346 = vmul.f32 %v214, %v272
  %v347 = vmul.f32 %v215, %v272
  %v348 = vmul.f32 %v216, %v272
  %v349 = vmul.f32 %v217, %v272
  %v350 = vmul.f32 %v218, %v272
  %v351 = vmul.f32 %v219, %v272
  %v352 = vmul.f32 %v220, %v272
  %v353 = vmul.f32 %v221, %v272
  %v354 = vmul.f32 %v222, %v272
  %v355 = vmul.f32 %v223, %v272
  %v356 = vmul.f32 %v224, %v272
  %v357 = vmul.f32 %v225, %v272
  %v358 = vmul.f32 %v226, %v272
  %v359 = vmul.f32 %v227, %v272
  %v360 = vmul.f32 %v228, %v272
  %v361 = vmul.f32 %v229, %v272
  %v362 = vmul.f32 %v230, %v272
  %v363 = vmul.f32 %v231, %v272
  %v364 = vmul.f32 %v232, %v272
  %v365 = vmul.f32 %v233, %v272
  %v366 = vmul.f32 %v234, %v272
  %v367 = vmul.f32 %v235, %v272
  %v368 = vmul.f32 %v236, %v272
  %v369 = vmul.f32 %v237, %v272
  %v370 = vmul.f32 %v238, %v272
  %v371 = vmul.f32 %v239, %v272
  %v372 = vmul.f32 %v240, %v272
  %v373 = vmul.f32 %v241, %v272
  %v374 = vmul.f32 %v242, %v272
  %v375 = vmul.f32 %v243, %v272
  %v376 = vmul.f32 %v244, %v272
  %v377 = vmul.f32 %v245, %v272
  %v378 = vmul.f32 %v246, %v272
  %v379 = vmul.f32 %v247, %v272
  %v380 = vmul.f32 %v248, %v272
  %v381 = vmul.f32 %v249, %v272
  %v382 = vmul.f32 %v250, %v272
  %v383 = vmul.f32 %v251, %v272
  %v384 = vmul.f32 %v252, %v272
  %v385 = vmul.f32 %v253, %v272
  %v386 = vmul.f32 %v254, %v272
  %v387 = vmul.f32 %v255, %v272
  %v388 = vmul.f32 %v256, %v272
  %v389 = vmul.f32 %v257, %v272
  %v390 = vmul.f32 %v258, %v272
  %v391 = vmul.f32 %v259, %v272
  %v392 = vmul.f32 %v260, %v272
  %v393 = vmul.f32 %v261, %v272
  %v394 = vmul.f32 %v262, %v272
  %v395 = vmul.f32 %v263, %v272
  %v396 = vmul.f32 %v264, %v272
  %v397 = vmul.f32 %v265, %v272
  %v398 = vmul.f32 %v266, %v272
  %v399 = vmul.f32 %v267, %v272
  %v400 = vmul.f32 %v268, %v272
  %v401 = vmul.f32 %v269, %v272
  %v402 = vld [vmem:[%s2] sm:$0x1]
  %v404 = vperm.slane %v402, 0
  %v406 = vadd.f32 %v274, %v404
  %v407 = vadd.f32 %v275, %v404
  %v408 = vadd.f32 %v276, %v404
  %v409 = vadd.f32 %v277, %v404
  %v410 = vadd.f32 %v278, %v404
  %v411 = vadd.f32 %v279, %v404
  %v412 = vadd.f32 %v280, %v404
  %v413 = vadd.f32 %v281, %v404
  %v414 = vadd.f32 %v282, %v404
  %v415 = vadd.f32 %v283, %v404
  %v416 = vadd.f32 %v284, %v404
  %v417 = vadd.f32 %v285, %v404
  %v418 = vadd.f32 %v286, %v404
  %v419 = vadd.f32 %v287, %v404
  %v420 = vadd.f32 %v288, %v404
  %v421 = vadd.f32 %v289, %v404
  %v422 = vadd.f32 %v290, %v404
  %v423 = vadd.f32 %v291, %v404
  %v424 = vadd.f32 %v292, %v404
  %v425 = vadd.f32 %v293, %v404
  %v426 = vadd.f32 %v294, %v404
  %v427 = vadd.f32 %v295, %v404
  %v428 = vadd.f32 %v296, %v404
  %v429 = vadd.f32 %v297, %v404
  %v430 = vadd.f32 %v298, %v404
  %v431 = vadd.f32 %v299, %v404
  %v432 = vadd.f32 %v300, %v404
  %v433 = vadd.f32 %v301, %v404
  %v434 = vadd.f32 %v302, %v404
  %v435 = vadd.f32 %v303, %v404
  %v436 = vadd.f32 %v304, %v404
  %v437 = vadd.f32 %v305, %v404
  %v438 = vadd.f32 %v306, %v404
  %v439 = vadd.f32 %v307, %v404
  %v440 = vadd.f32 %v308, %v404
  %v441 = vadd.f32 %v309, %v404
  %v442 = vadd.f32 %v310, %v404
  %v443 = vadd.f32 %v311, %v404
  %v444 = vadd.f32 %v312, %v404
  %v445 = vadd.f32 %v313, %v404
  %v446 = vadd.f32 %v314, %v404
  %v447 = vadd.f32 %v315, %v404
  %v448 = vadd.f32 %v316, %v404
  %v449 = vadd.f32 %v317, %v404
  %v450 = vadd.f32 %v318, %v404
  %v451 = vadd.f32 %v319, %v404
  %v452 = vadd.f32 %v320, %v404
  %v453 = vadd.f32 %v321, %v404
  %v454 = vadd.f32 %v322, %v404
  %v455 = vadd.f32 %v323, %v404
  %v456 = vadd.f32 %v324, %v404
  %v457 = vadd.f32 %v325, %v404
  %v458 = vadd.f32 %v326, %v404
  %v459 = vadd.f32 %v327, %v404
  %v460 = vadd.f32 %v328, %v404
  %v461 = vadd.f32 %v329, %v404
  %v462 = vadd.f32 %v330, %v404
  %v463 = vadd.f32 %v331, %v404
  %v464 = vadd.f32 %v332, %v404
  %v465 = vadd.f32 %v333, %v404
  %v466 = vadd.f32 %v334, %v404
  %v467 = vadd.f32 %v335, %v404
  %v468 = vadd.f32 %v336, %v404
  %v469 = vadd.f32 %v337, %v404
  %v470 = vadd.f32 %v338, %v404
  %v471 = vadd.f32 %v339, %v404
  %v472 = vadd.f32 %v340, %v404
  %v473 = vadd.f32 %v341, %v404
  %v474 = vadd.f32 %v342, %v404
  %v475 = vadd.f32 %v343, %v404
  %v476 = vadd.f32 %v344, %v404
  %v477 = vadd.f32 %v345, %v404
  %v478 = vadd.f32 %v346, %v404
  %v479 = vadd.f32 %v347, %v404
  %v480 = vadd.f32 %v348, %v404
  %v481 = vadd.f32 %v349, %v404
  %v482 = vadd.f32 %v350, %v404
  %v483 = vadd.f32 %v351, %v404
  %v484 = vadd.f32 %v352, %v404
  %v485 = vadd.f32 %v353, %v404
  %v486 = vadd.f32 %v354, %v404
  %v487 = vadd.f32 %v355, %v404
  %v488 = vadd.f32 %v356, %v404
  %v489 = vadd.f32 %v357, %v404
  %v490 = vadd.f32 %v358, %v404
  %v491 = vadd.f32 %v359, %v404
  %v492 = vadd.f32 %v360, %v404
  %v493 = vadd.f32 %v361, %v404
  %v494 = vadd.f32 %v362, %v404
  %v495 = vadd.f32 %v363, %v404
  %v496 = vadd.f32 %v364, %v404
  %v497 = vadd.f32 %v365, %v404
  %v498 = vadd.f32 %v366, %v404
  %v499 = vadd.f32 %v367, %v404
  %v500 = vadd.f32 %v368, %v404
  %v501 = vadd.f32 %v369, %v404
  %v502 = vadd.f32 %v370, %v404
  %v503 = vadd.f32 %v371, %v404
  %v504 = vadd.f32 %v372, %v404
  %v505 = vadd.f32 %v373, %v404
  %v506 = vadd.f32 %v374, %v404
  %v507 = vadd.f32 %v375, %v404
  %v508 = vadd.f32 %v376, %v404
  %v509 = vadd.f32 %v377, %v404
  %v510 = vadd.f32 %v378, %v404
  %v511 = vadd.f32 %v379, %v404
  %v512 = vadd.f32 %v380, %v404
  %v513 = vadd.f32 %v381, %v404
  %v514 = vadd.f32 %v382, %v404
  %v515 = vadd.f32 %v383, %v404
  %v516 = vadd.f32 %v384, %v404
  %v517 = vadd.f32 %v385, %v404
  %v518 = vadd.f32 %v386, %v404
  %v519 = vadd.f32 %v387, %v404
  %v520 = vadd.f32 %v388, %v404
  %v521 = vadd.f32 %v389, %v404
  %v522 = vadd.f32 %v390, %v404
  %v523 = vadd.f32 %v391, %v404
  %v524 = vadd.f32 %v392, %v404
  %v525 = vadd.f32 %v393, %v404
  %v526 = vadd.f32 %v394, %v404
  %v527 = vadd.f32 %v395, %v404
  %v528 = vadd.f32 %v396, %v404
  %v529 = vadd.f32 %v397, %v404
  %v530 = vadd.f32 %v398, %v404
  %v531 = vadd.f32 %v399, %v404
  %v532 = vadd.f32 %v400, %v404
  %v533 = vadd.f32 %v401, %v404
  %v534 = vmax.f32 %v406, 0.0
  %v535 = vmax.f32 %v407, 0.0
  %v536 = vmax.f32 %v408, 0.0
  %v537 = vmax.f32 %v409, 0.0
  %v538 = vmax.f32 %v410, 0.0
  %v539 = vmax.f32 %v411, 0.0
  %v540 = vmax.f32 %v412, 0.0
  %v541 = vmax.f32 %v413, 0.0
  %v542 = vmax.f32 %v414, 0.0
  %v543 = vmax.f32 %v415, 0.0
  %v544 = vmax.f32 %v416, 0.0
  %v545 = vmax.f32 %v417, 0.0
  %v546 = vmax.f32 %v418, 0.0
  %v547 = vmax.f32 %v419, 0.0
  %v548 = vmax.f32 %v420, 0.0
  %v549 = vmax.f32 %v421, 0.0
  %v550 = vmax.f32 %v422, 0.0
  %v551 = vmax.f32 %v423, 0.0
  %v552 = vmax.f32 %v424, 0.0
  %v553 = vmax.f32 %v425, 0.0
  %v554 = vmax.f32 %v426, 0.0
  %v555 = vmax.f32 %v427, 0.0
  %v556 = vmax.f32 %v428, 0.0
  %v557 = vmax.f32 %v429, 0.0
  %v558 = vmax.f32 %v430, 0.0
  %v559 = vmax.f32 %v431, 0.0
  %v560 = vmax.f32 %v432, 0.0
  %v561 = vmax.f32 %v433, 0.0
  %v562 = vmax.f32 %v434, 0.0
  %v563 = vmax.f32 %v435, 0.0
  %v564 = vmax.f32 %v436, 0.0
  %v565 = vmax.f32 %v437, 0.0
  %v566 = vmax.f32 %v438, 0.0
  %v567 = vmax.f32 %v439, 0.0
  %v568 = vmax.f32 %v440, 0.0
  %v569 = vmax.f32 %v441, 0.0
  %v570 = vmax.f32 %v442, 0.0
  %v571 = vmax.f32 %v443, 0.0
  %v572 = vmax.f32 %v444, 0.0
  %v573 = vmax.f32 %v445, 0.0
  %v574 = vmax.f32 %v446, 0.0
  %v575 = vmax.f32 %v447, 0.0
  %v576 = vmax.f32 %v448, 0.0
  %v577 = vmax.f32 %v449, 0.0
  %v578 = vmax.f32 %v450, 0.0
  %v579 = vmax.f32 %v451, 0.0
  %v580 = vmax.f32 %v452, 0.0
  %v581 = vmax.f32 %v453, 0.0
  %v582 = vmax.f32 %v454, 0.0
  %v583 = vmax.f32 %v455, 0.0
  %v584 = vmax.f32 %v456, 0.0
  %v585 = vmax.f32 %v457, 0.0
  %v586 = vmax.f32 %v458, 0.0
  %v587 = vmax.f32 %v459, 0.0
  %v588 = vmax.f32 %v460, 0.0
  %v589 = vmax.f32 %v461, 0.0
  %v590 = vmax.f32 %v462, 0.0
  %v591 = vmax.f32 %v463, 0.0
  %v592 = vmax.f32 %v464, 0.0
  %v593 = vmax.f32 %v465, 0.0
  %v594 = vmax.f32 %v466, 0.0
  %v595 = vmax.f32 %v467, 0.0
  %v596 = vmax.f32 %v468, 0.0
  %v597 = vmax.f32 %v469, 0.0
  %v598 = vmax.f32 %v470, 0.0
  %v599 = vmax.f32 %v471, 0.0
  %v600 = vmax.f32 %v472, 0.0
  %v601 = vmax.f32 %v473, 0.0
  %v602 = vmax.f32 %v474, 0.0
  %v603 = vmax.f32 %v475, 0.0
  %v604 = vmax.f32 %v476, 0.0
  %v605 = vmax.f32 %v477, 0.0
  %v606 = vmax.f32 %v478, 0.0
  %v607 = vmax.f32 %v479, 0.0
  %v608 = vmax.f32 %v480, 0.0
  %v609 = vmax.f32 %v481, 0.0
  %v610 = vmax.f32 %v482, 0.0
  %v611 = vmax.f32 %v483, 0.0
  %v612 = vmax.f32 %v484, 0.0
  %v613 = vmax.f32 %v485, 0.0
  %v614 = vmax.f32 %v486, 0.0
  %v615 = vmax.f32 %v487, 0.0
  %v616 = vmax.f32 %v488, 0.0
  %v617 = vmax.f32 %v489, 0.0
  %v618 = vmax.f32 %v490, 0.0
  %v619 = vmax.f32 %v491, 0.0
  %v620 = vmax.f32 %v492, 0.0
  %v621 = vmax.f32 %v493, 0.0
  %v622 = vmax.f32 %v494, 0.0
  %v623 = vmax.f32 %v495, 0.0
  %v624 = vmax.f32 %v496, 0.0
  %v625 = vmax.f32 %v497, 0.0
  %v626 = vmax.f32 %v498, 0.0
  %v627 = vmax.f32 %v499, 0.0
  %v628 = vmax.f32 %v500, 0.0
  %v629 = vmax.f32 %v501, 0.0
  %v630 = vmax.f32 %v502, 0.0
  %v631 = vmax.f32 %v503, 0.0
  %v632 = vmax.f32 %v504, 0.0
  %v633 = vmax.f32 %v505, 0.0
  %v634 = vmax.f32 %v506, 0.0
  %v635 = vmax.f32 %v507, 0.0
  %v636 = vmax.f32 %v508, 0.0
  %v637 = vmax.f32 %v509, 0.0
  %v638 = vmax.f32 %v510, 0.0
  %v639 = vmax.f32 %v511, 0.0
  %v640 = vmax.f32 %v512, 0.0
  %v641 = vmax.f32 %v513, 0.0
  %v642 = vmax.f32 %v514, 0.0
  %v643 = vmax.f32 %v515, 0.0
  %v644 = vmax.f32 %v516, 0.0
  %v645 = vmax.f32 %v517, 0.0
  %v646 = vmax.f32 %v518, 0.0
  %v647 = vmax.f32 %v519, 0.0
  %v648 = vmax.f32 %v520, 0.0
  %v649 = vmax.f32 %v521, 0.0
  %v650 = vmax.f32 %v522, 0.0
  %v651 = vmax.f32 %v523, 0.0
  %v652 = vmax.f32 %v524, 0.0
  %v653 = vmax.f32 %v525, 0.0
  %v654 = vmax.f32 %v526, 0.0
  %v655 = vmax.f32 %v527, 0.0
  %v656 = vmax.f32 %v528, 0.0
  %v657 = vmax.f32 %v529, 0.0
  %v658 = vmax.f32 %v530, 0.0
  %v659 = vmax.f32 %v531, 0.0
  %v660 = vmax.f32 %v532, 0.0
  %v661 = vmax.f32 %v533, 0.0
  %v662 = vpack.c.bf16 %v534, %v534
  %v663 = vpack.c.bf16 %v535, %v535
  %v664 = vpack.c.bf16 %v536, %v536
  %v665 = vpack.c.bf16 %v537, %v537
  %v666 = vpack.c.bf16 %v538, %v538
  %v667 = vpack.c.bf16 %v539, %v539
  %v668 = vpack.c.bf16 %v540, %v540
  %v669 = vpack.c.bf16 %v541, %v541
  %v670 = vpack.c.bf16 %v542, %v542
  %v671 = vpack.c.bf16 %v543, %v543
  %v672 = vpack.c.bf16 %v544, %v544
  %v673 = vpack.c.bf16 %v545, %v545
  %v674 = vpack.c.bf16 %v546, %v546
  %v675 = vpack.c.bf16 %v547, %v547
  %v676 = vpack.c.bf16 %v548, %v548
  %v677 = vpack.c.bf16 %v549, %v549
  %v678 = vpack.c.bf16 %v550, %v550
  %v679 = vpack.c.bf16 %v551, %v551
  %v680 = vpack.c.bf16 %v552, %v552
  %v681 = vpack.c.bf16 %v553, %v553
  %v682 = vpack.c.bf16 %v554, %v554
  %v683 = vpack.c.bf16 %v555, %v555
  %v684 = vpack.c.bf16 %v556, %v556
  %v685 = vpack.c.bf16 %v557, %v557
  %v686 = vpack.c.bf16 %v558, %v558
  %v687 = vpack.c.bf16 %v559, %v559
  %v688 = vpack.c.bf16 %v560, %v560
  %v689 = vpack.c.bf16 %v561, %v561
  %v690 = vpack.c.bf16 %v562, %v562
  %v691 = vpack.c.bf16 %v563, %v563
  %v692 = vpack.c.bf16 %v564, %v564
  %v693 = vpack.c.bf16 %v565, %v565
  %v694 = vpack.c.bf16 %v566, %v566
  %v695 = vpack.c.bf16 %v567, %v567
  %v696 = vpack.c.bf16 %v568, %v568
  %v697 = vpack.c.bf16 %v569, %v569
  %v698 = vpack.c.bf16 %v570, %v570
  %v699 = vpack.c.bf16 %v571, %v571
  %v700 = vpack.c.bf16 %v572, %v572
  %v701 = vpack.c.bf16 %v573, %v573
  %v702 = vpack.c.bf16 %v574, %v574
  %v703 = vpack.c.bf16 %v575, %v575
  %v704 = vpack.c.bf16 %v576, %v576
  %v705 = vpack.c.bf16 %v577, %v577
  %v706 = vpack.c.bf16 %v578, %v578
  %v707 = vpack.c.bf16 %v579, %v579
  %v708 = vpack.c.bf16 %v580, %v580
  %v709 = vpack.c.bf16 %v581, %v581
  %v710 = vpack.c.bf16 %v582, %v582
  %v711 = vpack.c.bf16 %v583, %v583
  %v712 = vpack.c.bf16 %v584, %v584
  %v713 = vpack.c.bf16 %v585, %v585
  %v714 = vpack.c.bf16 %v586, %v586
  %v715 = vpack.c.bf16 %v587, %v587
  %v716 = vpack.c.bf16 %v588, %v588
  %v717 = vpack.c.bf16 %v589, %v589
  %v718 = vpack.c.bf16 %v590, %v590
  %v719 = vpack.c.bf16 %v591, %v591
  %v720 = vpack.c.bf16 %v592, %v592
  %v721 = vpack.c.bf16 %v593, %v593
  %v722 = vpack.c.bf16 %v594, %v594
  %v723 = vpack.c.bf16 %v595, %v595
  %v724 = vpack.c.bf16 %v596, %v596
  %v725 = vpack.c.bf16 %v597, %v597
  %v726 = vpack.c.bf16 %v598, %v598
  %v727 = vpack.c.bf16 %v599, %v599
  %v728 = vpack.c.bf16 %v600, %v600
  %v729 = vpack.c.bf16 %v601, %v601
  %v730 = vpack.c.bf16 %v602, %v602
  %v731 = vpack.c.bf16 %v603, %v603
  %v732 = vpack.c.bf16 %v604, %v604
  %v733 = vpack.c.bf16 %v605, %v605
  %v734 = vpack.c.bf16 %v606, %v606
  %v735 = vpack.c.bf16 %v607, %v607
  %v736 = vpack.c.bf16 %v608, %v608
  %v737 = vpack.c.bf16 %v609, %v609
  %v738 = vpack.c.bf16 %v610, %v610
  %v739 = vpack.c.bf16 %v611, %v611
  %v740 = vpack.c.bf16 %v612, %v612
  %v741 = vpack.c.bf16 %v613, %v613
  %v742 = vpack.c.bf16 %v614, %v614
  %v743 = vpack.c.bf16 %v615, %v615
  %v744 = vpack.c.bf16 %v616, %v616
  %v745 = vpack.c.bf16 %v617, %v617
  %v746 = vpack.c.bf16 %v618, %v618
  %v747 = vpack.c.bf16 %v619, %v619
  %v748 = vpack.c.bf16 %v620, %v620
  %v749 = vpack.c.bf16 %v621, %v621
  %v750 = vpack.c.bf16 %v622, %v622
  %v751 = vpack.c.bf16 %v623, %v623
  %v752 = vpack.c.bf16 %v624, %v624
  %v753 = vpack.c.bf16 %v625, %v625
  %v754 = vpack.c.bf16 %v626, %v626
  %v755 = vpack.c.bf16 %v627, %v627
  %v756 = vpack.c.bf16 %v628, %v628
  %v757 = vpack.c.bf16 %v629, %v629
  %v758 = vpack.c.bf16 %v630, %v630
  %v759 = vpack.c.bf16 %v631, %v631
  %v760 = vpack.c.bf16 %v632, %v632
  %v761 = vpack.c.bf16 %v633, %v633
  %v762 = vpack.c.bf16 %v634, %v634
  %v763 = vpack.c.bf16 %v635, %v635
  %v764 = vpack.c.bf16 %v636, %v636
  %v765 = vpack.c.bf16 %v637, %v637
  %v766 = vpack.c.bf16 %v638, %v638
  %v767 = vpack.c.bf16 %v639, %v639
  %v768 = vpack.c.bf16 %v640, %v640
  %v769 = vpack.c.bf16 %v641, %v641
  %v770 = vpack.c.bf16 %v642, %v642
  %v771 = vpack.c.bf16 %v643, %v643
  %v772 = vpack.c.bf16 %v644, %v644
  %v773 = vpack.c.bf16 %v645, %v645
  %v774 = vpack.c.bf16 %v646, %v646
  %v775 = vpack.c.bf16 %v647, %v647
  %v776 = vpack.c.bf16 %v648, %v648
  %v777 = vpack.c.bf16 %v649, %v649
  %v778 = vpack.c.bf16 %v650, %v650
  %v779 = vpack.c.bf16 %v651, %v651
  %v780 = vpack.c.bf16 %v652, %v652
  %v781 = vpack.c.bf16 %v653, %v653
  %v782 = vpack.c.bf16 %v654, %v654
  %v783 = vpack.c.bf16 %v655, %v655
  %v784 = vpack.c.bf16 %v656, %v656
  %v785 = vpack.c.bf16 %v657, %v657
  %v786 = vpack.c.bf16 %v658, %v658
  %v787 = vpack.c.bf16 %v659, %v659
  %v788 = vpack.c.bf16 %v660, %v660
  %v789 = vpack.c.bf16 %v661, %v661
  %vm790 = vcmask 60416
  %791 = vst.msk [vmem:[%s3] sm:$0xf] %vm790, %v662
  %792 = vst.msk [vmem:[%s3 + $0x4] sm:$0xf] %vm790, %v663
  %793 = vst.msk [vmem:[%s3 + $0x8] sm:$0xf] %vm790, %v664
  %794 = vst.msk [vmem:[%s3 + $0xc] sm:$0xf] %vm790, %v665
  %795 = vst.msk [vmem:[%s3 + $0x10] sm:$0xf] %vm790, %v666
  %796 = vst.msk [vmem:[%s3 + $0x14] sm:$0xf] %vm790, %v667
  %797 = vst.msk [vmem:[%s3 + $0x18] sm:$0xf] %vm790, %v668
  %798 = vst.msk [vmem:[%s3 + $0x1c] sm:$0xf] %vm790, %v669
  %799 = vst.msk [vmem:[%s3 + $0x20] sm:$0xf] %vm790, %v670
  %800 = vst.msk [vmem:[%s3 + $0x24] sm:$0xf] %vm790, %v671
  %801 = vst.msk [vmem:[%s3 + $0x28] sm:$0xf] %vm790, %v672
  %802 = vst.msk [vmem:[%s3 + $0x2c] sm:$0xf] %vm790, %v673
  %803 = vst.msk [vmem:[%s3 + $0x30] sm:$0xf] %vm790, %v674
  %804 = vst.msk [vmem:[%s3 + $0x34] sm:$0xf] %vm790, %v675
  %805 = vst.msk [vmem:[%s3 + $0x38] sm:$0xf] %vm790, %v676
  %806 = vst.msk [vmem:[%s3 + $0x3c] sm:$0xf] %vm790, %v677
  %807 = vst.msk [vmem:[%s3 + $0x40] sm:$0xf] %vm790, %v678
  %808 = vst.msk [vmem:[%s3 + $0x44] sm:$0xf] %vm790, %v679
  %809 = vst.msk [vmem:[%s3 + $0x48] sm:$0xf] %vm790, %v680
  %810 = vst.msk [vmem:[%s3 + $0x4c] sm:$0xf] %vm790, %v681
  %811 = vst.msk [vmem:[%s3 + $0x50] sm:$0xf] %vm790, %v682
  %812 = vst.msk [vmem:[%s3 + $0x54] sm:$0xf] %vm790, %v683
  %813 = vst.msk [vmem:[%s3 + $0x58] sm:$0xf] %vm790, %v684
  %814 = vst.msk [vmem:[%s3 + $0x5c] sm:$0xf] %vm790, %v685
  %815 = vst.msk [vmem:[%s3 + $0x60] sm:$0xf] %vm790, %v686
  %816 = vst.msk [vmem:[%s3 + $0x64] sm:$0xf] %vm790, %v687
  %817 = vst.msk [vmem:[%s3 + $0x68] sm:$0xf] %vm790, %v688
  %818 = vst.msk [vmem:[%s3 + $0x6c] sm:$0xf] %vm790, %v689
  %819 = vst.msk [vmem:[%s3 + $0x70] sm:$0xf] %vm790, %v690
  %820 = vst.msk [vmem:[%s3 + $0x74] sm:$0xf] %vm790, %v691
  %821 = vst.msk [vmem:[%s3 + $0x78] sm:$0xf] %vm790, %v692
  %822 = vst.msk [vmem:[%s3 + $0x7c] sm:$0xf] %vm790, %v693
  %823 = vst.msk [vmem:[%s3 + $0x80] sm:$0xf] %vm790, %v694
  %824 = vst.msk [vmem:[%s3 + $0x84] sm:$0xf] %vm790, %v695
  %825 = vst.msk [vmem:[%s3 + $0x88] sm:$0xf] %vm790, %v696
  %826 = vst.msk [vmem:[%s3 + $0x8c] sm:$0xf] %vm790, %v697
  %827 = vst.msk [vmem:[%s3 + $0x90] sm:$0xf] %vm790, %v698
  %828 = vst.msk [vmem:[%s3 + $0x94] sm:$0xf] %vm790, %v699
  %829 = vst.msk [vmem:[%s3 + $0x98] sm:$0xf] %vm790, %v700
  %830 = vst.msk [vmem:[%s3 + $0x9c] sm:$0xf] %vm790, %v701
  %831 = vst.msk [vmem:[%s3 + $0xa0] sm:$0xf] %vm790, %v702
  %832 = vst.msk [vmem:[%s3 + $0xa4] sm:$0xf] %vm790, %v703
  %833 = vst.msk [vmem:[%s3 + $0xa8] sm:$0xf] %vm790, %v704
  %834 = vst.msk [vmem:[%s3 + $0xac] sm:$0xf] %vm790, %v705
  %835 = vst.msk [vmem:[%s3 + $0xb0] sm:$0xf] %vm790, %v706
  %836 = vst.msk [vmem:[%s3 + $0xb4] sm:$0xf] %vm790, %v707
  %837 = vst.msk [vmem:[%s3 + $0xb8] sm:$0xf] %vm790, %v708
  %838 = vst.msk [vmem:[%s3 + $0xbc] sm:$0xf] %vm790, %v709
  %839 = vst.msk [vmem:[%s3 + $0xc0] sm:$0xf] %vm790, %v710
  %840 = vst.msk [vmem:[%s3 + $0xc4] sm:$0xf] %vm790, %v711
  %841 = vst.msk [vmem:[%s3 + $0xc8] sm:$0xf] %vm790, %v712
  %842 = vst.msk [vmem:[%s3 + $0xcc] sm:$0xf] %vm790, %v713
  %843 = vst.msk [vmem:[%s3 + $0xd0] sm:$0xf] %vm790, %v714
  %844 = vst.msk [vmem:[%s3 + $0xd4] sm:$0xf] %vm790, %v715
  %845 = vst.msk [vmem:[%s3 + $0xd8] sm:$0xf] %vm790, %v716
  %846 = vst.msk [vmem:[%s3 + $0xdc] sm:$0xf] %vm790, %v717
  %847 = vst.msk [vmem:[%s3 + $0xe0] sm:$0xf] %vm790, %v718
  %848 = vst.msk [vmem:[%s3 + $0xe4] sm:$0xf] %vm790, %v719
  %849 = vst.msk [vmem:[%s3 + $0xe8] sm:$0xf] %vm790, %v720
  %850 = vst.msk [vmem:[%s3 + $0xec] sm:$0xf] %vm790, %v721
  %851 = vst.msk [vmem:[%s3 + $0xf0] sm:$0xf] %vm790, %v722
  %852 = vst.msk [vmem:[%s3 + $0xf4] sm:$0xf] %vm790, %v723
  %853 = vst.msk [vmem:[%s3 + $0xf8] sm:$0xf] %vm790, %v724
  %854 = vst.msk [vmem:[%s3 + $0xfc] sm:$0xf] %vm790, %v725
  %855 = vst.msk [vmem:[%s3 + $0x100] sm:$0xf] %vm790, %v726
  %856 = vst.msk [vmem:[%s3 + $0x104] sm:$0xf] %vm790, %v727
  %857 = vst.msk [vmem:[%s3 + $0x108] sm:$0xf] %vm790, %v728
  %858 = vst.msk [vmem:[%s3 + $0x10c] sm:$0xf] %vm790, %v729
  %859 = vst.msk [vmem:[%s3 + $0x110] sm:$0xf] %vm790, %v730
  %860 = vst.msk [vmem:[%s3 + $0x114] sm:$0xf] %vm790, %v731
  %861 = vst.msk [vmem:[%s3 + $0x118] sm:$0xf] %vm790, %v732
  %862 = vst.msk [vmem:[%s3 + $0x11c] sm:$0xf] %vm790, %v733
  %863 = vst.msk [vmem:[%s3 + $0x120] sm:$0xf] %vm790, %v734
  %864 = vst.msk [vmem:[%s3 + $0x124] sm:$0xf] %vm790, %v735
  %865 = vst.msk [vmem:[%s3 + $0x128] sm:$0xf] %vm790, %v736
  %866 = vst.msk [vmem:[%s3 + $0x12c] sm:$0xf] %vm790, %v737
  %867 = vst.msk [vmem:[%s3 + $0x130] sm:$0xf] %vm790, %v738
  %868 = vst.msk [vmem:[%s3 + $0x134] sm:$0xf] %vm790, %v739
  %869 = vst.msk [vmem:[%s3 + $0x138] sm:$0xf] %vm790, %v740
  %870 = vst.msk [vmem:[%s3 + $0x13c] sm:$0xf] %vm790, %v741
  %871 = vst.msk [vmem:[%s3 + $0x140] sm:$0xf] %vm790, %v742
  %872 = vst.msk [vmem:[%s3 + $0x144] sm:$0xf] %vm790, %v743
  %873 = vst.msk [vmem:[%s3 + $0x148] sm:$0xf] %vm790, %v744
  %874 = vst.msk [vmem:[%s3 + $0x14c] sm:$0xf] %vm790, %v745
  %875 = vst.msk [vmem:[%s3 + $0x150] sm:$0xf] %vm790, %v746
  %876 = vst.msk [vmem:[%s3 + $0x154] sm:$0xf] %vm790, %v747
  %877 = vst.msk [vmem:[%s3 + $0x158] sm:$0xf] %vm790, %v748
  %878 = vst.msk [vmem:[%s3 + $0x15c] sm:$0xf] %vm790, %v749
  %879 = vst.msk [vmem:[%s3 + $0x160] sm:$0xf] %vm790, %v750
  %880 = vst.msk [vmem:[%s3 + $0x164] sm:$0xf] %vm790, %v751
  %881 = vst.msk [vmem:[%s3 + $0x168] sm:$0xf] %vm790, %v752
  %882 = vst.msk [vmem:[%s3 + $0x16c] sm:$0xf] %vm790, %v753
  %883 = vst.msk [vmem:[%s3 + $0x170] sm:$0xf] %vm790, %v754
  %884 = vst.msk [vmem:[%s3 + $0x174] sm:$0xf] %vm790, %v755
  %885 = vst.msk [vmem:[%s3 + $0x178] sm:$0xf] %vm790, %v756
  %886 = vst.msk [vmem:[%s3 + $0x17c] sm:$0xf] %vm790, %v757
  %887 = vst.msk [vmem:[%s3 + $0x180] sm:$0xf] %vm790, %v758
  %888 = vst.msk [vmem:[%s3 + $0x184] sm:$0xf] %vm790, %v759
  %889 = vst.msk [vmem:[%s3 + $0x188] sm:$0xf] %vm790, %v760
  %890 = vst.msk [vmem:[%s3 + $0x18c] sm:$0xf] %vm790, %v761
  %891 = vst.msk [vmem:[%s3 + $0x190] sm:$0xf] %vm790, %v762
  %892 = vst.msk [vmem:[%s3 + $0x194] sm:$0xf] %vm790, %v763
  %893 = vst.msk [vmem:[%s3 + $0x198] sm:$0xf] %vm790, %v764
  %894 = vst.msk [vmem:[%s3 + $0x19c] sm:$0xf] %vm790, %v765
  %895 = vst.msk [vmem:[%s3 + $0x1a0] sm:$0xf] %vm790, %v766
  %896 = vst.msk [vmem:[%s3 + $0x1a4] sm:$0xf] %vm790, %v767
  %897 = vst.msk [vmem:[%s3 + $0x1a8] sm:$0xf] %vm790, %v768
  %898 = vst.msk [vmem:[%s3 + $0x1ac] sm:$0xf] %vm790, %v769
  %899 = vst.msk [vmem:[%s3 + $0x1b0] sm:$0xf] %vm790, %v770
  %900 = vst.msk [vmem:[%s3 + $0x1b4] sm:$0xf] %vm790, %v771
  %901 = vst.msk [vmem:[%s3 + $0x1b8] sm:$0xf] %vm790, %v772
  %902 = vst.msk [vmem:[%s3 + $0x1bc] sm:$0xf] %vm790, %v773
  %903 = vst.msk [vmem:[%s3 + $0x1c0] sm:$0xf] %vm790, %v774
  %904 = vst.msk [vmem:[%s3 + $0x1c4] sm:$0xf] %vm790, %v775
  %905 = vst.msk [vmem:[%s3 + $0x1c8] sm:$0xf] %vm790, %v776
  %906 = vst.msk [vmem:[%s3 + $0x1cc] sm:$0xf] %vm790, %v777
  %907 = vst.msk [vmem:[%s3 + $0x1d0] sm:$0xf] %vm790, %v778
  %908 = vst.msk [vmem:[%s3 + $0x1d4] sm:$0xf] %vm790, %v779
  %909 = vst.msk [vmem:[%s3 + $0x1d8] sm:$0xf] %vm790, %v780
  %910 = vst.msk [vmem:[%s3 + $0x1dc] sm:$0xf] %vm790, %v781
  %911 = vst.msk [vmem:[%s3 + $0x1e0] sm:$0xf] %vm790, %v782
  %912 = vst.msk [vmem:[%s3 + $0x1e4] sm:$0xf] %vm790, %v783
  %913 = vst.msk [vmem:[%s3 + $0x1e8] sm:$0xf] %vm790, %v784
  %914 = vst.msk [vmem:[%s3 + $0x1ec] sm:$0xf] %vm790, %v785
  %915 = vst.msk [vmem:[%s3 + $0x1f0] sm:$0xf] %vm790, %v786
  %916 = vst.msk [vmem:[%s3 + $0x1f4] sm:$0xf] %vm790, %v787
  %917 = vst.msk [vmem:[%s3 + $0x1f8] sm:$0xf] %vm790, %v788
  %918 = vst.msk [vmem:[%s3 + $0x1fc] sm:$0xf] %vm790, %v789
  // Predicated region
  $region14: #{decoder_bn_forward.10} parent=0 // pred_check
    _
  $region15: #{decoder_bn_forward.10} parent=0 // pred_check_branch
    %920 = sbr.rel (0) target = $region17
  $region16: #{decoder_bn_forward.10} parent=0 // pred_region
    _
  $region17: #{decoder_bn_forward.10} parent=0 // pred_fallthru
    _
  // Predicated region
  $region18: #{decoder_bn_forward.10} parent=0 // pred_check
    _
  $region19: #{decoder_bn_forward.10} parent=0 // pred_check_branch
    %922 = sbr.rel (0) target = $region21
  $region20: #{decoder_bn_forward.10} parent=0 // pred_region
    _
  $region21: #{decoder_bn_forward.10} parent=0 // pred_fallthru
    _

// kernel: decoder_bn_forward.11
$region0: #{decoder_bn_forward.11}
  #allocation0 [shape = 'u32[]', space=smem, size = 0x4, offset = 0x4, fixed_abs, tag = 'smem constant byte address 0x4 - core index']
  #allocation1 [shape = 'u32[72,128]{1,0:T(1,128)}', space=vmem, size = 0x9000, scoped, tag = 'internal scratch']
  #allocation2 [shape = 'f32[512,3]{1,0:T(8,128)}', space=vmem, size = 0x40000, scoped, tag = 'scratch operand']
  %s0 = inlined_call_operand.vmem [shape: bf16[4,1024,32], index: 0, kind: input, shape index: {}]
  %s1 = inlined_call_operand.vmem [shape: bf16[4,32,3], index: 1, kind: input, shape index: {}]
  %s2 = inlined_call_operand.vmem [shape: f32[1,3], index: 2, kind: input, shape index: {}]
  %s3 = inlined_call_operand.vmem [shape: f32[4,1024,3], index: 3, kind: output, shape index: {}]
  %s4 = sld [smem:[#allocation0]]
  $region53: #{decoder_bn_forward.11} parent=0
    _
  %s6 = ssub.s32 1, %s4
  %s7 = scalar_select 0, %s6, %s4
  loop: start=0, step=1, limit=10
  $region2: #{decoder_bn_forward.11} parent=0 // loop_pre_header
    _
  $region3: #{decoder_bn_forward.11} parent=0 // loop_header
    %s9 = sphi 0, %s13
    %p10 = scmp.ge.s32.totalorder %s9, 10
    %s16 = sphi 0, %s35
    %s17 = sphi 0, %s31
    %s18 = sphi 0, %s27
    %s19 = sphi 0, %s16
    %s20 = sphi 0, %s17
    %s21 = sphi 0, %s18
    %s22 = sphi 0, %s19
    %s23 = sphi 0, %s20
    %s24 = sphi 0, %s21
    %s42 = sphi 0, %s44
    %s45 = sphi 0, %s42
    %s46 = sphi 0, %s45
    %s62 = sphi 0, %s46
    %s70 = sphi 0, %s72
    %s73 = sphi 0, %s70
    %s74 = sphi 0, %s73
    %s90 = sphi 0, %s74
    %s94 = sphi 0, %s94
    %s96 = sphi 0, %s94
    %s97 = sphi 0, %s96
    %s111 = sphi 0, %s97
    %s119 = sphi 0, %s121
    %s122 = sphi 0, %s119
    %s123 = sphi 0, %s122
    %s139 = sphi 0, %s123
  $region4: #{decoder_bn_forward.11} parent=0 // loop_header_branch
    %12 = sbr.rel (%p10) target = $region8
  $region5: #{decoder_bn_forward.11} parent=0 // loop_body
    %s14 = ssub.s32 %s9, 1
    %s15 = ssub.s32 %s9, 2
    %s25 = sadd.s32 1, %s18
    %p26 = scmp.ge.s32.totalorder %s25, 1
    %s27 = scalar_select %p26, 0, %s25
    %s28 = sadd.s32 1, %s17
    %s29 = scalar_select %p26, %s28, %s17
    %p30 = scmp.ge.s32.totalorder %s29, 2
    %s31 = scalar_select %p30, 0, %s29
    %s32 = sadd.s32 1, %s16
    %s33 = scalar_select %p30, %s32, %s16
    %p34 = scmp.ge.s32.totalorder %s33, 4
    %s35 = scalar_select %p34, 0, %s33
    %s36 = ssub.s32 %s16, %s35
    %s37 = ssub.s32 %s17, %s31
    %s38 = sor.u32 %s36, %s37
    %s39 = ssub.s32 %s18, %s27
    %s40 = sor.u32 %s38, %s39
    %p41 = scmp.eq.s32.totalorder %s40, 0
    %s43 = sadd.s32 %s42, 1
    %s44 = scalar_select %p41, %s42, %s43
    %p47 = pneg %p41
    %p48 = scmp.eq.s32.totalorder %s9, 7
    %p49 = por %p47, %p48
    %p50 = scmp.ne.s32.totalorder %s42, %s45
    %p51 = scmp.eq.s32.totalorder %s9, 0
    %p52 = por %p50, %p51
    %p53 = scmp.ne.s32.totalorder %s42, %s45
    %p54 = scmp.eq.s32.totalorder %s14, 7
    %p55 = por %p53, %p54
    %p56 = scmp.ne.s32.totalorder %s45, %s46
    %p57 = scmp.eq.s32.totalorder %s14, 0
    %p58 = por %p56, %p57
    %p59 = scmp.ne.s32.totalorder %s45, %s46
    %p60 = scmp.eq.s32.totalorder %s15, 7
    %p61 = por %p59, %p60
    %p63 = scmp.ne.s32.totalorder %s46, %s62
    %p64 = scmp.eq.s32.totalorder %s15, 0
    %p65 = por %p63, %p64
    %s66 = ssub.s32 %s16, %s35
    %s67 = ssub.s32 %s18, %s27
    %s68 = sor.u32 %s66, %s67
    %p69 = scmp.eq.s32.totalorder %s68, 0
    %s71 = sadd.s32 %s70, 1
    %s72 = scalar_select %p69, %s70, %s71
    %p75 = pneg %p69
    %p76 = scmp.eq.s32.totalorder %s9, 7
    %p77 = por %p75, %p76
    %p78 = scmp.ne.s32.totalorder %s70, %s73
    %p79 = scmp.eq.s32.totalorder %s9, 0
    %p80 = por %p78, %p79
    %p81 = scmp.ne.s32.totalorder %s70, %s73
    %p82 = scmp.eq.s32.totalorder %s14, 7
    %p83 = por %p81, %p82
    %p84 = scmp.ne.s32.totalorder %s73, %s74
    %p85 = scmp.eq.s32.totalorder %s14, 0
    %p86 = por %p84, %p85
    %p87 = scmp.ne.s32.totalorder %s73, %s74
    %p88 = scmp.eq.s32.totalorder %s15, 7
    %p89 = por %p87, %p88
    %p91 = scmp.ne.s32.totalorder %s74, %s90
    %p92 = scmp.eq.s32.totalorder %s15, 0
    %p93 = por %p91, %p92
    %s95 = sadd.s32 %s94, 1
    %p98 = scmp.eq.s32.totalorder %s9, 7
    %p99 = scmp.ne.s32.totalorder %s94, %s96
    %p100 = scmp.eq.s32.totalorder %s9, 0
    %p101 = por %p99, %p100
    %p102 = scmp.ne.s32.totalorder %s94, %s96
    %p103 = scmp.eq.s32.totalorder %s14, 7
    %p104 = por %p102, %p103
    %p105 = scmp.ne.s32.totalorder %s96, %s97
    %p106 = scmp.eq.s32.totalorder %s14, 0
    %p107 = por %p105, %p106
    %p108 = scmp.ne.s32.totalorder %s96, %s97
    %p109 = scmp.eq.s32.totalorder %s15, 7
    %p110 = por %p108, %p109
    %p112 = scmp.ne.s32.totalorder %s97, %s111
    %p113 = scmp.eq.s32.totalorder %s15, 0
    %p114 = por %p112, %p113
    %s115 = ssub.s32 %s16, %s35
    %s116 = ssub.s32 %s17, %s31
    %s117 = sor.u32 %s115, %s116
    %p118 = scmp.eq.s32.totalorder %s117, 0
    %s120 = sadd.s32 %s119, 1
    %s121 = scalar_select %p118, %s119, %s120
    %p124 = pneg %p118
    %p125 = scmp.eq.s32.totalorder %s9, 7
    %p126 = por %p124, %p125
    %p127 = scmp.ne.s32.totalorder %s119, %s122
    %p128 = scmp.eq.s32.totalorder %s9, 0
    %p129 = por %p127, %p128
    %p130 = scmp.ne.s32.totalorder %s119, %s122
    %p131 = scmp.eq.s32.totalorder %s14, 7
    %p132 = por %p130, %p131
    %p133 = scmp.ne.s32.totalorder %s122, %s123
    %p134 = scmp.eq.s32.totalorder %s14, 0
    %p135 = por %p133, %p134
    %p136 = scmp.ne.s32.totalorder %s122, %s123
    %p137 = scmp.eq.s32.totalorder %s15, 7
    %p138 = por %p136, %p137
    %p140 = scmp.ne.s32.totalorder %s123, %s139
    %p141 = scmp.eq.s32.totalorder %s15, 0
    %p142 = por %p140, %p141
    %p143 = scmp.le.s32.totalorder 1, %s9
    %p144 = scmp.lt.s32.totalorder %s9, 9
    %p145 = pnand %p143, %p144
    %p146 = pneg %p145
    // Predicated region
    $region9: #{decoder_bn_forward.11} parent=5 // pred_check
      _
    $region10: #{decoder_bn_forward.11} parent=5 // pred_check_branch
      %148 = sbr.rel (%p145) target = $region12
    $region11: #{decoder_bn_forward.11} parent=5 // pred_region
      %s149 = ssub.s32 %s9, 1
      // Predicated region
      $region13: #{decoder_bn_forward.11} parent=11 // pred_check
        %p150 = pneg %p107
      $region14: #{decoder_bn_forward.11} parent=11 // pred_check_branch
        %152 = sbr.rel (%p150) target = $region16
      $region15: #{decoder_bn_forward.11} parent=11 // pred_region
        _
      $region16: #{decoder_bn_forward.11} parent=11 // pred_fallthru
        _
    $region12: #{decoder_bn_forward.11} parent=5 // pred_fallthru
      _
    %p153 = scmp.lt.s32.totalorder %s9, 8
    // Predicated region
    $region17: #{decoder_bn_forward.11} parent=5 // pred_check
      %p154 = pneg %p153
    $region18: #{decoder_bn_forward.11} parent=5 // pred_check_branch
      %156 = sbr.rel (%p154) target = $region20
    $region19: #{decoder_bn_forward.11} parent=5 // pred_region
      // Predicated region
      $region21: #{decoder_bn_forward.11} parent=19 // pred_check
        %p157 = pneg %p52
      $region22: #{decoder_bn_forward.11} parent=19 // pred_check_branch
        %159 = sbr.rel (%p157) target = $region24
      $region23: #{decoder_bn_forward.11} parent=19 // pred_region
        %s160 = smul.u32 64, %s17
        %p161 = scmp.lt.s32.totalorder %s16, 3
        %s162 = scalar_select %p161, %s16, 3
        %p163 = scmp.lt.s32.totalorder %s160, 127
        %s164 = scalar_select %p163, %s160, 127
        %p165 = scmp.lt.s32.totalorder %s18, 0
        %s166 = scalar_select %p165, %s18, 0
        %s167 = sadd.s32 %s166, %s164
        %s168 = smul.addr %s162, 128
        %s169 = sadd.s32 %s167, %s168
        %s170 = smul.addr %s169, 4
        %s171 = scalar_lea.vmem %s0, %s170
        %s172 = smul.u32 64, %s17
      $region24: #{decoder_bn_forward.11} parent=19 // pred_fallthru
        _
      // Predicated region
      $region25: #{decoder_bn_forward.11} parent=19 // pred_check
        %p173 = pneg %p80
      $region26: #{decoder_bn_forward.11} parent=19 // pred_check_branch
        %175 = sbr.rel (%p173) target = $region28
      $region27: #{decoder_bn_forward.11} parent=19 // pred_region
        %s176 = smul.u32 4, %s18
        %p177 = scmp.lt.s32.totalorder %s16, 3
        %s178 = scalar_select %p177, %s16, 3
        %p179 = scmp.lt.s32.totalorder %s176, 3
        %s180 = scalar_select %p179, %s176, 3
        %s181 = smul.addr %s178, 4
        %s182 = sadd.s32 %s180, %s181
        %s183 = smul.addr %s182, 4
        %s184 = scalar_lea.vmem %s1, %s183
        %s185 = smul.u32 4, %s18
      $region28: #{decoder_bn_forward.11} parent=19 // pred_fallthru
        _
    $region20: #{decoder_bn_forward.11} parent=5 // pred_fallthru
      _
    %p186 = scmp.le.s32.totalorder 1, %s9
    %p187 = scmp.lt.s32.totalorder %s9, 9
    %p188 = pnand %p186, %p187
    %p189 = pneg %p188
    // Predicated region
    $region29: #{decoder_bn_forward.11} parent=5 // pred_check
      _
    $region30: #{decoder_bn_forward.11} parent=5 // pred_check_branch
      %191 = sbr.rel (%p188) target = $region32
    $region31: #{decoder_bn_forward.11} parent=5 // pred_region
      %s192 = ssub.s32 %s9, 1
      %s193 = smul.u32 64, %s20
      %p194 = scmp.lt.s32.totalorder %s19, 3
      %s195 = scalar_select %p194, %s19, 3
      %p196 = scmp.lt.s32.totalorder %s193, 127
      %s197 = scalar_select %p196, %s193, 127
      %p198 = scmp.lt.s32.totalorder %s21, 0
      %s199 = scalar_select %p198, %s21, 0
      %s200 = sadd.s32 %s199, %s197
      %s201 = smul.addr %s195, 128
      %s202 = sadd.s32 %s200, %s201
      %s203 = smul.addr %s202, 4
      %s204 = scalar_lea.vmem %s0, %s203
      %p205 = pneg %p58
      %p206 = pneg %p55
      %s207 = smul.u32 4, %s21
      %p208 = scmp.lt.s32.totalorder %s19, 3
      %s209 = scalar_select %p208, %s19, 3
      %p210 = scmp.lt.s32.totalorder %s207, 3
      %s211 = scalar_select %p210, %s207, 3
      %s212 = smul.addr %s209, 4
      %s213 = sadd.s32 %s211, %s212
      %s214 = smul.addr %s213, 4
      %s215 = scalar_lea.vmem %s1, %s214
      %p216 = pneg %p86
      %p217 = pneg %p83
      %p218 = pneg %p107
      %p219 = pneg %p104
      %p220 = pneg %p135
      %p221 = pneg %p132
      %s222 = smul.u32 64, %s20
      %p223 = scmp.lt.s32.totalorder %s19, 3
      %s224 = scalar_select %p223, %s19, 3
      %p225 = scmp.lt.s32.totalorder %s222, 127
      %s226 = scalar_select %p225, %s222, 127
      %s227 = smul.addr %s224, 128
      %s228 = sadd.s32 %s226, %s227
      %s229 = smul.addr %s228, 8
      %s230 = scalar_lea.vmem %s3, %s229
      %s231 = smul.u32 64, %s20
      %p232 = scmp.lt.s32.totalorder %s19, 3
      %s233 = scalar_select %p232, %s19, 3
      %p234 = scmp.lt.s32.totalorder %s231, 127
      %s235 = scalar_select %p234, %s231, 127
      %p236 = scmp.lt.s32.totalorder %s21, 0
      %s237 = scalar_select %p236, %s21, 0
      %s238 = sadd.s32 %s237, %s235
      %s239 = smul.addr %s233, 128
      %s240 = sadd.s32 %s238, %s239
      %s241 = smul.addr %s240, 4
      %s242 = scalar_lea.vmem %s0, %s241
      %s243 = smul.u32 64, %s20
      %s244 = smul.u32 4, %s21
      %p245 = scmp.lt.s32.totalorder %s19, 3
      %s246 = scalar_select %p245, %s19, 3
      %p247 = scmp.lt.s32.totalorder %s244, 3
      %s248 = scalar_select %p247, %s244, 3
      %s249 = smul.addr %s246, 4
      %s250 = sadd.s32 %s248, %s249
      %s251 = smul.addr %s250, 4
      %s252 = scalar_lea.vmem %s1, %s251
      %s253 = smul.u32 4, %s21
      %s254 = smul.u32 64, %s20
      %p255 = scmp.lt.s32.totalorder %s19, 3
      %s256 = scalar_select %p255, %s19, 3
      %p257 = scmp.lt.s32.totalorder %s254, 127
      %s258 = scalar_select %p257, %s254, 127
      %s259 = smul.addr %s256, 128
      %s260 = sadd.s32 %s258, %s259
      %s261 = smul.addr %s260, 8
      %s262 = scalar_lea.vmem %s3, %s261
      %s263 = smul.u32 64, %s20
      %p265 = scmp.eq.s32.totalorder %s21, 0
      // Predicated region
      $region33: #{decoder_bn_forward.11} parent=31 // pred_check
        %p266 = pneg %p265
      $region34: #{decoder_bn_forward.11} parent=31 // pred_check_branch
        %268 = sbr.rel (%p266) target = $region36
      $region35: #{decoder_bn_forward.11} parent=31 // pred_region
        %vm269 = vcmask 23552
        %270 = vst.msk [vmem:[#allocation2] sm:$0xff] %vm269, 0.0
        %271 = vst.msk [vmem:[#allocation2 + $0x8] sm:$0xff] %vm269, 0.0
        %272 = vst.msk [vmem:[#allocation2 + $0x10] sm:$0xff] %vm269, 0.0
        %273 = vst.msk [vmem:[#allocation2 + $0x18] sm:$0xff] %vm269, 0.0
        %274 = vst.msk [vmem:[#allocation2 + $0x20] sm:$0xff] %vm269, 0.0
        %275 = vst.msk [vmem:[#allocation2 + $0x28] sm:$0xff] %vm269, 0.0
        %276 = vst.msk [vmem:[#allocation2 + $0x30] sm:$0xff] %vm269, 0.0
        %277 = vst.msk [vmem:[#allocation2 + $0x38] sm:$0xff] %vm269, 0.0
        %278 = vst.msk [vmem:[#allocation2 + $0x40] sm:$0xff] %vm269, 0.0
        %279 = vst.msk [vmem:[#allocation2 + $0x48] sm:$0xff] %vm269, 0.0
        %280 = vst.msk [vmem:[#allocation2 + $0x50] sm:$0xff] %vm269, 0.0
        %281 = vst.msk [vmem:[#allocation2 + $0x58] sm:$0xff] %vm269, 0.0
        %282 = vst.msk [vmem:[#allocation2 + $0x60] sm:$0xff] %vm269, 0.0
        %283 = vst.msk [vmem:[#allocation2 + $0x68] sm:$0xff] %vm269, 0.0
        %284 = vst.msk [vmem:[#allocation2 + $0x70] sm:$0xff] %vm269, 0.0
        %285 = vst.msk [vmem:[#allocation2 + $0x78] sm:$0xff] %vm269, 0.0
        %286 = vst.msk [vmem:[#allocation2 + $0x80] sm:$0xff] %vm269, 0.0
        %287 = vst.msk [vmem:[#allocation2 + $0x88] sm:$0xff] %vm269, 0.0
        %288 = vst.msk [vmem:[#allocation2 + $0x90] sm:$0xff] %vm269, 0.0
        %289 = vst.msk [vmem:[#allocation2 + $0x98] sm:$0xff] %vm269, 0.0
        %290 = vst.msk [vmem:[#allocation2 + $0xa0] sm:$0xff] %vm269, 0.0
        %291 = vst.msk [vmem:[#allocation2 + $0xa8] sm:$0xff] %vm269, 0.0
        %292 = vst.msk [vmem:[#allocation2 + $0xb0] sm:$0xff] %vm269, 0.0
        %293 = vst.msk [vmem:[#allocation2 + $0xb8] sm:$0xff] %vm269, 0.0
        %294 = vst.msk [vmem:[#allocation2 + $0xc0] sm:$0xff] %vm269, 0.0
        %295 = vst.msk [vmem:[#allocation2 + $0xc8] sm:$0xff] %vm269, 0.0
        %296 = vst.msk [vmem:[#allocation2 + $0xd0] sm:$0xff] %vm269, 0.0
        %297 = vst.msk [vmem:[#allocation2 + $0xd8] sm:$0xff] %vm269, 0.0
        %298 = vst.msk [vmem:[#allocation2 + $0xe0] sm:$0xff] %vm269, 0.0
        %299 = vst.msk [vmem:[#allocation2 + $0xe8] sm:$0xff] %vm269, 0.0
        %300 = vst.msk [vmem:[#allocation2 + $0xf0] sm:$0xff] %vm269, 0.0
        %301 = vst.msk [vmem:[#allocation2 + $0xf8] sm:$0xff] %vm269, 0.0
        %302 = vst.msk [vmem:[#allocation2 + $0x100] sm:$0xff] %vm269, 0.0
        %303 = vst.msk [vmem:[#allocation2 + $0x108] sm:$0xff] %vm269, 0.0
        %304 = vst.msk [vmem:[#allocation2 + $0x110] sm:$0xff] %vm269, 0.0
        %305 = vst.msk [vmem:[#allocation2 + $0x118] sm:$0xff] %vm269, 0.0
        %306 = vst.msk [vmem:[#allocation2 + $0x120] sm:$0xff] %vm269, 0.0
        %307 = vst.msk [vmem:[#allocation2 + $0x128] sm:$0xff] %vm269, 0.0
        %308 = vst.msk [vmem:[#allocation2 + $0x130] sm:$0xff] %vm269, 0.0
        %309 = vst.msk [vmem:[#allocation2 + $0x138] sm:$0xff] %vm269, 0.0
        %310 = vst.msk [vmem:[#allocation2 + $0x140] sm:$0xff] %vm269, 0.0
        %311 = vst.msk [vmem:[#allocation2 + $0x148] sm:$0xff] %vm269, 0.0
        %312 = vst.msk [vmem:[#allocation2 + $0x150] sm:$0xff] %vm269, 0.0
        %313 = vst.msk [vmem:[#allocation2 + $0x158] sm:$0xff] %vm269, 0.0
        %314 = vst.msk [vmem:[#allocation2 + $0x160] sm:$0xff] %vm269, 0.0
        %315 = vst.msk [vmem:[#allocation2 + $0x168] sm:$0xff] %vm269, 0.0
        %316 = vst.msk [vmem:[#allocation2 + $0x170] sm:$0xff] %vm269, 0.0
        %317 = vst.msk [vmem:[#allocation2 + $0x178] sm:$0xff] %vm269, 0.0
        %318 = vst.msk [vmem:[#allocation2 + $0x180] sm:$0xff] %vm269, 0.0
        %319 = vst.msk [vmem:[#allocation2 + $0x188] sm:$0xff] %vm269, 0.0
        %320 = vst.msk [vmem:[#allocation2 + $0x190] sm:$0xff] %vm269, 0.0
        %321 = vst.msk [vmem:[#allocation2 + $0x198] sm:$0xff] %vm269, 0.0
        %322 = vst.msk [vmem:[#allocation2 + $0x1a0] sm:$0xff] %vm269, 0.0
        %323 = vst.msk [vmem:[#allocation2 + $0x1a8] sm:$0xff] %vm269, 0.0
        %324 = vst.msk [vmem:[#allocation2 + $0x1b0] sm:$0xff] %vm269, 0.0
        %325 = vst.msk [vmem:[#allocation2 + $0x1b8] sm:$0xff] %vm269, 0.0
        %326 = vst.msk [vmem:[#allocation2 + $0x1c0] sm:$0xff] %vm269, 0.0
        %327 = vst.msk [vmem:[#allocation2 + $0x1c8] sm:$0xff] %vm269, 0.0
        %328 = vst.msk [vmem:[#allocation2 + $0x1d0] sm:$0xff] %vm269, 0.0
        %329 = vst.msk [vmem:[#allocation2 + $0x1d8] sm:$0xff] %vm269, 0.0
        %330 = vst.msk [vmem:[#allocation2 + $0x1e0] sm:$0xff] %vm269, 0.0
        %331 = vst.msk [vmem:[#allocation2 + $0x1e8] sm:$0xff] %vm269, 0.0
        %332 = vst.msk [vmem:[#allocation2 + $0x1f0] sm:$0xff] %vm269, 0.0
        %333 = vst.msk [vmem:[#allocation2 + $0x1f8] sm:$0xff] %vm269, 0.0
      $region36: #{decoder_bn_forward.11} parent=31 // pred_fallthru
        _
      %v334 = vld [vmem:[#allocation2] sm:$0xff]
      %v335 = vld [vmem:[#allocation2 + $0x8] sm:$0xff]
      %v336 = vld [vmem:[#allocation2 + $0x10] sm:$0xff]
      %v337 = vld [vmem:[#allocation2 + $0x18] sm:$0xff]
      %v338 = vld [vmem:[#allocation2 + $0x20] sm:$0xff]
      %v339 = vld [vmem:[#allocation2 + $0x28] sm:$0xff]
      %v340 = vld [vmem:[#allocation2 + $0x30] sm:$0xff]
      %v341 = vld [vmem:[#allocation2 + $0x38] sm:$0xff]
      %v342 = vld [vmem:[#allocation2 + $0x40] sm:$0xff]
      %v343 = vld [vmem:[#allocation2 + $0x48] sm:$0xff]
      %v344 = vld [vmem:[#allocation2 + $0x50] sm:$0xff]
      %v345 = vld [vmem:[#allocation2 + $0x58] sm:$0xff]
      %v346 = vld [vmem:[#allocation2 + $0x60] sm:$0xff]
      %v347 = vld [vmem:[#allocation2 + $0x68] sm:$0xff]
      %v348 = vld [vmem:[#allocation2 + $0x70] sm:$0xff]
      %v349 = vld [vmem:[#allocation2 + $0x78] sm:$0xff]
      %v350 = vld [vmem:[#allocation2 + $0x80] sm:$0xff]
      %v351 = vld [vmem:[#allocation2 + $0x88] sm:$0xff]
      %v352 = vld [vmem:[#allocation2 + $0x90] sm:$0xff]
      %v353 = vld [vmem:[#allocation2 + $0x98] sm:$0xff]
      %v354 = vld [vmem:[#allocation2 + $0xa0] sm:$0xff]
      %v355 = vld [vmem:[#allocation2 + $0xa8] sm:$0xff]
      %v356 = vld [vmem:[#allocation2 + $0xb0] sm:$0xff]
      %v357 = vld [vmem:[#allocation2 + $0xb8] sm:$0xff]
      %v358 = vld [vmem:[#allocation2 + $0xc0] sm:$0xff]
      %v359 = vld [vmem:[#allocation2 + $0xc8] sm:$0xff]
      %v360 = vld [vmem:[#allocation2 + $0xd0] sm:$0xff]
      %v361 = vld [vmem:[#allocation2 + $0xd8] sm:$0xff]
      %v362 = vld [vmem:[#allocation2 + $0xe0] sm:$0xff]
      %v363 = vld [vmem:[#allocation2 + $0xe8] sm:$0xff]
      %v364 = vld [vmem:[#allocation2 + $0xf0] sm:$0xff]
      %v365 = vld [vmem:[#allocation2 + $0xf8] sm:$0xff]
      %v366 = vld [vmem:[#allocation2 + $0x100] sm:$0xff]
      %v367 = vld [vmem:[#allocation2 + $0x108] sm:$0xff]
      %v368 = vld [vmem:[#allocation2 + $0x110] sm:$0xff]
      %v369 = vld [vmem:[#allocation2 + $0x118] sm:$0xff]
      %v370 = vld [vmem:[#allocation2 + $0x120] sm:$0xff]
      %v371 = vld [vmem:[#allocation2 + $0x128] sm:$0xff]
      %v372 = vld [vmem:[#allocation2 + $0x130] sm:$0xff]
      %v373 = vld [vmem:[#allocation2 + $0x138] sm:$0xff]
      %v374 = vld [vmem:[#allocation2 + $0x140] sm:$0xff]
      %v375 = vld [vmem:[#allocation2 + $0x148] sm:$0xff]
      %v376 = vld [vmem:[#allocation2 + $0x150] sm:$0xff]
      %v377 = vld [vmem:[#allocation2 + $0x158] sm:$0xff]
      %v378 = vld [vmem:[#allocation2 + $0x160] sm:$0xff]
      %v379 = vld [vmem:[#allocation2 + $0x168] sm:$0xff]
      %v380 = vld [vmem:[#allocation2 + $0x170] sm:$0xff]
      %v381 = vld [vmem:[#allocation2 + $0x178] sm:$0xff]
      %v382 = vld [vmem:[#allocation2 + $0x180] sm:$0xff]
      %v383 = vld [vmem:[#allocation2 + $0x188] sm:$0xff]
      %v384 = vld [vmem:[#allocation2 + $0x190] sm:$0xff]
      %v385 = vld [vmem:[#allocation2 + $0x198] sm:$0xff]
      %v386 = vld [vmem:[#allocation2 + $0x1a0] sm:$0xff]
      %v387 = vld [vmem:[#allocation2 + $0x1a8] sm:$0xff]
      %v388 = vld [vmem:[#allocation2 + $0x1b0] sm:$0xff]
      %v389 = vld [vmem:[#allocation2 + $0x1b8] sm:$0xff]
      %v390 = vld [vmem:[#allocation2 + $0x1c0] sm:$0xff]
      %v391 = vld [vmem:[#allocation2 + $0x1c8] sm:$0xff]
      %v392 = vld [vmem:[#allocation2 + $0x1d0] sm:$0xff]
      %v393 = vld [vmem:[#allocation2 + $0x1d8] sm:$0xff]
      %v394 = vld [vmem:[#allocation2 + $0x1e0] sm:$0xff]
      %v395 = vld [vmem:[#allocation2 + $0x1e8] sm:$0xff]
      %v396 = vld [vmem:[#allocation2 + $0x1f0] sm:$0xff]
      %v397 = vld [vmem:[#allocation2 + $0x1f8] sm:$0xff]
      %v398 = vld [vmem:[%s242] sm:$0xf]
      %v399 = vld [vmem:[%s242 + $0x4] sm:$0xf]
      %v400 = vld [vmem:[%s242 + $0x8] sm:$0xf]
      %v401 = vld [vmem:[%s242 + $0xc] sm:$0xf]
      %v402 = vld [vmem:[%s242 + $0x10] sm:$0xf]
      %v403 = vld [vmem:[%s242 + $0x14] sm:$0xf]
      %v404 = vld [vmem:[%s242 + $0x18] sm:$0xf]
      %v405 = vld [vmem:[%s242 + $0x1c] sm:$0xf]
      %v406 = vld [vmem:[%s242 + $0x20] sm:$0xf]
      %v407 = vld [vmem:[%s242 + $0x24] sm:$0xf]
      %v408 = vld [vmem:[%s242 + $0x28] sm:$0xf]
      %v409 = vld [vmem:[%s242 + $0x2c] sm:$0xf]
      %v410 = vld [vmem:[%s242 + $0x30] sm:$0xf]
      %v411 = vld [vmem:[%s242 + $0x34] sm:$0xf]
      %v412 = vld [vmem:[%s242 + $0x38] sm:$0xf]
      %v413 = vld [vmem:[%s242 + $0x3c] sm:$0xf]
      %v414 = vld [vmem:[%s242 + $0x40] sm:$0xf]
      %v415 = vld [vmem:[%s242 + $0x44] sm:$0xf]
      %v416 = vld [vmem:[%s242 + $0x48] sm:$0xf]
      %v417 = vld [vmem:[%s242 + $0x4c] sm:$0xf]
      %v418 = vld [vmem:[%s242 + $0x50] sm:$0xf]
      %v419 = vld [vmem:[%s242 + $0x54] sm:$0xf]
      %v420 = vld [vmem:[%s242 + $0x58] sm:$0xf]
      %v421 = vld [vmem:[%s242 + $0x5c] sm:$0xf]
      %v422 = vld [vmem:[%s242 + $0x60] sm:$0xf]
      %v423 = vld [vmem:[%s242 + $0x64] sm:$0xf]
      %v424 = vld [vmem:[%s242 + $0x68] sm:$0xf]
      %v425 = vld [vmem:[%s242 + $0x6c] sm:$0xf]
      %v426 = vld [vmem:[%s242 + $0x70] sm:$0xf]
      %v427 = vld [vmem:[%s242 + $0x74] sm:$0xf]
      %v428 = vld [vmem:[%s242 + $0x78] sm:$0xf]
      %v429 = vld [vmem:[%s242 + $0x7c] sm:$0xf]
      %v430 = vld [vmem:[%s242 + $0x80] sm:$0xf]
      %v431 = vld [vmem:[%s242 + $0x84] sm:$0xf]
      %v432 = vld [vmem:[%s242 + $0x88] sm:$0xf]
      %v433 = vld [vmem:[%s242 + $0x8c] sm:$0xf]
      %v434 = vld [vmem:[%s242 + $0x90] sm:$0xf]
      %v435 = vld [vmem:[%s242 + $0x94] sm:$0xf]
      %v436 = vld [vmem:[%s242 + $0x98] sm:$0xf]
      %v437 = vld [vmem:[%s242 + $0x9c] sm:$0xf]
      %v438 = vld [vmem:[%s242 + $0xa0] sm:$0xf]
      %v439 = vld [vmem:[%s242 + $0xa4] sm:$0xf]
      %v440 = vld [vmem:[%s242 + $0xa8] sm:$0xf]
      %v441 = vld [vmem:[%s242 + $0xac] sm:$0xf]
      %v442 = vld [vmem:[%s242 + $0xb0] sm:$0xf]
      %v443 = vld [vmem:[%s242 + $0xb4] sm:$0xf]
      %v444 = vld [vmem:[%s242 + $0xb8] sm:$0xf]
      %v445 = vld [vmem:[%s242 + $0xbc] sm:$0xf]
      %v446 = vld [vmem:[%s242 + $0xc0] sm:$0xf]
      %v447 = vld [vmem:[%s242 + $0xc4] sm:$0xf]
      %v448 = vld [vmem:[%s242 + $0xc8] sm:$0xf]
      %v449 = vld [vmem:[%s242 + $0xcc] sm:$0xf]
      %v450 = vld [vmem:[%s242 + $0xd0] sm:$0xf]
      %v451 = vld [vmem:[%s242 + $0xd4] sm:$0xf]
      %v452 = vld [vmem:[%s242 + $0xd8] sm:$0xf]
      %v453 = vld [vmem:[%s242 + $0xdc] sm:$0xf]
      %v454 = vld [vmem:[%s242 + $0xe0] sm:$0xf]
      %v455 = vld [vmem:[%s242 + $0xe4] sm:$0xf]
      %v456 = vld [vmem:[%s242 + $0xe8] sm:$0xf]
      %v457 = vld [vmem:[%s242 + $0xec] sm:$0xf]
      %v458 = vld [vmem:[%s242 + $0xf0] sm:$0xf]
      %v459 = vld [vmem:[%s242 + $0xf4] sm:$0xf]
      %v460 = vld [vmem:[%s242 + $0xf8] sm:$0xf]
      %v461 = vld [vmem:[%s242 + $0xfc] sm:$0xf]
      %v462 = vld [vmem:[%s252] sm:$0xf]
      %v463 = vld [vmem:[%s252 + $0x4] sm:$0xf]
      %v464 = vld [vmem:[%s252 + $0x8] sm:$0xf]
      %v465 = vld [vmem:[%s252 + $0xc] sm:$0xf]
      %v530 = vunpack.c.l.b16 %v398
      %v531 = vunpack.c.l.b16 %v399
      %v532 = vunpack.c.l.b16 %v400
      %v533 = vunpack.c.l.b16 %v401
      %v534 = vunpack.c.l.b16 %v402
      %v535 = vunpack.c.l.b16 %v403
      %v536 = vunpack.c.l.b16 %v404
      %v537 = vunpack.c.l.b16 %v405
      %v538 = vunpack.c.l.b16 %v406
      %v539 = vunpack.c.l.b16 %v407
      %v540 = vunpack.c.l.b16 %v408
      %v541 = vunpack.c.l.b16 %v409
      %v542 = vunpack.c.l.b16 %v410
      %v543 = vunpack.c.l.b16 %v411
      %v544 = vunpack.c.l.b16 %v412
      %v545 = vunpack.c.l.b16 %v413
      %v546 = vunpack.c.l.b16 %v414
      %v547 = vunpack.c.l.b16 %v415
      %v548 = vunpack.c.l.b16 %v416
      %v549 = vunpack.c.l.b16 %v417
      %v550 = vunpack.c.l.b16 %v418
      %v551 = vunpack.c.l.b16 %v419
      %v552 = vunpack.c.l.b16 %v420
      %v553 = vunpack.c.l.b16 %v421
      %v554 = vunpack.c.l.b16 %v422
      %v555 = vunpack.c.l.b16 %v423
      %v556 = vunpack.c.l.b16 %v424
      %v557 = vunpack.c.l.b16 %v425
      %v558 = vunpack.c.l.b16 %v426
      %v559 = vunpack.c.l.b16 %v427
      %v560 = vunpack.c.l.b16 %v428
      %v561 = vunpack.c.l.b16 %v429
      %v562 = vunpack.c.l.b16 %v430
      %v563 = vunpack.c.l.b16 %v431
      %v564 = vunpack.c.l.b16 %v432
      %v565 = vunpack.c.l.b16 %v433
      %v566 = vunpack.c.l.b16 %v434
      %v567 = vunpack.c.l.b16 %v435
      %v568 = vunpack.c.l.b16 %v436
      %v569 = vunpack.c.l.b16 %v437
      %v570 = vunpack.c.l.b16 %v438
      %v571 = vunpack.c.l.b16 %v439
      %v572 = vunpack.c.l.b16 %v440
      %v573 = vunpack.c.l.b16 %v441
      %v574 = vunpack.c.l.b16 %v442
      %v575 = vunpack.c.l.b16 %v443
      %v576 = vunpack.c.l.b16 %v444
      %v577 = vunpack.c.l.b16 %v445
      %v578 = vunpack.c.l.b16 %v446
      %v579 = vunpack.c.l.b16 %v447
      %v580 = vunpack.c.l.b16 %v448
      %v581 = vunpack.c.l.b16 %v449
      %v582 = vunpack.c.l.b16 %v450
      %v583 = vunpack.c.l.b16 %v451
      %v584 = vunpack.c.l.b16 %v452
      %v585 = vunpack.c.l.b16 %v453
      %v586 = vunpack.c.l.b16 %v454
      %v587 = vunpack.c.l.b16 %v455
      %v588 = vunpack.c.l.b16 %v456
      %v589 = vunpack.c.l.b16 %v457
      %v590 = vunpack.c.l.b16 %v458
      %v591 = vunpack.c.l.b16 %v459
      %v592 = vunpack.c.l.b16 %v460
      %v593 = vunpack.c.l.b16 %v461
      %v594 = vpack.c.b16 %v531, %v530
      %v595 = vpack.c.b16 %v533, %v532
      %v596 = vpack.c.b16 %v535, %v534
      %v597 = vpack.c.b16 %v537, %v536
      %v598 = vpack.c.b16 %v539, %v538
      %v599 = vpack.c.b16 %v541, %v540
      %v600 = vpack.c.b16 %v543, %v542
      %v601 = vpack.c.b16 %v545, %v544
      %v602 = vpack.c.b16 %v547, %v546
      %v603 = vpack.c.b16 %v549, %v548
      %v604 = vpack.c.b16 %v551, %v550
      %v605 = vpack.c.b16 %v553, %v552
      %v606 = vpack.c.b16 %v555, %v554
      %v607 = vpack.c.b16 %v557, %v556
      %v608 = vpack.c.b16 %v559, %v558
      %v609 = vpack.c.b16 %v561, %v560
      %v610 = vpack.c.b16 %v563, %v562
      %v611 = vpack.c.b16 %v565, %v564
      %v612 = vpack.c.b16 %v567, %v566
      %v613 = vpack.c.b16 %v569, %v568
      %v614 = vpack.c.b16 %v571, %v570
      %v615 = vpack.c.b16 %v573, %v572
      %v616 = vpack.c.b16 %v575, %v574
      %v617 = vpack.c.b16 %v577, %v576
      %v618 = vpack.c.b16 %v579, %v578
      %v619 = vpack.c.b16 %v581, %v580
      %v620 = vpack.c.b16 %v583, %v582
      %v621 = vpack.c.b16 %v585, %v584
      %v622 = vpack.c.b16 %v587, %v586
      %v623 = vpack.c.b16 %v589, %v588
      %v624 = vpack.c.b16 %v591, %v590
      %v625 = vpack.c.b16 %v593, %v592
      %v630 = vunpack.c.l.b16 %v462
      %v631 = vunpack.c.l.b16 %v463
      %v632 = vunpack.c.l.b16 %v464
      %v633 = vunpack.c.l.b16 %v465
      %v634 = vpack.c.b16 %v631, %v630
      %v635 = vpack.c.b16 %v633, %v632
      %vm638 = vcmask 261120
      %v640 = vsel %vm638, %v594, 0
      %v643 = vsel %vm638, %v595, 0
      %v646 = vsel %vm638, %v596, 0
      %v649 = vsel %vm638, %v597, 0
      %v652 = vsel %vm638, %v598, 0
      %v655 = vsel %vm638, %v599, 0
      %v658 = vsel %vm638, %v600, 0
      %v661 = vsel %vm638, %v601, 0
      %v664 = vsel %vm638, %v602, 0
      %v667 = vsel %vm638, %v603, 0
      %v670 = vsel %vm638, %v604, 0
      %v673 = vsel %vm638, %v605, 0
      %v676 = vsel %vm638, %v606, 0
      %v679 = vsel %vm638, %v607, 0
      %v682 = vsel %vm638, %v608, 0
      %v685 = vsel %vm638, %v609, 0
      %v688 = vsel %vm638, %v610, 0
      %v691 = vsel %vm638, %v611, 0
      %v694 = vsel %vm638, %v612, 0
      %v697 = vsel %vm638, %v613, 0
      %v700 = vsel %vm638, %v614, 0
      %v703 = vsel %vm638, %v615, 0
      %v706 = vsel %vm638, %v616, 0
      %v709 = vsel %vm638, %v617, 0
      %v712 = vsel %vm638, %v618, 0
      %v715 = vsel %vm638, %v619, 0
      %v718 = vsel %vm638, %v620, 0
      %v721 = vsel %vm638, %v621, 0
      %v724 = vsel %vm638, %v622, 0
      %v727 = vsel %vm638, %v623, 0
      %v730 = vsel %vm638, %v624, 0
      %v733 = vsel %vm638, %v625, 0
      %735 = vmatpush.bf16.msra.mxu0 0
      %736 = vmatpush.bf16.msra.mxu0 0
      %737 = vmatpush.bf16.msra.mxu0 0
      %738 = vmatpush.bf16.msra.mxu0 0
      %739 = vmatpush.bf16.msra.mxu0 0
      %740 = vmatpush.bf16.msra.mxu0 0
      %741 = vmatpush.bf16.msra.mxu0 %v635
      %742 = vmatpush.bf16.msra.mxu0 %v634
      %743 = vmatmul.bf16.gmra.mxu0 %v640
      %v744 = vpop.f32.mrf.mxu0
      %v745 = vadd.f32 0.0, %v744
      %v746 = vpop.f32.mrf.mxu0
      %v747 = vadd.f32 0.0, %v746
      %748 = vmatmul.bf16.gmra.mxu0 %v643
      %v749 = vpop.f32.mrf.mxu0
      %v750 = vadd.f32 0.0, %v749
      %v751 = vpop.f32.mrf.mxu0
      %v752 = vadd.f32 0.0, %v751
      %753 = vmatmul.bf16.gmra.mxu0 %v646
      %v754 = vpop.f32.mrf.mxu0
      %v755 = vadd.f32 0.0, %v754
      %v756 = vpop.f32.mrf.mxu0
      %v757 = vadd.f32 0.0, %v756
      %758 = vmatmul.bf16.gmra.mxu0 %v649
      %v759 = vpop.f32.mrf.mxu0
      %v760 = vadd.f32 0.0, %v759
      %v761 = vpop.f32.mrf.mxu0
      %v762 = vadd.f32 0.0, %v761
      %763 = vmatmul.bf16.gmra.mxu0 %v652
      %v764 = vpop.f32.mrf.mxu0
      %v765 = vadd.f32 0.0, %v764
      %v766 = vpop.f32.mrf.mxu0
      %v767 = vadd.f32 0.0, %v766
      %768 = vmatmul.bf16.gmra.mxu0 %v655
      %v769 = vpop.f32.mrf.mxu0
      %v770 = vadd.f32 0.0, %v769
      %v771 = vpop.f32.mrf.mxu0
      %v772 = vadd.f32 0.0, %v771
      %773 = vmatmul.bf16.gmra.mxu0 %v658
      %v774 = vpop.f32.mrf.mxu0
      %v775 = vadd.f32 0.0, %v774
      %v776 = vpop.f32.mrf.mxu0
      %v777 = vadd.f32 0.0, %v776
      %778 = vmatmul.bf16.gmra.mxu0 %v661
      %v779 = vpop.f32.mrf.mxu0
      %v780 = vadd.f32 0.0, %v779
      %v781 = vpop.f32.mrf.mxu0
      %v782 = vadd.f32 0.0, %v781
      %783 = vmatmul.bf16.gmra.mxu0 %v664
      %v784 = vpop.f32.mrf.mxu0
      %v785 = vadd.f32 0.0, %v784
      %v786 = vpop.f32.mrf.mxu0
      %v787 = vadd.f32 0.0, %v786
      %788 = vmatmul.bf16.gmra.mxu0 %v667
      %v789 = vpop.f32.mrf.mxu0
      %v790 = vadd.f32 0.0, %v789
      %v791 = vpop.f32.mrf.mxu0
      %v792 = vadd.f32 0.0, %v791
      %793 = vmatmul.bf16.gmra.mxu0 %v670
      %v794 = vpop.f32.mrf.mxu0
      %v795 = vadd.f32 0.0, %v794
      %v796 = vpop.f32.mrf.mxu0
      %v797 = vadd.f32 0.0, %v796
      %798 = vmatmul.bf16.gmra.mxu0 %v673
      %v799 = vpop.f32.mrf.mxu0
      %v800 = vadd.f32 0.0, %v799
      %v801 = vpop.f32.mrf.mxu0
      %v802 = vadd.f32 0.0, %v801
      %803 = vmatmul.bf16.gmra.mxu0 %v676
      %v804 = vpop.f32.mrf.mxu0
      %v805 = vadd.f32 0.0, %v804
      %v806 = vpop.f32.mrf.mxu0
      %v807 = vadd.f32 0.0, %v806
      %808 = vmatmul.bf16.gmra.mxu0 %v679
      %v809 = vpop.f32.mrf.mxu0
      %v810 = vadd.f32 0.0, %v809
      %v811 = vpop.f32.mrf.mxu0
      %v812 = vadd.f32 0.0, %v811
      %813 = vmatmul.bf16.gmra.mxu0 %v682
      %v814 = vpop.f32.mrf.mxu0
      %v815 = vadd.f32 0.0, %v814
      %v816 = vpop.f32.mrf.mxu0
      %v817 = vadd.f32 0.0, %v816
      %818 = vmatmul.bf16.gmra.mxu0 %v685
      %v819 = vpop.f32.mrf.mxu0
      %v820 = vadd.f32 0.0, %v819
      %v821 = vpop.f32.mrf.mxu0
      %v822 = vadd.f32 0.0, %v821
      %823 = vmatmul.bf16.gmra.mxu0 %v688
      %v824 = vpop.f32.mrf.mxu0
      %v825 = vadd.f32 0.0, %v824
      %v826 = vpop.f32.mrf.mxu0
      %v827 = vadd.f32 0.0, %v826
      %828 = vmatmul.bf16.gmra.mxu0 %v691
      %v829 = vpop.f32.mrf.mxu0
      %v830 = vadd.f32 0.0, %v829
      %v831 = vpop.f32.mrf.mxu0
      %v832 = vadd.f32 0.0, %v831
      %833 = vmatmul.bf16.gmra.mxu0 %v694
      %v834 = vpop.f32.mrf.mxu0
      %v835 = vadd.f32 0.0, %v834
      %v836 = vpop.f32.mrf.mxu0
      %v837 = vadd.f32 0.0, %v836
      %838 = vmatmul.bf16.gmra.mxu0 %v697
      %v839 = vpop.f32.mrf.mxu0
      %v840 = vadd.f32 0.0, %v839
      %v841 = vpop.f32.mrf.mxu0
      %v842 = vadd.f32 0.0, %v841
      %843 = vmatmul.bf16.gmra.mxu0 %v700
      %v844 = vpop.f32.mrf.mxu0
      %v845 = vadd.f32 0.0, %v844
      %v846 = vpop.f32.mrf.mxu0
      %v847 = vadd.f32 0.0, %v846
      %848 = vmatmul.bf16.gmra.mxu0 %v703
      %v849 = vpop.f32.mrf.mxu0
      %v850 = vadd.f32 0.0, %v849
      %v851 = vpop.f32.mrf.mxu0
      %v852 = vadd.f32 0.0, %v851
      %853 = vmatmul.bf16.gmra.mxu0 %v706
      %v854 = vpop.f32.mrf.mxu0
      %v855 = vadd.f32 0.0, %v854
      %v856 = vpop.f32.mrf.mxu0
      %v857 = vadd.f32 0.0, %v856
      %858 = vmatmul.bf16.gmra.mxu0 %v709
      %v859 = vpop.f32.mrf.mxu0
      %v860 = vadd.f32 0.0, %v859
      %v861 = vpop.f32.mrf.mxu0
      %v862 = vadd.f32 0.0, %v861
      %863 = vmatmul.bf16.gmra.mxu0 %v712
      %v864 = vpop.f32.mrf.mxu0
      %v865 = vadd.f32 0.0, %v864
      %v866 = vpop.f32.mrf.mxu0
      %v867 = vadd.f32 0.0, %v866
      %868 = vmatmul.bf16.gmra.mxu0 %v715
      %v869 = vpop.f32.mrf.mxu0
      %v870 = vadd.f32 0.0, %v869
      %v871 = vpop.f32.mrf.mxu0
      %v872 = vadd.f32 0.0, %v871
      %873 = vmatmul.bf16.gmra.mxu0 %v718
      %v874 = vpop.f32.mrf.mxu0
      %v875 = vadd.f32 0.0, %v874
      %v876 = vpop.f32.mrf.mxu0
      %v877 = vadd.f32 0.0, %v876
      %878 = vmatmul.bf16.gmra.mxu0 %v721
      %v879 = vpop.f32.mrf.mxu0
      %v880 = vadd.f32 0.0, %v879
      %v881 = vpop.f32.mrf.mxu0
      %v882 = vadd.f32 0.0, %v881
      %883 = vmatmul.bf16.gmra.mxu0 %v724
      %v884 = vpop.f32.mrf.mxu0
      %v885 = vadd.f32 0.0, %v884
      %v886 = vpop.f32.mrf.mxu0
      %v887 = vadd.f32 0.0, %v886
      %888 = vmatmul.bf16.gmra.mxu0 %v727
      %v889 = vpop.f32.mrf.mxu0
      %v890 = vadd.f32 0.0, %v889
      %v891 = vpop.f32.mrf.mxu0
      %v892 = vadd.f32 0.0, %v891
      %893 = vmatmul.bf16.gmra.mxu0 %v730
      %v894 = vpop.f32.mrf.mxu0
      %v895 = vadd.f32 0.0, %v894
      %v896 = vpop.f32.mrf.mxu0
      %v897 = vadd.f32 0.0, %v896
      %898 = vmatmul.bf16.gmra.mxu0 %v733
      %v899 = vpop.f32.mrf.mxu0
      %v900 = vadd.f32 0.0, %v899
      %v901 = vpop.f32.mrf.mxu0
      %v902 = vadd.f32 0.0, %v901
      %903 = vdwg.mxu0
      %v904 = vadd.f32 %v334, %v745
      %v905 = vadd.f32 %v335, %v747
      %v906 = vadd.f32 %v336, %v750
      %v907 = vadd.f32 %v337, %v752
      %v908 = vadd.f32 %v338, %v755
      %v909 = vadd.f32 %v339, %v757
      %v910 = vadd.f32 %v340, %v760
      %v911 = vadd.f32 %v341, %v762
      %v912 = vadd.f32 %v342, %v765
      %v913 = vadd.f32 %v343, %v767
      %v914 = vadd.f32 %v344, %v770
      %v915 = vadd.f32 %v345, %v772
      %v916 = vadd.f32 %v346, %v775
      %v917 = vadd.f32 %v347, %v777
      %v918 = vadd.f32 %v348, %v780
      %v919 = vadd.f32 %v349, %v782
      %v920 = vadd.f32 %v350, %v785
      %v921 = vadd.f32 %v351, %v787
      %v922 = vadd.f32 %v352, %v790
      %v923 = vadd.f32 %v353, %v792
      %v924 = vadd.f32 %v354, %v795
      %v925 = vadd.f32 %v355, %v797
      %v926 = vadd.f32 %v356, %v800
      %v927 = vadd.f32 %v357, %v802
      %v928 = vadd.f32 %v358, %v805
      %v929 = vadd.f32 %v359, %v807
      %v930 = vadd.f32 %v360, %v810
      %v931 = vadd.f32 %v361, %v812
      %v932 = vadd.f32 %v362, %v815
      %v933 = vadd.f32 %v363, %v817
      %v934 = vadd.f32 %v364, %v820
      %v935 = vadd.f32 %v365, %v822
      %v936 = vadd.f32 %v366, %v825
      %v937 = vadd.f32 %v367, %v827
      %v938 = vadd.f32 %v368, %v830
      %v939 = vadd.f32 %v369, %v832
      %v940 = vadd.f32 %v370, %v835
      %v941 = vadd.f32 %v371, %v837
      %v942 = vadd.f32 %v372, %v840
      %v943 = vadd.f32 %v373, %v842
      %v944 = vadd.f32 %v374, %v845
      %v945 = vadd.f32 %v375, %v847
      %v946 = vadd.f32 %v376, %v850
      %v947 = vadd.f32 %v377, %v852
      %v948 = vadd.f32 %v378, %v855
      %v949 = vadd.f32 %v379, %v857
      %v950 = vadd.f32 %v380, %v860
      %v951 = vadd.f32 %v381, %v862
      %v952 = vadd.f32 %v382, %v865
      %v953 = vadd.f32 %v383, %v867
      %v954 = vadd.f32 %v384, %v870
      %v955 = vadd.f32 %v385, %v872
      %v956 = vadd.f32 %v386, %v875
      %v957 = vadd.f32 %v387, %v877
      %v958 = vadd.f32 %v388, %v880
      %v959 = vadd.f32 %v389, %v882
      %v960 = vadd.f32 %v390, %v885
      %v961 = vadd.f32 %v391, %v887
      %v962 = vadd.f32 %v392, %v890
      %v963 = vadd.f32 %v393, %v892
      %v964 = vadd.f32 %v394, %v895
      %v965 = vadd.f32 %v395, %v897
      %v966 = vadd.f32 %v396, %v900
      %v967 = vadd.f32 %v397, %v902
      %vm968 = vcmask 23552
      %969 = vst.msk [vmem:[#allocation2] sm:$0xff] %vm968, %v904
      %970 = vst.msk [vmem:[#allocation2 + $0x8] sm:$0xff] %vm968, %v905
      %971 = vst.msk [vmem:[#allocation2 + $0x10] sm:$0xff] %vm968, %v906
      %972 = vst.msk [vmem:[#allocation2 + $0x18] sm:$0xff] %vm968, %v907
      %973 = vst.msk [vmem:[#allocation2 + $0x20] sm:$0xff] %vm968, %v908
      %974 = vst.msk [vmem:[#allocation2 + $0x28] sm:$0xff] %vm968, %v909
      %975 = vst.msk [vmem:[#allocation2 + $0x30] sm:$0xff] %vm968, %v910
      %976 = vst.msk [vmem:[#allocation2 + $0x38] sm:$0xff] %vm968, %v911
      %977 = vst.msk [vmem:[#allocation2 + $0x40] sm:$0xff] %vm968, %v912
      %978 = vst.msk [vmem:[#allocation2 + $0x48] sm:$0xff] %vm968, %v913
      %979 = vst.msk [vmem:[#allocation2 + $0x50] sm:$0xff] %vm968, %v914
      %980 = vst.msk [vmem:[#allocation2 + $0x58] sm:$0xff] %vm968, %v915
      %981 = vst.msk [vmem:[#allocation2 + $0x60] sm:$0xff] %vm968, %v916
      %982 = vst.msk [vmem:[#allocation2 + $0x68] sm:$0xff] %vm968, %v917
      %983 = vst.msk [vmem:[#allocation2 + $0x70] sm:$0xff] %vm968, %v918
      %984 = vst.msk [vmem:[#allocation2 + $0x78] sm:$0xff] %vm968, %v919
      %985 = vst.msk [vmem:[#allocation2 + $0x80] sm:$0xff] %vm968, %v920
      %986 = vst.msk [vmem:[#allocation2 + $0x88] sm:$0xff] %vm968, %v921
      %987 = vst.msk [vmem:[#allocation2 + $0x90] sm:$0xff] %vm968, %v922
      %988 = vst.msk [vmem:[#allocation2 + $0x98] sm:$0xff] %vm968, %v923
      %989 = vst.msk [vmem:[#allocation2 + $0xa0] sm:$0xff] %vm968, %v924
      %990 = vst.msk [vmem:[#allocation2 + $0xa8] sm:$0xff] %vm968, %v925
      %991 = vst.msk [vmem:[#allocation2 + $0xb0] sm:$0xff] %vm968, %v926
      %992 = vst.msk [vmem:[#allocation2 + $0xb8] sm:$0xff] %vm968, %v927
      %993 = vst.msk [vmem:[#allocation2 + $0xc0] sm:$0xff] %vm968, %v928
      %994 = vst.msk [vmem:[#allocation2 + $0xc8] sm:$0xff] %vm968, %v929
      %995 = vst.msk [vmem:[#allocation2 + $0xd0] sm:$0xff] %vm968, %v930
      %996 = vst.msk [vmem:[#allocation2 + $0xd8] sm:$0xff] %vm968, %v931
      %997 = vst.msk [vmem:[#allocation2 + $0xe0] sm:$0xff] %vm968, %v932
      %998 = vst.msk [vmem:[#allocation2 + $0xe8] sm:$0xff] %vm968, %v933
      %999 = vst.msk [vmem:[#allocation2 + $0xf0] sm:$0xff] %vm968, %v934
      %1000 = vst.msk [vmem:[#allocation2 + $0xf8] sm:$0xff] %vm968, %v935
      %1001 = vst.msk [vmem:[#allocation2 + $0x100] sm:$0xff] %vm968, %v936
      %1002 = vst.msk [vmem:[#allocation2 + $0x108] sm:$0xff] %vm968, %v937
      %1003 = vst.msk [vmem:[#allocation2 + $0x110] sm:$0xff] %vm968, %v938
      %1004 = vst.msk [vmem:[#allocation2 + $0x118] sm:$0xff] %vm968, %v939
      %1005 = vst.msk [vmem:[#allocation2 + $0x120] sm:$0xff] %vm968, %v940
      %1006 = vst.msk [vmem:[#allocation2 + $0x128] sm:$0xff] %vm968, %v941
      %1007 = vst.msk [vmem:[#allocation2 + $0x130] sm:$0xff] %vm968, %v942
      %1008 = vst.msk [vmem:[#allocation2 + $0x138] sm:$0xff] %vm968, %v943
      %1009 = vst.msk [vmem:[#allocation2 + $0x140] sm:$0xff] %vm968, %v944
      %1010 = vst.msk [vmem:[#allocation2 + $0x148] sm:$0xff] %vm968, %v945
      %1011 = vst.msk [vmem:[#allocation2 + $0x150] sm:$0xff] %vm968, %v946
      %1012 = vst.msk [vmem:[#allocation2 + $0x158] sm:$0xff] %vm968, %v947
      %1013 = vst.msk [vmem:[#allocation2 + $0x160] sm:$0xff] %vm968, %v948
      %1014 = vst.msk [vmem:[#allocation2 + $0x168] sm:$0xff] %vm968, %v949
      %1015 = vst.msk [vmem:[#allocation2 + $0x170] sm:$0xff] %vm968, %v950
      %1016 = vst.msk [vmem:[#allocation2 + $0x178] sm:$0xff] %vm968, %v951
      %1017 = vst.msk [vmem:[#allocation2 + $0x180] sm:$0xff] %vm968, %v952
      %1018 = vst.msk [vmem:[#allocation2 + $0x188] sm:$0xff] %vm968, %v953
      %1019 = vst.msk [vmem:[#allocation2 + $0x190] sm:$0xff] %vm968, %v954
      %1020 = vst.msk [vmem:[#allocation2 + $0x198] sm:$0xff] %vm968, %v955
      %1021 = vst.msk [vmem:[#allocation2 + $0x1a0] sm:$0xff] %vm968, %v956
      %1022 = vst.msk [vmem:[#allocation2 + $0x1a8] sm:$0xff] %vm968, %v957
      %1023 = vst.msk [vmem:[#allocation2 + $0x1b0] sm:$0xff] %vm968, %v958
      %1024 = vst.msk [vmem:[#allocation2 + $0x1b8] sm:$0xff] %vm968, %v959
      %1025 = vst.msk [vmem:[#allocation2 + $0x1c0] sm:$0xff] %vm968, %v960
      %1026 = vst.msk [vmem:[#allocation2 + $0x1c8] sm:$0xff] %vm968, %v961
      %1027 = vst.msk [vmem:[#allocation2 + $0x1d0] sm:$0xff] %vm968, %v962
      %1028 = vst.msk [vmem:[#allocation2 + $0x1d8] sm:$0xff] %vm968, %v963
      %1029 = vst.msk [vmem:[#allocation2 + $0x1e0] sm:$0xff] %vm968, %v964
      %1030 = vst.msk [vmem:[#allocation2 + $0x1e8] sm:$0xff] %vm968, %v965
      %1031 = vst.msk [vmem:[#allocation2 + $0x1f0] sm:$0xff] %vm968, %v966
      %1032 = vst.msk [vmem:[#allocation2 + $0x1f8] sm:$0xff] %vm968, %v967
      // Predicated region
      $region37: #{decoder_bn_forward.11} parent=31 // pred_check
        %p1033 = pneg %p265
      $region38: #{decoder_bn_forward.11} parent=31 // pred_check_branch
        %1035 = sbr.rel (%p1033) target = $region40
      $region39: #{decoder_bn_forward.11} parent=31 // pred_region
        %v1036 = vld [vmem:[#allocation2] sm:$0xff]
        %v1037 = vld [vmem:[#allocation2 + $0x8] sm:$0xff]
        %v1038 = vld [vmem:[#allocation2 + $0x10] sm:$0xff]
        %v1039 = vld [vmem:[#allocation2 + $0x18] sm:$0xff]
        %v1040 = vld [vmem:[#allocation2 + $0x20] sm:$0xff]
        %v1041 = vld [vmem:[#allocation2 + $0x28] sm:$0xff]
        %v1042 = vld [vmem:[#allocation2 + $0x30] sm:$0xff]
        %v1043 = vld [vmem:[#allocation2 + $0x38] sm:$0xff]
        %v1044 = vld [vmem:[#allocation2 + $0x40] sm:$0xff]
        %v1045 = vld [vmem:[#allocation2 + $0x48] sm:$0xff]
        %v1046 = vld [vmem:[#allocation2 + $0x50] sm:$0xff]
        %v1047 = vld [vmem:[#allocation2 + $0x58] sm:$0xff]
        %v1048 = vld [vmem:[#allocation2 + $0x60] sm:$0xff]
        %v1049 = vld [vmem:[#allocation2 + $0x68] sm:$0xff]
        %v1050 = vld [vmem:[#allocation2 + $0x70] sm:$0xff]
        %v1051 = vld [vmem:[#allocation2 + $0x78] sm:$0xff]
        %v1052 = vld [vmem:[#allocation2 + $0x80] sm:$0xff]
        %v1053 = vld [vmem:[#allocation2 + $0x88] sm:$0xff]
        %v1054 = vld [vmem:[#allocation2 + $0x90] sm:$0xff]
        %v1055 = vld [vmem:[#allocation2 + $0x98] sm:$0xff]
        %v1056 = vld [vmem:[#allocation2 + $0xa0] sm:$0xff]
        %v1057 = vld [vmem:[#allocation2 + $0xa8] sm:$0xff]
        %v1058 = vld [vmem:[#allocation2 + $0xb0] sm:$0xff]
        %v1059 = vld [vmem:[#allocation2 + $0xb8] sm:$0xff]
        %v1060 = vld [vmem:[#allocation2 + $0xc0] sm:$0xff]
        %v1061 = vld [vmem:[#allocation2 + $0xc8] sm:$0xff]
        %v1062 = vld [vmem:[#allocation2 + $0xd0] sm:$0xff]
        %v1063 = vld [vmem:[#allocation2 + $0xd8] sm:$0xff]
        %v1064 = vld [vmem:[#allocation2 + $0xe0] sm:$0xff]
        %v1065 = vld [vmem:[#allocation2 + $0xe8] sm:$0xff]
        %v1066 = vld [vmem:[#allocation2 + $0xf0] sm:$0xff]
        %v1067 = vld [vmem:[#allocation2 + $0xf8] sm:$0xff]
        %v1068 = vld [vmem:[#allocation2 + $0x100] sm:$0xff]
        %v1069 = vld [vmem:[#allocation2 + $0x108] sm:$0xff]
        %v1070 = vld [vmem:[#allocation2 + $0x110] sm:$0xff]
        %v1071 = vld [vmem:[#allocation2 + $0x118] sm:$0xff]
        %v1072 = vld [vmem:[#allocation2 + $0x120] sm:$0xff]
        %v1073 = vld [vmem:[#allocation2 + $0x128] sm:$0xff]
        %v1074 = vld [vmem:[#allocation2 + $0x130] sm:$0xff]
        %v1075 = vld [vmem:[#allocation2 + $0x138] sm:$0xff]
        %v1076 = vld [vmem:[#allocation2 + $0x140] sm:$0xff]
        %v1077 = vld [vmem:[#allocation2 + $0x148] sm:$0xff]
        %v1078 = vld [vmem:[#allocation2 + $0x150] sm:$0xff]
        %v1079 = vld [vmem:[#allocation2 + $0x158] sm:$0xff]
        %v1080 = vld [vmem:[#allocation2 + $0x160] sm:$0xff]
        %v1081 = vld [vmem:[#allocation2 + $0x168] sm:$0xff]
        %v1082 = vld [vmem:[#allocation2 + $0x170] sm:$0xff]
        %v1083 = vld [vmem:[#allocation2 + $0x178] sm:$0xff]
        %v1084 = vld [vmem:[#allocation2 + $0x180] sm:$0xff]
        %v1085 = vld [vmem:[#allocation2 + $0x188] sm:$0xff]
        %v1086 = vld [vmem:[#allocation2 + $0x190] sm:$0xff]
        %v1087 = vld [vmem:[#allocation2 + $0x198] sm:$0xff]
        %v1088 = vld [vmem:[#allocation2 + $0x1a0] sm:$0xff]
        %v1089 = vld [vmem:[#allocation2 + $0x1a8] sm:$0xff]
        %v1090 = vld [vmem:[#allocation2 + $0x1b0] sm:$0xff]
        %v1091 = vld [vmem:[#allocation2 + $0x1b8] sm:$0xff]
        %v1092 = vld [vmem:[#allocation2 + $0x1c0] sm:$0xff]
        %v1093 = vld [vmem:[#allocation2 + $0x1c8] sm:$0xff]
        %v1094 = vld [vmem:[#allocation2 + $0x1d0] sm:$0xff]
        %v1095 = vld [vmem:[#allocation2 + $0x1d8] sm:$0xff]
        %v1096 = vld [vmem:[#allocation2 + $0x1e0] sm:$0xff]
        %v1097 = vld [vmem:[#allocation2 + $0x1e8] sm:$0xff]
        %v1098 = vld [vmem:[#allocation2 + $0x1f0] sm:$0xff]
        %v1099 = vld [vmem:[#allocation2 + $0x1f8] sm:$0xff]
        %v1100 = vld [vmem:[%s2] sm:$0x1]
        %v1102 = vperm.slane %v1100, 0
        %v1104 = vadd.f32 %v1036, %v1102
        %v1105 = vadd.f32 %v1037, %v1102
        %v1106 = vadd.f32 %v1038, %v1102
        %v1107 = vadd.f32 %v1039, %v1102
        %v1108 = vadd.f32 %v1040, %v1102
        %v1109 = vadd.f32 %v1041, %v1102
        %v1110 = vadd.f32 %v1042, %v1102
        %v1111 = vadd.f32 %v1043, %v1102
        %v1112 = vadd.f32 %v1044, %v1102
        %v1113 = vadd.f32 %v1045, %v1102
        %v1114 = vadd.f32 %v1046, %v1102
        %v1115 = vadd.f32 %v1047, %v1102
        %v1116 = vadd.f32 %v1048, %v1102
        %v1117 = vadd.f32 %v1049, %v1102
        %v1118 = vadd.f32 %v1050, %v1102
        %v1119 = vadd.f32 %v1051, %v1102
        %v1120 = vadd.f32 %v1052, %v1102
        %v1121 = vadd.f32 %v1053, %v1102
        %v1122 = vadd.f32 %v1054, %v1102
        %v1123 = vadd.f32 %v1055, %v1102
        %v1124 = vadd.f32 %v1056, %v1102
        %v1125 = vadd.f32 %v1057, %v1102
        %v1126 = vadd.f32 %v1058, %v1102
        %v1127 = vadd.f32 %v1059, %v1102
        %v1128 = vadd.f32 %v1060, %v1102
        %v1129 = vadd.f32 %v1061, %v1102
        %v1130 = vadd.f32 %v1062, %v1102
        %v1131 = vadd.f32 %v1063, %v1102
        %v1132 = vadd.f32 %v1064, %v1102
        %v1133 = vadd.f32 %v1065, %v1102
        %v1134 = vadd.f32 %v1066, %v1102
        %v1135 = vadd.f32 %v1067, %v1102
        %v1136 = vadd.f32 %v1068, %v1102
        %v1137 = vadd.f32 %v1069, %v1102
        %v1138 = vadd.f32 %v1070, %v1102
        %v1139 = vadd.f32 %v1071, %v1102
        %v1140 = vadd.f32 %v1072, %v1102
        %v1141 = vadd.f32 %v1073, %v1102
        %v1142 = vadd.f32 %v1074, %v1102
        %v1143 = vadd.f32 %v1075, %v1102
        %v1144 = vadd.f32 %v1076, %v1102
        %v1145 = vadd.f32 %v1077, %v1102
        %v1146 = vadd.f32 %v1078, %v1102
        %v1147 = vadd.f32 %v1079, %v1102
        %v1148 = vadd.f32 %v1080, %v1102
        %v1149 = vadd.f32 %v1081, %v1102
        %v1150 = vadd.f32 %v1082, %v1102
        %v1151 = vadd.f32 %v1083, %v1102
        %v1152 = vadd.f32 %v1084, %v1102
        %v1153 = vadd.f32 %v1085, %v1102
        %v1154 = vadd.f32 %v1086, %v1102
        %v1155 = vadd.f32 %v1087, %v1102
        %v1156 = vadd.f32 %v1088, %v1102
        %v1157 = vadd.f32 %v1089, %v1102
        %v1158 = vadd.f32 %v1090, %v1102
        %v1159 = vadd.f32 %v1091, %v1102
        %v1160 = vadd.f32 %v1092, %v1102
        %v1161 = vadd.f32 %v1093, %v1102
        %v1162 = vadd.f32 %v1094, %v1102
        %v1163 = vadd.f32 %v1095, %v1102
        %v1164 = vadd.f32 %v1096, %v1102
        %v1165 = vadd.f32 %v1097, %v1102
        %v1166 = vadd.f32 %v1098, %v1102
        %v1167 = vadd.f32 %v1099, %v1102
        %1168 = vst.msk [vmem:[%s262] sm:$0xff] %vm968, %v1104
        %1169 = vst.msk [vmem:[%s262 + $0x8] sm:$0xff] %vm968, %v1105
        %1170 = vst.msk [vmem:[%s262 + $0x10] sm:$0xff] %vm968, %v1106
        %1171 = vst.msk [vmem:[%s262 + $0x18] sm:$0xff] %vm968, %v1107
        %1172 = vst.msk [vmem:[%s262 + $0x20] sm:$0xff] %vm968, %v1108
        %1173 = vst.msk [vmem:[%s262 + $0x28] sm:$0xff] %vm968, %v1109
        %1174 = vst.msk [vmem:[%s262 + $0x30] sm:$0xff] %vm968, %v1110
        %1175 = vst.msk [vmem:[%s262 + $0x38] sm:$0xff] %vm968, %v1111
        %1176 = vst.msk [vmem:[%s262 + $0x40] sm:$0xff] %vm968, %v1112
        %1177 = vst.msk [vmem:[%s262 + $0x48] sm:$0xff] %vm968, %v1113
        %1178 = vst.msk [vmem:[%s262 + $0x50] sm:$0xff] %vm968, %v1114
        %1179 = vst.msk [vmem:[%s262 + $0x58] sm:$0xff] %vm968, %v1115
        %1180 = vst.msk [vmem:[%s262 + $0x60] sm:$0xff] %vm968, %v1116
        %1181 = vst.msk [vmem:[%s262 + $0x68] sm:$0xff] %vm968, %v1117
        %1182 = vst.msk [vmem:[%s262 + $0x70] sm:$0xff] %vm968, %v1118
        %1183 = vst.msk [vmem:[%s262 + $0x78] sm:$0xff] %vm968, %v1119
        %1184 = vst.msk [vmem:[%s262 + $0x80] sm:$0xff] %vm968, %v1120
        %1185 = vst.msk [vmem:[%s262 + $0x88] sm:$0xff] %vm968, %v1121
        %1186 = vst.msk [vmem:[%s262 + $0x90] sm:$0xff] %vm968, %v1122
        %1187 = vst.msk [vmem:[%s262 + $0x98] sm:$0xff] %vm968, %v1123
        %1188 = vst.msk [vmem:[%s262 + $0xa0] sm:$0xff] %vm968, %v1124
        %1189 = vst.msk [vmem:[%s262 + $0xa8] sm:$0xff] %vm968, %v1125
        %1190 = vst.msk [vmem:[%s262 + $0xb0] sm:$0xff] %vm968, %v1126
        %1191 = vst.msk [vmem:[%s262 + $0xb8] sm:$0xff] %vm968, %v1127
        %1192 = vst.msk [vmem:[%s262 + $0xc0] sm:$0xff] %vm968, %v1128
        %1193 = vst.msk [vmem:[%s262 + $0xc8] sm:$0xff] %vm968, %v1129
        %1194 = vst.msk [vmem:[%s262 + $0xd0] sm:$0xff] %vm968, %v1130
        %1195 = vst.msk [vmem:[%s262 + $0xd8] sm:$0xff] %vm968, %v1131
        %1196 = vst.msk [vmem:[%s262 + $0xe0] sm:$0xff] %vm968, %v1132
        %1197 = vst.msk [vmem:[%s262 + $0xe8] sm:$0xff] %vm968, %v1133
        %1198 = vst.msk [vmem:[%s262 + $0xf0] sm:$0xff] %vm968, %v1134
        %1199 = vst.msk [vmem:[%s262 + $0xf8] sm:$0xff] %vm968, %v1135
        %1200 = vst.msk [vmem:[%s262 + $0x100] sm:$0xff] %vm968, %v1136
        %1201 = vst.msk [vmem:[%s262 + $0x108] sm:$0xff] %vm968, %v1137
        %1202 = vst.msk [vmem:[%s262 + $0x110] sm:$0xff] %vm968, %v1138
        %1203 = vst.msk [vmem:[%s262 + $0x118] sm:$0xff] %vm968, %v1139
        %1204 = vst.msk [vmem:[%s262 + $0x120] sm:$0xff] %vm968, %v1140
        %1205 = vst.msk [vmem:[%s262 + $0x128] sm:$0xff] %vm968, %v1141
        %1206 = vst.msk [vmem:[%s262 + $0x130] sm:$0xff] %vm968, %v1142
        %1207 = vst.msk [vmem:[%s262 + $0x138] sm:$0xff] %vm968, %v1143
        %1208 = vst.msk [vmem:[%s262 + $0x140] sm:$0xff] %vm968, %v1144
        %1209 = vst.msk [vmem:[%s262 + $0x148] sm:$0xff] %vm968, %v1145
        %1210 = vst.msk [vmem:[%s262 + $0x150] sm:$0xff] %vm968, %v1146
        %1211 = vst.msk [vmem:[%s262 + $0x158] sm:$0xff] %vm968, %v1147
        %1212 = vst.msk [vmem:[%s262 + $0x160] sm:$0xff] %vm968, %v1148
        %1213 = vst.msk [vmem:[%s262 + $0x168] sm:$0xff] %vm968, %v1149
        %1214 = vst.msk [vmem:[%s262 + $0x170] sm:$0xff] %vm968, %v1150
        %1215 = vst.msk [vmem:[%s262 + $0x178] sm:$0xff] %vm968, %v1151
        %1216 = vst.msk [vmem:[%s262 + $0x180] sm:$0xff] %vm968, %v1152
        %1217 = vst.msk [vmem:[%s262 + $0x188] sm:$0xff] %vm968, %v1153
        %1218 = vst.msk [vmem:[%s262 + $0x190] sm:$0xff] %vm968, %v1154
        %1219 = vst.msk [vmem:[%s262 + $0x198] sm:$0xff] %vm968, %v1155
        %1220 = vst.msk [vmem:[%s262 + $0x1a0] sm:$0xff] %vm968, %v1156
        %1221 = vst.msk [vmem:[%s262 + $0x1a8] sm:$0xff] %vm968, %v1157
        %1222 = vst.msk [vmem:[%s262 + $0x1b0] sm:$0xff] %vm968, %v1158
        %1223 = vst.msk [vmem:[%s262 + $0x1b8] sm:$0xff] %vm968, %v1159
        %1224 = vst.msk [vmem:[%s262 + $0x1c0] sm:$0xff] %vm968, %v1160
        %1225 = vst.msk [vmem:[%s262 + $0x1c8] sm:$0xff] %vm968, %v1161
        %1226 = vst.msk [vmem:[%s262 + $0x1d0] sm:$0xff] %vm968, %v1162
        %1227 = vst.msk [vmem:[%s262 + $0x1d8] sm:$0xff] %vm968, %v1163
        %1228 = vst.msk [vmem:[%s262 + $0x1e0] sm:$0xff] %vm968, %v1164
        %1229 = vst.msk [vmem:[%s262 + $0x1e8] sm:$0xff] %vm968, %v1165
        %1230 = vst.msk [vmem:[%s262 + $0x1f0] sm:$0xff] %vm968, %v1166
        %1231 = vst.msk [vmem:[%s262 + $0x1f8] sm:$0xff] %vm968, %v1167
      $region40: #{decoder_bn_forward.11} parent=31 // pred_fallthru
        _
      %s1232 = smul.u32 64, %s20
      %p1233 = scmp.lt.s32.totalorder %s19, 3
      %s1234 = scalar_select %p1233, %s19, 3
      %p1235 = scmp.lt.s32.totalorder %s1232, 127
      %s1236 = scalar_select %p1235, %s1232, 127
      %s1237 = smul.addr %s1234, 128
      %s1238 = sadd.s32 %s1236, %s1237
      %s1239 = smul.addr %s1238, 8
      %s1240 = scalar_lea.vmem %s3, %s1239
      // Predicated region
      $region41: #{decoder_bn_forward.11} parent=31 // pred_check
        %p1241 = pneg %p132
      $region42: #{decoder_bn_forward.11} parent=31 // pred_check_branch
        %1243 = sbr.rel (%p1241) target = $region44
      $region43: #{decoder_bn_forward.11} parent=31 // pred_region
        %s1244 = smul.u32 64, %s20
      $region44: #{decoder_bn_forward.11} parent=31 // pred_fallthru
        _
    $region32: #{decoder_bn_forward.11} parent=5 // pred_fallthru
      _
    %p1245 = scmp.le.s32.totalorder 2, %s9
    // Predicated region
    $region45: #{decoder_bn_forward.11} parent=5 // pred_check
      %p1246 = pneg %p1245
    $region46: #{decoder_bn_forward.11} parent=5 // pred_check_branch
      %1248 = sbr.rel (%p1246) target = $region48
    $region47: #{decoder_bn_forward.11} parent=5 // pred_region
      %s1249 = ssub.s32 %s9, 2
      // Predicated region
      $region49: #{decoder_bn_forward.11} parent=47 // pred_check
        %p1250 = pneg %p138
      $region50: #{decoder_bn_forward.11} parent=47 // pred_check_branch
        %1252 = sbr.rel (%p1250) target = $region52
      $region51: #{decoder_bn_forward.11} parent=47 // pred_region
        %s1253 = smul.u32 64, %s23
        %p1254 = scmp.lt.s32.totalorder %s22, 3
        %s1255 = scalar_select %p1254, %s22, 3
        %p1256 = scmp.lt.s32.totalorder %s1253, 127
        %s1257 = scalar_select %p1256, %s1253, 127
        %s1258 = smul.addr %s1255, 128
        %s1259 = sadd.s32 %s1257, %s1258
        %s1260 = smul.addr %s1259, 8
        %s1261 = scalar_lea.vmem %s3, %s1260
      $region52: #{decoder_bn_forward.11} parent=47 // pred_fallthru
        _
    $region48: #{decoder_bn_forward.11} parent=5 // pred_fallthru
      _
  $region6: #{decoder_bn_forward.11} parent=0 // loop_footer
    %s13 = sadd.s32 1, %s9
  $region7: #{decoder_bn_forward.11} parent=0 // loop_footer_branch
    %8 = sbr.rel target = $region3
  $region8: #{decoder_bn_forward.11} parent=0 // loop_exit
    _

</llo_original>
